<compile_context>
chip_gen: v7x
topology: tpu7x:2x2x1
jax: 0.10.0
libtpu: 0.0.40
codegen_flags: <defaults>
</compile_context>

<pallas_src>
import functools

import jax
import jax.numpy as jnp
from jax.experimental import pallas as pl
from jax.experimental.pallas import tpu as pltpu


def _round_up(x, m):
    return ((x + m - 1) // m) * m


# ----------------------------------------------------------------------------
# Kernel 1: q/k/v projections (1x1 convs == channel matmuls on the MXU).
# ----------------------------------------------------------------------------
def _proj_kernel(x_ref,                      # VMEM (1, Tm, Cp)   f32
                 wq_ref, bq_ref,             # VMEM (Cp, Cqp), (1, Cqp)
                 wk_ref, bk_ref,             # VMEM (Cp, Cqp), (1, Cqp)
                 wv_ref, bv_ref,             # VMEM (Cp, Cp),  (1, Cp)
                 q_ref, k_ref, v_ref):       # VMEM (1, Tm, Cqp/Cqp/Cp) bf16
    x = x_ref[0].astype(jnp.bfloat16)                                  # (Tm, Cp)
    q = jnp.dot(x, wq_ref[...], preferred_element_type=jnp.float32) + bq_ref[...]
    k = jnp.dot(x, wk_ref[...], preferred_element_type=jnp.float32) + bk_ref[...]
    v = jnp.dot(x, wv_ref[...], preferred_element_type=jnp.float32) + bv_ref[...]
    q_ref[0] = q.astype(jnp.bfloat16)
    k_ref[0] = k.astype(jnp.bfloat16)
    v_ref[0] = v.astype(jnp.bfloat16)


# ----------------------------------------------------------------------------
# Kernel 2: flash-style position attention + gamma * out + x residual.
# ----------------------------------------------------------------------------
def _make_flash_kernel(hw_valid, hwp, tk):
    mask_needed = hwp != hw_valid            # static: only emitted if HW padded

    def kernel(gamma_ref,                    # SMEM (1,)            learnable scale
               q_ref,                        # VMEM (1, Tq, Cqp)    bf16
               k_ref,                        # VMEM (1, Tk, Cqp)    bf16
               v_ref,                        # VMEM (1, Tk, Cp)     bf16
               x_ref,                        # VMEM (1, Tq, Cp)     f32 (residual)
               o_ref,                        # VMEM (1, Tq, Cp)     f32
               m_sc, l_sc, acc_sc):          # VMEM (Tq,1),(Tq,1),(Tq,Cp) f32
        kv = pl.program_id(2)

        @pl.when(kv == 0)
        def _():
            m_sc[...] = jnp.full_like(m_sc, -jnp.inf)
            l_sc[...] = jnp.zeros_like(l_sc)
            acc_sc[...] = jnp.zeros_like(acc_sc)

        q = q_ref[0]                                                   # (Tq, Cqp) bf16
        k = k_ref[0]                                                   # (Tk, Cqp) bf16

        # energy[i, j] = <q_i, k_j>  (== bmm(Q^T, K) in the torch code).
        # Contract last dims directly; no materialized transpose of k.
        energy = jax.lax.dot_general(
            q, k, dimension_numbers=(((1,), (1,)), ((), ())),
            preferred_element_type=jnp.float32)                        # (Tq, Tk) f32

        if mask_needed:
            # Padded spatial positions must not receive softmax weight.
            kpos = kv * tk + jax.lax.broadcasted_iota(jnp.int32, (1, tk), 1)
            energy = jnp.where(kpos < hw_valid, energy, -1e30)

        # Online softmax update (all f32 on the VPU/EUP).
        m_prev = m_sc[...]
        m_new = jnp.maximum(m_prev, jnp.max(energy, axis=-1, keepdims=True))
        alpha = jnp.exp(m_prev - m_new)
        p = jnp.exp(energy - m_new)                                    # (Tq, Tk) f32
        l_sc[...] = alpha * l_sc[...] + jnp.sum(p, axis=-1, keepdims=True)
        acc_sc[...] = alpha * acc_sc[...] + jnp.dot(
            p.astype(jnp.bfloat16), v_ref[0], preferred_element_type=jnp.float32)
        m_sc[...] = m_new

        @pl.when(kv == pl.num_programs(2) - 1)
        def _():
            o = acc_sc[...] * pl.reciprocal(l_sc[...], approx=True)    # (Tq, Cp)
            o_ref[0] = gamma_ref[0] * o + x_ref[0]

    return kernel


# ----------------------------------------------------------------------------
# Wrapper: NCHW <-> (B, HW, C) plumbing, lane-dense padding, two pallas_calls.
# ----------------------------------------------------------------------------
def pam_forward(x_nchw, wq, bq, wk, bk, wv, bv, gamma, *, tile=256):
    """x_nchw: (B, C, H, W) float32. Weights already in (in, out) matmul layout.

    tile: spatial tile for both the query and KV axes.  128-256 is sized for
    v7x's 64 MiB VMEM; v6e/v5e (128 MiB) can use 512+ at realistic C.
    """
    B, C, H, W = x_nchw.shape
    HW = H * W
    Cq = wq.shape[1]

    # Lane-dense padded sizes (zero padding keeps the math exact).
    cp = _round_up(max(C, 128), 128)
    cqp = _round_up(max(Cq, 128), 128)
    tile = min(tile, _round_up(HW, 8))
    hwp = _round_up(HW, tile)

    # (B, HW, C) layout, padded to (B, hwp, cp).
    x = jnp.transpose(x_nchw.reshape(B, C, HW), (0, 2, 1))
    x = jnp.pad(x, ((0, 0), (0, hwp - HW), (0, cp - C)))

    wq_p = jnp.pad(wq, ((0, cp - C), (0, cqp - Cq))).astype(jnp.bfloat16)
    wk_p = jnp.pad(wk, ((0, cp - C), (0, cqp - Cq))).astype(jnp.bfloat16)
    wv_p = jnp.pad(wv, ((0, cp - C), (0, cp - C))).astype(jnp.bfloat16)
    bq_p = jnp.pad(bq, ((0, 0), (0, cqp - Cq)))
    bk_p = jnp.pad(bk, ((0, 0), (0, cqp - Cq)))
    bv_p = jnp.pad(bv, ((0, 0), (0, cp - C)))

    n_m = hwp // tile

    # --- stage 1: q/k/v projections (bf16 outputs, halves attention HBM traffic)
    q, k, v = pl.pallas_call(
        _proj_kernel,
        out_shape=(
            jax.ShapeDtypeStruct((B, hwp, cqp), jnp.bfloat16),
            jax.ShapeDtypeStruct((B, hwp, cqp), jnp.bfloat16),
            jax.ShapeDtypeStruct((B, hwp, cp), jnp.bfloat16),
        ),
        grid=(B, n_m),
        in_specs=[
            pl.BlockSpec((1, tile, cp), lambda b, i: (b, i, 0)),       # x
            pl.BlockSpec((cp, cqp), lambda b, i: (0, 0)),              # wq
            pl.BlockSpec((1, cqp), lambda b, i: (0, 0)),               # bq
            pl.BlockSpec((cp, cqp), lambda b, i: (0, 0)),              # wk
            pl.BlockSpec((1, cqp), lambda b, i: (0, 0)),               # bk
            pl.BlockSpec((cp, cp), lambda b, i: (0, 0)),               # wv
            pl.BlockSpec((1, cp), lambda b, i: (0, 0)),                # bv
        ],
        out_specs=(
            pl.BlockSpec((1, tile, cqp), lambda b, i: (b, i, 0)),
            pl.BlockSpec((1, tile, cqp), lambda b, i: (b, i, 0)),
            pl.BlockSpec((1, tile, cp), lambda b, i: (b, i, 0)),
        ),
        compiler_params=pltpu.CompilerParams(
            dimension_semantics=("parallel", "parallel"),
            vmem_limit_bytes=64 * 1024 * 1024,
        ),
    )(x, wq_p, bq_p, wk_p, bk_p, wv_p, bv_p)

    # --- stage 2: flash attention + residual.  KV (reduction) axis last;
    # output block constant over it so the accumulator stays resident.
    out = pl.pallas_call(
        _make_flash_kernel(HW, hwp, tile),
        out_shape=jax.ShapeDtypeStruct((B, hwp, cp), jnp.float32),
        grid=(B, n_m, n_m),
        in_specs=[
            pl.BlockSpec(memory_space=pltpu.SMEM),                          # gamma (1,)
            pl.BlockSpec((1, tile, cqp), lambda b, qi, ki: (b, qi, 0)),     # q
            pl.BlockSpec((1, tile, cqp), lambda b, qi, ki: (b, ki, 0)),     # k
            pl.BlockSpec((1, tile, cp), lambda b, qi, ki: (b, ki, 0)),      # v
            pl.BlockSpec((1, tile, cp), lambda b, qi, ki: (b, qi, 0)),      # x residual
        ],
        out_specs=pl.BlockSpec((1, tile, cp), lambda b, qi, ki: (b, qi, 0)),
        scratch_shapes=[
            pltpu.VMEM((tile, 1), jnp.float32),    # running max m
            pltpu.VMEM((tile, 1), jnp.float32),    # running sum l
            pltpu.VMEM((tile, cp), jnp.float32),   # output accumulator
        ],
        compiler_params=pltpu.CompilerParams(
            dimension_semantics=("parallel", "parallel", "arbitrary"),
            vmem_limit_bytes=64 * 1024 * 1024,
        ),
    )(gamma, q, k, v, x)

    # TODO(synk): for v5e, fold this transpose into a lane-dense (B, C, HW)
    # writeback inside the kernel to save one HBM round-trip.
    out = out[:, :HW, :C]
    return jnp.transpose(out, (0, 2, 1)).reshape(B, C, H, W)


def pam_reference(x_nchw, wq, bq, wk, bk, wv, bv, gamma):
    """Plain-JAX f32 reference mirroring the PyTorch forward."""
    B, C, H, W = x_nchw.shape
    HW = H * W
    xf = jnp.transpose(x_nchw.reshape(B, C, HW), (0, 2, 1))            # (B, HW, C)
    q = xf @ wq + bq
    k = xf @ wk + bk
    v = xf @ wv + bv
    energy = jnp.einsum("bic,bjc->bij", q, k)
    attn = jax.nn.softmax(energy, axis=-1)
    o = jnp.einsum("bij,bjc->bic", attn, v)
    out = gamma[0] * o + xf
    return jnp.transpose(out, (0, 2, 1)).reshape(B, C, H, W)


if __name__ == "__main__":
    # Small shapes consistent with the module: in_dim divisible by 8.
    B, C, H, W = 2, 32, 16, 16          # HW = 256 -> 2x2 flash tiles at tile=128
    Cq = C // 8

    key = jax.random.PRNGKey(0)
    kx, kq, kk, kv_, kbq, kbk, kbv = jax.random.split(key, 7)

    x = jax.random.normal(kx, (B, C, H, W), dtype=jnp.float32)

    # Conv2d(in, out, 1) weight (out, in, 1, 1) stored directly in (in, out) form.
    scale = 1.0 / jnp.sqrt(jnp.float32(C))
    wq = jax.random.normal(kq, (C, Cq), dtype=jnp.float32) * scale
    wk = jax.random.normal(kk, (C, Cq), dtype=jnp.float32) * scale
    wv = jax.random.normal(kv_, (C, C), dtype=jnp.float32) * scale
    bq = jax.random.normal(kbq, (1, Cq), dtype=jnp.float32) * 0.1
    bk = jax.random.normal(kbk, (1, Cq), dtype=jnp.float32) * 0.1
    bv = jax.random.normal(kbv, (1, C), dtype=jnp.float32) * 0.1
    # PyTorch __init__ sets gamma = 0 (out == x); use nonzero so attention runs.
    gamma = jnp.array([0.5], dtype=jnp.float32)

    fwd = jax.jit(pam_forward, static_argnames=("tile",))
    out = fwd(x, wq, bq, wk, bk, wv, bv, gamma, tile=128)
    jax.block_until_ready(out)

    ref = pam_reference(x, wq, bq, wk, bk, wv, bv, gamma)
    assert out.shape == (B, C, H, W)
    max_err = float(jnp.max(jnp.abs(out - ref)))
    # bf16 MXU operands + approx reciprocal -> compare at bf16-level tolerance.
    assert jnp.allclose(out, ref, atol=5e-2, rtol=5e-2), (
        f"mismatch vs reference, max abs err={max_err}")

    print("KERNEL_OK")
</pallas_src>

<mosaic_0001>
module attributes {stable_mosaic.version = 11 : i64} {
  func.func @_proj_kernel(%arg0: i32, %arg1: i32, %arg2: memref<1x128x128xf32, #tpu.memory_space<vmem>>, %arg3: memref<128x128xbf16, #tpu.memory_space<vmem>>, %arg4: memref<1x128xf32, #tpu.memory_space<vmem>>, %arg5: memref<128x128xbf16, #tpu.memory_space<vmem>>, %arg6: memref<1x128xf32, #tpu.memory_space<vmem>>, %arg7: memref<128x128xbf16, #tpu.memory_space<vmem>>, %arg8: memref<1x128xf32, #tpu.memory_space<vmem>>, %arg9: memref<1x128x128xbf16, #tpu.memory_space<vmem>>, %arg10: memref<1x128x128xbf16, #tpu.memory_space<vmem>>, %arg11: memref<1x128x128xbf16, #tpu.memory_space<vmem>>) attributes {dimension_semantics = [#tpu.dimension_semantics<parallel>, #tpu.dimension_semantics<parallel>], iteration_bounds = array<i64: 2, 2>, scalar_prefetch = 0 : i64, scratch_operands = 0 : i64, tpu.core_type = #tpu.core_type<tc>, window_params = [{transform_indices = @transform_0, window_bounds = array<i64: 1, 128, 128>}, {pipeline_mode = #tpu.pipeline_mode<synchronous>, transform_indices = @transform_1, window_bounds = array<i64: 128, 128>}, {pipeline_mode = #tpu.pipeline_mode<synchronous>, transform_indices = @transform_2, window_bounds = array<i64: 1, 128>}, {pipeline_mode = #tpu.pipeline_mode<synchronous>, transform_indices = @transform_3, window_bounds = array<i64: 128, 128>}, {pipeline_mode = #tpu.pipeline_mode<synchronous>, transform_indices = @transform_4, window_bounds = array<i64: 1, 128>}, {pipeline_mode = #tpu.pipeline_mode<synchronous>, transform_indices = @transform_5, window_bounds = array<i64: 128, 128>}, {pipeline_mode = #tpu.pipeline_mode<synchronous>, transform_indices = @transform_6, window_bounds = array<i64: 1, 128>}, {transform_indices = @transform_7, window_bounds = array<i64: 1, 128, 128>}, {transform_indices = @transform_8, window_bounds = array<i64: 1, 128, 128>}, {transform_indices = @transform_9, window_bounds = array<i64: 1, 128, 128>}]} {
    %c0 = arith.constant 0 : index
    %c0_0 = arith.constant 0 : index
    %c0_1 = arith.constant 0 : index
    %0 = vector.load %arg2[%c0, %c0_0, %c0_1] : memref<1x128x128xf32, #tpu.memory_space<vmem>>, vector<1x128x128xf32>
    %1 = vector.shape_cast %0 : vector<1x128x128xf32> to vector<128x128xf32>
    %2 = arith.truncf %1 : vector<128x128xf32> to vector<128x128xbf16>
    %c0_2 = arith.constant 0 : index
    %c0_3 = arith.constant 0 : index
    %3 = vector.load %arg3[%c0_2, %c0_3] : memref<128x128xbf16, #tpu.memory_space<vmem>>, vector<128x128xbf16>
    %cst = arith.constant dense<0.000000e+00> : vector<128x128xf32>
    %4 = tpu.matmul %2, %3, %cst {dimension_numbers = #tpu.dot_dimension_numbers<[1], [0], [0], [1], [0, 0, 1, 1], [], []>} : vector<128x128xbf16>, vector<128x128xbf16>, vector<128x128xf32> -> vector<128x128xf32>
    %c0_4 = arith.constant 0 : index
    %c0_5 = arith.constant 0 : index
    %5 = vector.load %arg4[%c0_4, %c0_5] : memref<1x128xf32, #tpu.memory_space<vmem>>, vector<1x128xf32>
    %6 = vector.broadcast %5 : vector<1x128xf32> to vector<128x128xf32>
    %7 = arith.addf %4, %6 : vector<128x128xf32>
    %c0_6 = arith.constant 0 : index
    %c0_7 = arith.constant 0 : index
    %8 = vector.load %arg5[%c0_6, %c0_7] : memref<128x128xbf16, #tpu.memory_space<vmem>>, vector<128x128xbf16>
    %cst_8 = arith.constant dense<0.000000e+00> : vector<128x128xf32>
    %9 = tpu.matmul %2, %8, %cst_8 {dimension_numbers = #tpu.dot_dimension_numbers<[1], [0], [0], [1], [0, 0, 1, 1], [], []>} : vector<128x128xbf16>, vector<128x128xbf16>, vector<128x128xf32> -> vector<128x128xf32>
    %c0_9 = arith.constant 0 : index
    %c0_10 = arith.constant 0 : index
    %10 = vector.load %arg6[%c0_9, %c0_10] : memref<1x128xf32, #tpu.memory_space<vmem>>, vector<1x128xf32>
    %11 = vector.broadcast %10 : vector<1x128xf32> to vector<128x128xf32>
    %12 = arith.addf %9, %11 : vector<128x128xf32>
    %c0_11 = arith.constant 0 : index
    %c0_12 = arith.constant 0 : index
    %13 = vector.load %arg7[%c0_11, %c0_12] : memref<128x128xbf16, #tpu.memory_space<vmem>>, vector<128x128xbf16>
    %cst_13 = arith.constant dense<0.000000e+00> : vector<128x128xf32>
    %14 = tpu.matmul %2, %13, %cst_13 {dimension_numbers = #tpu.dot_dimension_numbers<[1], [0], [0], [1], [0, 0, 1, 1], [], []>} : vector<128x128xbf16>, vector<128x128xbf16>, vector<128x128xf32> -> vector<128x128xf32>
    %c0_14 = arith.constant 0 : index
    %c0_15 = arith.constant 0 : index
    %15 = vector.load %arg8[%c0_14, %c0_15] : memref<1x128xf32, #tpu.memory_space<vmem>>, vector<1x128xf32>
    %16 = vector.broadcast %15 : vector<1x128xf32> to vector<128x128xf32>
    %17 = arith.addf %14, %16 : vector<128x128xf32>
    %18 = arith.truncf %7 : vector<128x128xf32> to vector<128x128xbf16>
    %c0_16 = arith.constant 0 : index
    %c0_17 = arith.constant 0 : index
    %c0_18 = arith.constant 0 : index
    %19 = vector.load %arg9[%c0_16, %c0_17, %c0_18] : memref<1x128x128xbf16, #tpu.memory_space<vmem>>, vector<1x128x128xbf16>
    %20 = vector.shape_cast %19 : vector<1x128x128xbf16> to vector<128x128xbf16>
    %21 = vector.shape_cast %18 : vector<128x128xbf16> to vector<1x128x128xbf16>
    tpu.vector_store %arg9[%c0_16, %c0_17, %c0_18], %21 {strides = array<i32>} : memref<1x128x128xbf16, #tpu.memory_space<vmem>>, vector<1x128x128xbf16>,
    %22 = arith.truncf %12 : vector<128x128xf32> to vector<128x128xbf16>
    %c0_19 = arith.constant 0 : index
    %c0_20 = arith.constant 0 : index
    %c0_21 = arith.constant 0 : index
    %23 = vector.load %arg10[%c0_19, %c0_20, %c0_21] : memref<1x128x128xbf16, #tpu.memory_space<vmem>>, vector<1x128x128xbf16>
    %24 = vector.shape_cast %23 : vector<1x128x128xbf16> to vector<128x128xbf16>
    %25 = vector.shape_cast %22 : vector<128x128xbf16> to vector<1x128x128xbf16>
    tpu.vector_store %arg10[%c0_19, %c0_20, %c0_21], %25 {strides = array<i32>} : memref<1x128x128xbf16, #tpu.memory_space<vmem>>, vector<1x128x128xbf16>,
    %26 = arith.truncf %17 : vector<128x128xf32> to vector<128x128xbf16>
    %c0_22 = arith.constant 0 : index
    %c0_23 = arith.constant 0 : index
    %c0_24 = arith.constant 0 : index
    %27 = vector.load %arg11[%c0_22, %c0_23, %c0_24] : memref<1x128x128xbf16, #tpu.memory_space<vmem>>, vector<1x128x128xbf16>
    %28 = vector.shape_cast %27 : vector<1x128x128xbf16> to vector<128x128xbf16>
    %29 = vector.shape_cast %26 : vector<128x128xbf16> to vector<1x128x128xbf16>
    tpu.vector_store %arg11[%c0_22, %c0_23, %c0_24], %29 {strides = array<i32>} : memref<1x128x128xbf16, #tpu.memory_space<vmem>>, vector<1x128x128xbf16>,
    return
  }
  func.func @transform_0(%arg0: i32, %arg1: i32) -> (i32, i32, i32) {
    %c0_i32 = arith.constant 0 : i32
    %c0_i32_0 = arith.constant 0 : i32
    return %arg0, %arg1, %c0_i32 : i32, i32, i32
  }
  func.func @transform_1(%arg0: i32, %arg1: i32) -> (i32, i32) {
    %c0_i32 = arith.constant 0 : i32
    %c0_i32_0 = arith.constant 0 : i32
    %c0_i32_1 = arith.constant 0 : i32
    return %c0_i32, %c0_i32_0 : i32, i32
  }
  func.func @transform_2(%arg0: i32, %arg1: i32) -> (i32, i32) {
    %c0_i32 = arith.constant 0 : i32
    %c0_i32_0 = arith.constant 0 : i32
    %c0_i32_1 = arith.constant 0 : i32
    return %c0_i32, %c0_i32_0 : i32, i32
  }
  func.func @transform_3(%arg0: i32, %arg1: i32) -> (i32, i32) {
    %c0_i32 = arith.constant 0 : i32
    %c0_i32_0 = arith.constant 0 : i32
    %c0_i32_1 = arith.constant 0 : i32
    return %c0_i32, %c0_i32_0 : i32, i32
  }
  func.func @transform_4(%arg0: i32, %arg1: i32) -> (i32, i32) {
    %c0_i32 = arith.constant 0 : i32
    %c0_i32_0 = arith.constant 0 : i32
    %c0_i32_1 = arith.constant 0 : i32
    return %c0_i32, %c0_i32_0 : i32, i32
  }
  func.func @transform_5(%arg0: i32, %arg1: i32) -> (i32, i32) {
    %c0_i32 = arith.constant 0 : i32
    %c0_i32_0 = arith.constant 0 : i32
    %c0_i32_1 = arith.constant 0 : i32
    return %c0_i32, %c0_i32_0 : i32, i32
  }
  func.func @transform_6(%arg0: i32, %arg1: i32) -> (i32, i32) {
    %c0_i32 = arith.constant 0 : i32
    %c0_i32_0 = arith.constant 0 : i32
    %c0_i32_1 = arith.constant 0 : i32
    return %c0_i32, %c0_i32_0 : i32, i32
  }
  func.func @transform_7(%arg0: i32, %arg1: i32) -> (i32, i32, i32) {
    %c0_i32 = arith.constant 0 : i32
    %c0_i32_0 = arith.constant 0 : i32
    return %arg0, %arg1, %c0_i32 : i32, i32, i32
  }
  func.func @transform_8(%arg0: i32, %arg1: i32) -> (i32, i32, i32) {
    %c0_i32 = arith.constant 0 : i32
    %c0_i32_0 = arith.constant 0 : i32
    return %arg0, %arg1, %c0_i32 : i32, i32, i32
  }
  func.func @transform_9(%arg0: i32, %arg1: i32) -> (i32, i32, i32) {
    %c0_i32 = arith.constant 0 : i32
    %c0_i32_0 = arith.constant 0 : i32
    return %arg0, %arg1, %c0_i32 : i32, i32, i32
  }
}

module attributes {stable_mosaic.version = 11 : i64} {
  func.func @kernel(%arg0: i32, %arg1: i32, %arg2: i32, %arg3: memref<1xf32, #tpu.memory_space<smem>>, %arg4: memref<1x128x128xbf16, #tpu.memory_space<vmem>>, %arg5: memref<1x128x128xbf16, #tpu.memory_space<vmem>>, %arg6: memref<1x128x128xbf16, #tpu.memory_space<vmem>>, %arg7: memref<1x128x128xf32, #tpu.memory_space<vmem>>, %arg8: memref<1x128x128xf32, #tpu.memory_space<vmem>>, %arg9: memref<128x1xf32, #tpu.memory_space<vmem>>, %arg10: memref<128x1xf32, #tpu.memory_space<vmem>>, %arg11: memref<128x128xf32, #tpu.memory_space<vmem>>) attributes {dimension_semantics = [#tpu.dimension_semantics<parallel>, #tpu.dimension_semantics<parallel>, #tpu.dimension_semantics<arbitrary>], iteration_bounds = array<i64: 2, 2, 2>, scalar_prefetch = 0 : i64, scratch_operands = 3 : i64, tpu.core_type = #tpu.core_type<tc>, window_params = [{transform_indices = @transform_0, window_bounds = array<i64: 1>}, {transform_indices = @transform_1, window_bounds = array<i64: 1, 128, 128>}, {transform_indices = @transform_2, window_bounds = array<i64: 1, 128, 128>}, {transform_indices = @transform_3, window_bounds = array<i64: 1, 128, 128>}, {transform_indices = @transform_4, window_bounds = array<i64: 1, 128, 128>}, {transform_indices = @transform_5, window_bounds = array<i64: 1, 128, 128>}]} {
    %c0_i32 = arith.constant 0 : i32
    %0 = arith.cmpi eq, %arg2, %c0_i32 : i32
    %1 = arith.extui %0 : i1 to i32
    %c0_i32_0 = arith.constant 0 : i32
    %2 = arith.cmpi ne, %1, %c0_i32_0 : i32
    scf.if %2 {
      %cst_25 = arith.constant 0xFF800000 : f32
      %36 = vector.broadcast %cst_25 : f32 to vector<128x1xf32>
      %c0_26 = arith.constant 0 : index
      %c0_27 = arith.constant 0 : index
      %37 = vector.load %arg9[%c0_26, %c0_27] : memref<128x1xf32, #tpu.memory_space<vmem>>, vector<128x1xf32>
      tpu.vector_store %arg9[%c0_26, %c0_27], %36 {strides = array<i32>} : memref<128x1xf32, #tpu.memory_space<vmem>>, vector<128x1xf32>,
      %cst_28 = arith.constant 0.000000e+00 : f32
      %38 = vector.broadcast %cst_28 : f32 to vector<128x1xf32>
      %c0_29 = arith.constant 0 : index
      %c0_30 = arith.constant 0 : index
      %39 = vector.load %arg10[%c0_29, %c0_30] : memref<128x1xf32, #tpu.memory_space<vmem>>, vector<128x1xf32>
      tpu.vector_store %arg10[%c0_29, %c0_30], %38 {strides = array<i32>} : memref<128x1xf32, #tpu.memory_space<vmem>>, vector<128x1xf32>,
      %cst_31 = arith.constant 0.000000e+00 : f32
      %40 = vector.broadcast %cst_31 : f32 to vector<128x128xf32>
      %c0_32 = arith.constant 0 : index
      %c0_33 = arith.constant 0 : index
      %41 = vector.load %arg11[%c0_32, %c0_33] : memref<128x128xf32, #tpu.memory_space<vmem>>, vector<128x128xf32>
      tpu.vector_store %arg11[%c0_32, %c0_33], %40 {strides = array<i32>} : memref<128x128xf32, #tpu.memory_space<vmem>>, vector<128x128xf32>,
    } else {
    }
    %c0 = arith.constant 0 : index
    %c0_1 = arith.constant 0 : index
    %c0_2 = arith.constant 0 : index
    %3 = vector.load %arg4[%c0, %c0_1, %c0_2] : memref<1x128x128xbf16, #tpu.memory_space<vmem>>, vector<1x128x128xbf16>
    %4 = vector.shape_cast %3 : vector<1x128x128xbf16> to vector<128x128xbf16>
    %c0_3 = arith.constant 0 : index
    %c0_4 = arith.constant 0 : index
    %c0_5 = arith.constant 0 : index
    %5 = vector.load %arg5[%c0_3, %c0_4, %c0_5] : memref<1x128x128xbf16, #tpu.memory_space<vmem>>, vector<1x128x128xbf16>
    %6 = vector.shape_cast %5 : vector<1x128x128xbf16> to vector<128x128xbf16>
    %cst = arith.constant dense<0.000000e+00> : vector<128x128xf32>
    %7 = tpu.matmul %4, %6, %cst {dimension_numbers = #tpu.dot_dimension_numbers<[1], [1], [0], [0], [0, 0, 1, 0], [], []>} : vector<128x128xbf16>, vector<128x128xbf16>, vector<128x128xf32> -> vector<128x128xf32>
    %c0_6 = arith.constant 0 : index
    %c0_7 = arith.constant 0 : index
    %8 = vector.load %arg9[%c0_6, %c0_7] : memref<128x1xf32, #tpu.memory_space<vmem>>, vector<128x1xf32>
    %cst_8 = arith.constant dense<0xFF800000> : vector<128xf32>
    %9 = vector.multi_reduction <maximumf>, %7, %cst_8 [1] : vector<128x128xf32> to vector<128xf32>
    %10 = vector.shape_cast %9 : vector<128xf32> to vector<128x1xf32>
    %11 = arith.maximumf %8, %10 : vector<128x1xf32>
    %12 = arith.subf %8, %11 : vector<128x1xf32>
    %13 = math.exp %12 : vector<128x1xf32>
    %14 = vector.broadcast %11 : vector<128x1xf32> to vector<128x128xf32>
    %15 = arith.subf %7, %14 : vector<128x128xf32>
    %16 = math.exp %15 : vector<128x128xf32>
    %c0_9 = arith.constant 0 : index
    %c0_10 = arith.constant 0 : index
    %17 = vector.load %arg10[%c0_9, %c0_10] : memref<128x1xf32, #tpu.memory_space<vmem>>, vector<128x1xf32>
    %18 = arith.mulf %13, %17 : vector<128x1xf32>
    %cst_11 = arith.constant dense<0.000000e+00> : vector<128xf32>
    %19 = vector.multi_reduction <add>, %16, %cst_11 [1] : vector<128x128xf32> to vector<128xf32>
    %20 = vector.shape_cast %19 : vector<128xf32> to vector<128x1xf32>
    %21 = arith.addf %18, %20 : vector<128x1xf32>
    %c0_12 = arith.constant 0 : index
    %c0_13 = arith.constant 0 : index
    %22 = vector.load %arg10[%c0_12, %c0_13] : memref<128x1xf32, #tpu.memory_space<vmem>>, vector<128x1xf32>
    tpu.vector_store %arg10[%c0_12, %c0_13], %21 {strides = array<i32>} : memref<128x1xf32, #tpu.memory_space<vmem>>, vector<128x1xf32>,
    %c0_14 = arith.constant 0 : index
    %c0_15 = arith.constant 0 : index
    %23 = vector.load %arg11[%c0_14, %c0_15] : memref<128x128xf32, #tpu.memory_space<vmem>>, vector<128x128xf32>
    %24 = vector.broadcast %13 : vector<128x1xf32> to vector<128x128xf32>
    %25 = arith.mulf %24, %23 : vector<128x128xf32>
    %26 = arith.truncf %16 : vector<128x128xf32> to vector<128x128xbf16>
    %c0_16 = arith.constant 0 : index
    %c0_17 = arith.constant 0 : index
    %c0_18 = arith.constant 0 : index
    %27 = vector.load %arg6[%c0_16, %c0_17, %c0_18] : memref<1x128x128xbf16, #tpu.memory_space<vmem>>, vector<1x128x128xbf16>
    %28 = vector.shape_cast %27 : vector<1x128x128xbf16> to vector<128x128xbf16>
    %cst_19 = arith.constant dense<0.000000e+00> : vector<128x128xf32>
    %29 = tpu.matmul %26, %28, %cst_19 {dimension_numbers = #tpu.dot_dimension_numbers<[1], [0], [0], [1], [0, 0, 1, 1], [], []>} : vector<128x128xbf16>, vector<128x128xbf16>, vector<128x128xf32> -> vector<128x128xf32>
    %30 = arith.addf %25, %29 : vector<128x128xf32>
    %c0_20 = arith.constant 0 : index
    %c0_21 = arith.constant 0 : index
    %31 = vector.load %arg11[%c0_20, %c0_21] : memref<128x128xf32, #tpu.memory_space<vmem>>, vector<128x128xf32>
    tpu.vector_store %arg11[%c0_20, %c0_21], %30 {strides = array<i32>} : memref<128x128xf32, #tpu.memory_space<vmem>>, vector<128x128xf32>,
    %c0_22 = arith.constant 0 : index
    %c0_23 = arith.constant 0 : index
    %32 = vector.load %arg9[%c0_22, %c0_23] : memref<128x1xf32, #tpu.memory_space<vmem>>, vector<128x1xf32>
    tpu.vector_store %arg9[%c0_22, %c0_23], %11 {strides = array<i32>} : memref<128x1xf32, #tpu.memory_space<vmem>>, vector<128x1xf32>,
    %c1_i32 = arith.constant 1 : i32
    %33 = arith.cmpi eq, %arg2, %c1_i32 : i32
    %34 = arith.extui %33 : i1 to i32
    %c0_i32_24 = arith.constant 0 : i32
    %35 = arith.cmpi ne, %34, %c0_i32_24 : i32
    scf.if %35 {
      %c0_25 = arith.constant 0 : index
      %c0_26 = arith.constant 0 : index
      %36 = vector.load %arg11[%c0_25, %c0_26] : memref<128x128xf32, #tpu.memory_space<vmem>>, vector<128x128xf32>
      %c0_27 = arith.constant 0 : index
      %c0_28 = arith.constant 0 : index
      %37 = vector.load %arg10[%c0_27, %c0_28] : memref<128x1xf32, #tpu.memory_space<vmem>>, vector<128x1xf32>
      %38 = tpu.reciprocal %37 {approx = true} : vector<128x1xf32> -> vector<128x1xf32>
      %39 = vector.broadcast %38 : vector<128x1xf32> to vector<128x128xf32>
      %40 = arith.mulf %36, %39 : vector<128x128xf32>
      %c0_29 = arith.constant 0 : index
      %41 = memref.load %arg3[%c0_29] : memref<1xf32, #tpu.memory_space<smem>>
      %42 = vector.broadcast %41 : f32 to vector<128x128xf32>
      %43 = arith.mulf %42, %40 : vector<128x128xf32>
      %c0_30 = arith.constant 0 : index
      %c0_31 = arith.constant 0 : index
      %c0_32 = arith.constant 0 : index
      %44 = vector.load %arg7[%c0_30, %c0_31, %c0_32] : memref<1x128x128xf32, #tpu.memory_space<vmem>>, vector<1x128x128xf32>
      %45 = vector.shape_cast %44 : vector<1x128x128xf32> to vector<128x128xf32>
      %46 = arith.addf %43, %45 : vector<128x128xf32>
      %c0_33 = arith.constant 0 : index
      %c0_34 = arith.constant 0 : index
      %c0_35 = arith.constant 0 : index
      %47 = vector.load %arg8[%c0_33, %c0_34, %c0_35] : memref<1x128x128xf32, #tpu.memory_space<vmem>>, vector<1x128x128xf32>
      %48 = vector.shape_cast %47 : vector<1x128x128xf32> to vector<128x128xf32>
      %49 = vector.shape_cast %46 : vector<128x128xf32> to vector<1x128x128xf32>
      tpu.vector_store %arg8[%c0_33, %c0_34, %c0_35], %49 {strides = array<i32>} : memref<1x128x128xf32, #tpu.memory_space<vmem>>, vector<1x128x128xf32>,
    } else {
    }
    return
  }
  func.func @transform_0(%arg0: i32, %arg1: i32, %arg2: i32) -> i32 {
    %c0_i32 = arith.constant 0 : i32
    %c0_i32_0 = arith.constant 0 : i32
    return %c0_i32 : i32
  }
  func.func @transform_1(%arg0: i32, %arg1: i32, %arg2: i32) -> (i32, i32, i32) {
    %c0_i32 = arith.constant 0 : i32
    %c0_i32_0 = arith.constant 0 : i32
    return %arg0, %arg1, %c0_i32 : i32, i32, i32
  }
  func.func @transform_2(%arg0: i32, %arg1: i32, %arg2: i32) -> (i32, i32, i32) {
    %c0_i32 = arith.constant 0 : i32
    %c0_i32_0 = arith.constant 0 : i32
    return %arg0, %arg2, %c0_i32 : i32, i32, i32
  }
  func.func @transform_3(%arg0: i32, %arg1: i32, %arg2: i32) -> (i32, i32, i32) {
    %c0_i32 = arith.constant 0 : i32
    %c0_i32_0 = arith.constant 0 : i32
    return %arg0, %arg2, %c0_i32 : i32, i32, i32
  }
  func.func @transform_4(%arg0: i32, %arg1: i32, %arg2: i32) -> (i32, i32, i32) {
    %c0_i32 = arith.constant 0 : i32
    %c0_i32_0 = arith.constant 0 : i32
    return %arg0, %arg1, %c0_i32 : i32, i32, i32
  }
  func.func @transform_5(%arg0: i32, %arg1: i32, %arg2: i32) -> (i32, i32, i32) {
    %c0_i32 = arith.constant 0 : i32
    %c0_i32_0 = arith.constant 0 : i32
    return %arg0, %arg1, %c0_i32 : i32, i32, i32
  }
}

</mosaic_0001>

<llo_original>
// kernel: pam_forward.2
$region0: #{pam_forward.2}
  #allocation0 [shape = 'u32[]', space=smem, size = 0x4, offset = 0x4, fixed_abs, tag = 'smem constant byte address 0x4 - core index']
  #allocation1 [shape = 'u32[144,128]{1,0:T(1,128)}', space=vmem, size = 0x12000, scoped, tag = 'internal scratch']
  %s0 = inlined_call_operand.hbm [shape: f32[2,256,128], index: 0, kind: input, shape index: {}]
  %s1 = inlined_call_operand.hbm [shape: bf16[128,128], index: 1, kind: input, shape index: {}]
  %s2 = inlined_call_operand.hbm [shape: f32[1,128], index: 2, kind: input, shape index: {}]
  %s3 = inlined_call_operand.hbm [shape: bf16[128,128], index: 3, kind: input, shape index: {}]
  %s4 = inlined_call_operand.hbm [shape: f32[1,128], index: 4, kind: input, shape index: {}]
  %s5 = inlined_call_operand.hbm [shape: bf16[128,128], index: 5, kind: input, shape index: {}]
  %s6 = inlined_call_operand.hbm [shape: f32[1,128], index: 6, kind: input, shape index: {}]
  %s7 = inlined_call_operand.hbm [shape: bf16[2,256,128], index: 7, kind: output, shape index: {0}]
  %s8 = inlined_call_operand.hbm [shape: bf16[2,256,128], index: 8, kind: output, shape index: {1}]
  %s9 = inlined_call_operand.hbm [shape: bf16[2,256,128], index: 9, kind: output, shape index: {2}]
  %10 = xla_tuple %s7, %s8, %s9
  %s11 = sld [smem:[#allocation0]]
  $region105: #{pam_forward.2} parent=0
    _
  %s13 = ssub.s32 1, %s11
  %s14 = scalar_select 0, %s13, %s11
  $region1: #{pam_forward.2} parent=0
    #allocation2 [shape = 'u8[131072]{0}', space=vmem, size = 0x20000, scoped, tag = 'input window, operand 0']
    #allocation3 [shape = 's32[2]{0}', space=sflag, size = 0x8, scoped, tag = 'scoped memory for pam_forward.2']
    #allocation4 [shape = 's32[2]{0}', space=sflag, size = 0x8, scoped, tag = 'scoped memory for pam_forward.2']
    #allocation5 [shape = 'u8[32768]{0}', space=vmem, size = 0x8000, scoped, tag = 'input window, operand 1, single buffered']
    #allocation6 [shape = 's32[1]{0}', space=sflag, size = 0x4, scoped, tag = 'scoped memory for pam_forward.2']
    #allocation7 [shape = 'u8[512]{0}', space=vmem, size = 0x400, scoped, tag = 'input window, operand 2, single buffered']
    #allocation8 [shape = 'u8[32768]{0}', space=vmem, size = 0x8000, scoped, tag = 'input window, operand 3, single buffered']
    #allocation9 [shape = 's32[1]{0}', space=sflag, size = 0x4, scoped, tag = 'scoped memory for pam_forward.2']
    #allocation10 [shape = 'u8[512]{0}', space=vmem, size = 0x400, scoped, tag = 'input window, operand 4, single buffered']
    #allocation11 [shape = 'u8[32768]{0}', space=vmem, size = 0x8000, scoped, tag = 'input window, operand 5, single buffered']
    #allocation12 [shape = 's32[1]{0}', space=sflag, size = 0x4, scoped, tag = 'scoped memory for pam_forward.2']
    #allocation13 [shape = 'u8[512]{0}', space=vmem, size = 0x400, scoped, tag = 'input window, operand 6, single buffered']
    #allocation14 [shape = 'u8[65536]{0}', space=vmem, size = 0x10000, scoped, tag = 'output window, operand 0']
    #allocation15 [shape = 'u8[65536]{0}', space=vmem, size = 0x10000, scoped, tag = 'output window, operand 1']
    #allocation16 [shape = 's32[2]{0}', space=sflag, size = 0x8, scoped, tag = 'scoped memory for pam_forward.2']
    #allocation17 [shape = 'u8[65536]{0}', space=vmem, size = 0x10000, scoped, tag = 'output window, operand 2']
    %15 = vsyncpa [#allocation3], 0
    %s16 = scalar_lea.sflag [#allocation3], 1
    %17 = vsyncpa %s16, 0
    %18 = vsyncpa [#allocation6], 0
    %19 = vsyncpa [#allocation9], 0
    %20 = vsyncpa [#allocation12], 0
    %21 = vsyncpa [#allocation4], 0
    %s22 = scalar_lea.sflag [#allocation4], 1
    %23 = vsyncpa %s22, 0
    %24 = vsyncpa [#allocation16], 0
    %s25 = scalar_lea.sflag [#allocation16], 1
    %26 = vsyncpa %s25, 0
    loop: start=0, step=1, limit=6
    $region2: #{pam_forward.2} parent=1 // loop_pre_header
      _
    $region3: #{pam_forward.2} parent=1 // loop_header
      %s28 = sphi 0, %s32
      %p29 = scmp.ge.s32.totalorder %s28, 6
      %s35 = sphi 0, %s47
      %s36 = sphi 0, %s43
      %s37 = sphi 0, %s35
      %s38 = sphi 0, %s36
      %s39 = sphi 0, %s37
      %s40 = sphi 0, %s38
      %s52 = sphi 0, %s54
      %s55 = sphi 0, %s52
      %s56 = sphi 0, %s55
      %s72 = sphi 0, %s56
      %s76 = sphi 0, %s76
      %s78 = sphi 0, %s76
      %s79 = sphi 0, %s78
      %s93 = sphi 0, %s79
      %s97 = sphi 0, %s97
      %s99 = sphi 0, %s97
      %s100 = sphi 0, %s99
      %s114 = sphi 0, %s100
      %s118 = sphi 0, %s118
      %s120 = sphi 0, %s118
      %s121 = sphi 0, %s120
      %s135 = sphi 0, %s121
      %s139 = sphi 0, %s139
      %s141 = sphi 0, %s139
      %s142 = sphi 0, %s141
      %s156 = sphi 0, %s142
      %s160 = sphi 0, %s160
      %s162 = sphi 0, %s160
      %s163 = sphi 0, %s162
      %s177 = sphi 0, %s163
      %s181 = sphi 0, %s181
      %s183 = sphi 0, %s181
      %s184 = sphi 0, %s183
      %s198 = sphi 0, %s184
      %s206 = sphi 0, %s208
      %s209 = sphi 0, %s206
      %s210 = sphi 0, %s209
      %s226 = sphi 0, %s210
      %s234 = sphi 0, %s236
      %s237 = sphi 0, %s234
      %s238 = sphi 0, %s237
      %s254 = sphi 0, %s238
      %s262 = sphi 0, %s264
      %s265 = sphi 0, %s262
      %s266 = sphi 0, %s265
      %s282 = sphi 0, %s266
    $region4: #{pam_forward.2} parent=1 // loop_header_branch
      %31 = sbr.rel (%p29) target = $region8
    $region5: #{pam_forward.2} parent=1 // loop_body
      %s33 = ssub.s32 %s28, 1
      %s34 = ssub.s32 %s28, 2
      %s41 = sadd.s32 1, %s36
      %p42 = scmp.ge.s32.totalorder %s41, 2
      %s43 = scalar_select %p42, 0, %s41
      %s44 = sadd.s32 1, %s35
      %s45 = scalar_select %p42, %s44, %s35
      %p46 = scmp.ge.s32.totalorder %s45, 2
      %s47 = scalar_select %p46, 0, %s45
      %s48 = ssub.s32 %s35, %s47
      %s49 = ssub.s32 %s36, %s43
      %s50 = sor.u32 %s48, %s49
      %p51 = scmp.eq.s32.totalorder %s50, 0
      %s53 = sadd.s32 %s52, 1
      %s54 = scalar_select %p51, %s52, %s53
      %p57 = pneg %p51
      %p58 = scmp.eq.s32.totalorder %s28, 3
      %p59 = por %p57, %p58
      %p60 = scmp.ne.s32.totalorder %s52, %s55
      %p61 = scmp.eq.s32.totalorder %s28, 0
      %p62 = por %p60, %p61
      %p63 = scmp.ne.s32.totalorder %s52, %s55
      %p64 = scmp.eq.s32.totalorder %s33, 3
      %p65 = por %p63, %p64
      %p66 = scmp.ne.s32.totalorder %s55, %s56
      %p67 = scmp.eq.s32.totalorder %s33, 0
      %p68 = por %p66, %p67
      %p69 = scmp.ne.s32.totalorder %s55, %s56
      %p70 = scmp.eq.s32.totalorder %s34, 3
      %p71 = por %p69, %p70
      %p73 = scmp.ne.s32.totalorder %s56, %s72
      %p74 = scmp.eq.s32.totalorder %s34, 0
      %p75 = por %p73, %p74
      %s77 = sadd.s32 %s76, 1
      %p80 = scmp.eq.s32.totalorder %s28, 3
      %p81 = scmp.ne.s32.totalorder %s76, %s78
      %p82 = scmp.eq.s32.totalorder %s28, 0
      %p83 = por %p81, %p82
      %p84 = scmp.ne.s32.totalorder %s76, %s78
      %p85 = scmp.eq.s32.totalorder %s33, 3
      %p86 = por %p84, %p85
      %p87 = scmp.ne.s32.totalorder %s78, %s79
      %p88 = scmp.eq.s32.totalorder %s33, 0
      %p89 = por %p87, %p88
      %p90 = scmp.ne.s32.totalorder %s78, %s79
      %p91 = scmp.eq.s32.totalorder %s34, 3
      %p92 = por %p90, %p91
      %p94 = scmp.ne.s32.totalorder %s79, %s93
      %p95 = scmp.eq.s32.totalorder %s34, 0
      %p96 = por %p94, %p95
      %s98 = sadd.s32 %s97, 1
      %p101 = scmp.eq.s32.totalorder %s28, 3
      %p102 = scmp.ne.s32.totalorder %s97, %s99
      %p103 = scmp.eq.s32.totalorder %s28, 0
      %p104 = por %p102, %p103
      %p105 = scmp.ne.s32.totalorder %s97, %s99
      %p106 = scmp.eq.s32.totalorder %s33, 3
      %p107 = por %p105, %p106
      %p108 = scmp.ne.s32.totalorder %s99, %s100
      %p109 = scmp.eq.s32.totalorder %s33, 0
      %p110 = por %p108, %p109
      %p111 = scmp.ne.s32.totalorder %s99, %s100
      %p112 = scmp.eq.s32.totalorder %s34, 3
      %p113 = por %p111, %p112
      %p115 = scmp.ne.s32.totalorder %s100, %s114
      %p116 = scmp.eq.s32.totalorder %s34, 0
      %p117 = por %p115, %p116
      %s119 = sadd.s32 %s118, 1
      %p122 = scmp.eq.s32.totalorder %s28, 3
      %p123 = scmp.ne.s32.totalorder %s118, %s120
      %p124 = scmp.eq.s32.totalorder %s28, 0
      %p125 = por %p123, %p124
      %p126 = scmp.ne.s32.totalorder %s118, %s120
      %p127 = scmp.eq.s32.totalorder %s33, 3
      %p128 = por %p126, %p127
      %p129 = scmp.ne.s32.totalorder %s120, %s121
      %p130 = scmp.eq.s32.totalorder %s33, 0
      %p131 = por %p129, %p130
      %p132 = scmp.ne.s32.totalorder %s120, %s121
      %p133 = scmp.eq.s32.totalorder %s34, 3
      %p134 = por %p132, %p133
      %p136 = scmp.ne.s32.totalorder %s121, %s135
      %p137 = scmp.eq.s32.totalorder %s34, 0
      %p138 = por %p136, %p137
      %s140 = sadd.s32 %s139, 1
      %p143 = scmp.eq.s32.totalorder %s28, 3
      %p144 = scmp.ne.s32.totalorder %s139, %s141
      %p145 = scmp.eq.s32.totalorder %s28, 0
      %p146 = por %p144, %p145
      %p147 = scmp.ne.s32.totalorder %s139, %s141
      %p148 = scmp.eq.s32.totalorder %s33, 3
      %p149 = por %p147, %p148
      %p150 = scmp.ne.s32.totalorder %s141, %s142
      %p151 = scmp.eq.s32.totalorder %s33, 0
      %p152 = por %p150, %p151
      %p153 = scmp.ne.s32.totalorder %s141, %s142
      %p154 = scmp.eq.s32.totalorder %s34, 3
      %p155 = por %p153, %p154
      %p157 = scmp.ne.s32.totalorder %s142, %s156
      %p158 = scmp.eq.s32.totalorder %s34, 0
      %p159 = por %p157, %p158
      %s161 = sadd.s32 %s160, 1
      %p164 = scmp.eq.s32.totalorder %s28, 3
      %p165 = scmp.ne.s32.totalorder %s160, %s162
      %p166 = scmp.eq.s32.totalorder %s28, 0
      %p167 = por %p165, %p166
      %p168 = scmp.ne.s32.totalorder %s160, %s162
      %p169 = scmp.eq.s32.totalorder %s33, 3
      %p170 = por %p168, %p169
      %p171 = scmp.ne.s32.totalorder %s162, %s163
      %p172 = scmp.eq.s32.totalorder %s33, 0
      %p173 = por %p171, %p172
      %p174 = scmp.ne.s32.totalorder %s162, %s163
      %p175 = scmp.eq.s32.totalorder %s34, 3
      %p176 = por %p174, %p175
      %p178 = scmp.ne.s32.totalorder %s163, %s177
      %p179 = scmp.eq.s32.totalorder %s34, 0
      %p180 = por %p178, %p179
      %s182 = sadd.s32 %s181, 1
      %p185 = scmp.eq.s32.totalorder %s28, 3
      %p186 = scmp.ne.s32.totalorder %s181, %s183
      %p187 = scmp.eq.s32.totalorder %s28, 0
      %p188 = por %p186, %p187
      %p189 = scmp.ne.s32.totalorder %s181, %s183
      %p190 = scmp.eq.s32.totalorder %s33, 3
      %p191 = por %p189, %p190
      %p192 = scmp.ne.s32.totalorder %s183, %s184
      %p193 = scmp.eq.s32.totalorder %s33, 0
      %p194 = por %p192, %p193
      %p195 = scmp.ne.s32.totalorder %s183, %s184
      %p196 = scmp.eq.s32.totalorder %s34, 3
      %p197 = por %p195, %p196
      %p199 = scmp.ne.s32.totalorder %s184, %s198
      %p200 = scmp.eq.s32.totalorder %s34, 0
      %p201 = por %p199, %p200
      %s202 = ssub.s32 %s35, %s47
      %s203 = ssub.s32 %s36, %s43
      %s204 = sor.u32 %s202, %s203
      %p205 = scmp.eq.s32.totalorder %s204, 0
      %s207 = sadd.s32 %s206, 1
      %s208 = scalar_select %p205, %s206, %s207
      %p211 = pneg %p205
      %p212 = scmp.eq.s32.totalorder %s28, 3
      %p213 = por %p211, %p212
      %p214 = scmp.ne.s32.totalorder %s206, %s209
      %p215 = scmp.eq.s32.totalorder %s28, 0
      %p216 = por %p214, %p215
      %p217 = scmp.ne.s32.totalorder %s206, %s209
      %p218 = scmp.eq.s32.totalorder %s33, 3
      %p219 = por %p217, %p218
      %p220 = scmp.ne.s32.totalorder %s209, %s210
      %p221 = scmp.eq.s32.totalorder %s33, 0
      %p222 = por %p220, %p221
      %p223 = scmp.ne.s32.totalorder %s209, %s210
      %p224 = scmp.eq.s32.totalorder %s34, 3
      %p225 = por %p223, %p224
      %p227 = scmp.ne.s32.totalorder %s210, %s226
      %p228 = scmp.eq.s32.totalorder %s34, 0
      %p229 = por %p227, %p228
      %s230 = ssub.s32 %s35, %s47
      %s231 = ssub.s32 %s36, %s43
      %s232 = sor.u32 %s230, %s231
      %p233 = scmp.eq.s32.totalorder %s232, 0
      %s235 = sadd.s32 %s234, 1
      %s236 = scalar_select %p233, %s234, %s235
      %p239 = pneg %p233
      %p240 = scmp.eq.s32.totalorder %s28, 3
      %p241 = por %p239, %p240
      %p242 = scmp.ne.s32.totalorder %s234, %s237
      %p243 = scmp.eq.s32.totalorder %s28, 0
      %p244 = por %p242, %p243
      %p245 = scmp.ne.s32.totalorder %s234, %s237
      %p246 = scmp.eq.s32.totalorder %s33, 3
      %p247 = por %p245, %p246
      %p248 = scmp.ne.s32.totalorder %s237, %s238
      %p249 = scmp.eq.s32.totalorder %s33, 0
      %p250 = por %p248, %p249
      %p251 = scmp.ne.s32.totalorder %s237, %s238
      %p252 = scmp.eq.s32.totalorder %s34, 3
      %p253 = por %p251, %p252
      %p255 = scmp.ne.s32.totalorder %s238, %s254
      %p256 = scmp.eq.s32.totalorder %s34, 0
      %p257 = por %p255, %p256
      %s258 = ssub.s32 %s35, %s47
      %s259 = ssub.s32 %s36, %s43
      %s260 = sor.u32 %s258, %s259
      %p261 = scmp.eq.s32.totalorder %s260, 0
      %s263 = sadd.s32 %s262, 1
      %s264 = scalar_select %p261, %s262, %s263
      %p267 = pneg %p261
      %p268 = scmp.eq.s32.totalorder %s28, 3
      %p269 = por %p267, %p268
      %p270 = scmp.ne.s32.totalorder %s262, %s265
      %p271 = scmp.eq.s32.totalorder %s28, 0
      %p272 = por %p270, %p271
      %p273 = scmp.ne.s32.totalorder %s262, %s265
      %p274 = scmp.eq.s32.totalorder %s33, 3
      %p275 = por %p273, %p274
      %p276 = scmp.ne.s32.totalorder %s265, %s266
      %p277 = scmp.eq.s32.totalorder %s33, 0
      %p278 = por %p276, %p277
      %p279 = scmp.ne.s32.totalorder %s265, %s266
      %p280 = scmp.eq.s32.totalorder %s34, 3
      %p281 = por %p279, %p280
      %p283 = scmp.ne.s32.totalorder %s266, %s282
      %p284 = scmp.eq.s32.totalorder %s34, 0
      %p285 = por %p283, %p284
      %p286 = scmp.le.s32.totalorder 1, %s28
      %p287 = scmp.lt.s32.totalorder %s28, 5
      %p288 = pnand %p286, %p287
      %p289 = pneg %p288
      // Predicated region
      $region9: #{pam_forward.2} parent=5 // pred_check
        _
      $region10: #{pam_forward.2} parent=5 // pred_check_branch
        %291 = sbr.rel (%p288) target = $region12
      $region11: #{pam_forward.2} parent=5 // pred_region
        %s292 = ssub.s32 %s28, 1
        // Predicated region
        $region13: #{pam_forward.2} parent=11 // pred_check
          %p293 = pneg %p89
        $region14: #{pam_forward.2} parent=11 // pred_check_branch
          %295 = sbr.rel (%p293) target = $region16
        $region15: #{pam_forward.2} parent=11 // pred_region
          %s297 = ssub.s32 1024, 1024
          %298 = vsyncadd [#allocation6], %s297
          %s299 = sshll.u32 [#allocation5], 4
          %s300 = int_to_ptr.vmem [resolvable:$true] %s299
          %305 = dma.hbm_to_vmem [thread:$0]  %s1, 1024, %s300, [#allocation6], 64, 64, 4
        $region16: #{pam_forward.2} parent=11 // pred_fallthru
          _
        // Predicated region
        $region17: #{pam_forward.2} parent=11 // pred_check
          %p306 = pneg %p110
        $region18: #{pam_forward.2} parent=11 // pred_check_branch
          %308 = sbr.rel (%p306) target = $region20
        $region19: #{pam_forward.2} parent=11 // pred_region
          %s310 = ssub.s32 16, 16
          %311 = vsyncadd [#allocation6], %s310
          %s313 = sshll.u32 [#allocation7], 4
          %s314 = int_to_ptr.vmem [resolvable:$true] %s313
          %316 = dma.hbm_to_vmem [thread:$0]  %s2, 16, %s314, [#allocation6]
        $region20: #{pam_forward.2} parent=11 // pred_fallthru
          _
        // Predicated region
        $region21: #{pam_forward.2} parent=11 // pred_check
          %p317 = pneg %p131
        $region22: #{pam_forward.2} parent=11 // pred_check_branch
          %319 = sbr.rel (%p317) target = $region24
        $region23: #{pam_forward.2} parent=11 // pred_region
          %s321 = ssub.s32 1024, 1024
          %322 = vsyncadd [#allocation9], %s321
          %s323 = sshll.u32 [#allocation8], 4
          %s324 = int_to_ptr.vmem [resolvable:$true] %s323
          %329 = dma.hbm_to_vmem [thread:$0]  %s3, 1024, %s324, [#allocation9], 64, 64, 4
        $region24: #{pam_forward.2} parent=11 // pred_fallthru
          _
        // Predicated region
        $region25: #{pam_forward.2} parent=11 // pred_check
          %p330 = pneg %p152
        $region26: #{pam_forward.2} parent=11 // pred_check_branch
          %332 = sbr.rel (%p330) target = $region28
        $region27: #{pam_forward.2} parent=11 // pred_region
          %s334 = ssub.s32 16, 16
          %335 = vsyncadd [#allocation9], %s334
          %s337 = sshll.u32 [#allocation10], 4
          %s338 = int_to_ptr.vmem [resolvable:$true] %s337
          %340 = dma.hbm_to_vmem [thread:$0]  %s4, 16, %s338, [#allocation9]
        $region28: #{pam_forward.2} parent=11 // pred_fallthru
          _
        // Predicated region
        $region29: #{pam_forward.2} parent=11 // pred_check
          %p341 = pneg %p173
        $region30: #{pam_forward.2} parent=11 // pred_check_branch
          %343 = sbr.rel (%p341) target = $region32
        $region31: #{pam_forward.2} parent=11 // pred_region
          %s345 = ssub.s32 1024, 1024
          %346 = vsyncadd [#allocation12], %s345
          %s347 = sshll.u32 [#allocation11], 4
          %s348 = int_to_ptr.vmem [resolvable:$true] %s347
          %353 = dma.hbm_to_vmem [thread:$0]  %s5, 1024, %s348, [#allocation12], 64, 64, 4
        $region32: #{pam_forward.2} parent=11 // pred_fallthru
          _
        // Predicated region
        $region33: #{pam_forward.2} parent=11 // pred_check
          %p354 = pneg %p194
        $region34: #{pam_forward.2} parent=11 // pred_check_branch
          %356 = sbr.rel (%p354) target = $region36
        $region35: #{pam_forward.2} parent=11 // pred_region
          %s358 = ssub.s32 16, 16
          %359 = vsyncadd [#allocation12], %s358
          %s361 = sshll.u32 [#allocation13], 4
          %s362 = int_to_ptr.vmem [resolvable:$true] %s361
          %364 = dma.hbm_to_vmem [thread:$0]  %s6, 16, %s362, [#allocation12]
        $region36: #{pam_forward.2} parent=11 // pred_fallthru
          _
      $region12: #{pam_forward.2} parent=5 // pred_fallthru
        _
      %p365 = scmp.lt.s32.totalorder %s28, 4
      // Predicated region
      $region37: #{pam_forward.2} parent=5 // pred_check
        %p366 = pneg %p365
      $region38: #{pam_forward.2} parent=5 // pred_check_branch
        %368 = sbr.rel (%p366) target = $region40
      $region39: #{pam_forward.2} parent=5 // pred_region
        // Predicated region
        $region41: #{pam_forward.2} parent=39 // pred_check
          %p369 = pneg %p62
        $region42: #{pam_forward.2} parent=39 // pred_check_branch
          %371 = sbr.rel (%p369) target = $region44
        $region43: #{pam_forward.2} parent=39 // pred_region
          %s372 = sand.u32 %s52, 1
          %s373 = scalar_lea.sflag [#allocation3], %s372
          %s374 = sand.u32 %s52, 1
          %s375 = smul.addr %s374, 128
          %s376 = scalar_lea.vmem [#allocation2], %s375
          %s377 = smul.u32 16, %s36
          %s379 = ssub.s32 2048, 2048
          %380 = vsyncadd %s373, %s379
          %s381 = smul.addr %s35, 32
          %s382 = sadd.s32 %s377, %s381
          %s383 = smul.addr %s382, 128
          %s384 = scalar_lea.hbm %s0, %s383
          %s385 = sshll.u32 %s376, 4
          %s386 = int_to_ptr.vmem [resolvable:$true] %s385
          %391 = dma.hbm_to_vmem [thread:$0]  %s384, 2048, %s386, %s373, 128, 128, 8
        $region44: #{pam_forward.2} parent=39 // pred_fallthru
          _
      $region40: #{pam_forward.2} parent=5 // pred_fallthru
        _
      %p392 = scmp.le.s32.totalorder 1, %s28
      %p393 = scmp.lt.s32.totalorder %s28, 5
      %p394 = pnand %p392, %p393
      %p395 = pneg %p394
      // Predicated region
      $region45: #{pam_forward.2} parent=5 // pred_check
        _
      $region46: #{pam_forward.2} parent=5 // pred_check_branch
        %397 = sbr.rel (%p394) target = $region48
      $region47: #{pam_forward.2} parent=5 // pred_region
        %s398 = ssub.s32 %s28, 1
        %s399 = sand.u32 %s55, 1
        %s400 = scalar_lea.sflag [#allocation3], %s399
        %s401 = sand.u32 %s55, 1
        %s402 = smul.addr %s401, 128
        %s403 = scalar_lea.vmem [#allocation2], %s402
        // Predicated region
        $region49: #{pam_forward.2} parent=47 // pred_check
          %p404 = pneg %p68
        $region50: #{pam_forward.2} parent=47 // pred_check_branch
          %406 = sbr.rel (%p404) target = $region52
        $region51: #{pam_forward.2} parent=47 // pred_region
          %407 = dma.done %s400, 2048
        $region52: #{pam_forward.2} parent=47 // pred_fallthru
          _
        // Predicated region
        $region53: #{pam_forward.2} parent=47 // pred_check
          %p408 = pneg %p89
        $region54: #{pam_forward.2} parent=47 // pred_check_branch
          %410 = sbr.rel (%p408) target = $region56
        $region55: #{pam_forward.2} parent=47 // pred_region
          %411 = dma.done [#allocation6], 1024
        $region56: #{pam_forward.2} parent=47 // pred_fallthru
          _
        // Predicated region
        $region57: #{pam_forward.2} parent=47 // pred_check
          %p412 = pneg %p110
        $region58: #{pam_forward.2} parent=47 // pred_check_branch
          %414 = sbr.rel (%p412) target = $region60
        $region59: #{pam_forward.2} parent=47 // pred_region
          %415 = dma.done [#allocation6], 16
        $region60: #{pam_forward.2} parent=47 // pred_fallthru
          _
        // Predicated region
        $region61: #{pam_forward.2} parent=47 // pred_check
          %p416 = pneg %p131
        $region62: #{pam_forward.2} parent=47 // pred_check_branch
          %418 = sbr.rel (%p416) target = $region64
        $region63: #{pam_forward.2} parent=47 // pred_region
          %419 = dma.done [#allocation9], 1024
        $region64: #{pam_forward.2} parent=47 // pred_fallthru
          _
        // Predicated region
        $region65: #{pam_forward.2} parent=47 // pred_check
          %p420 = pneg %p152
        $region66: #{pam_forward.2} parent=47 // pred_check_branch
          %422 = sbr.rel (%p420) target = $region68
        $region67: #{pam_forward.2} parent=47 // pred_region
          %423 = dma.done [#allocation9], 16
        $region68: #{pam_forward.2} parent=47 // pred_fallthru
          _
        // Predicated region
        $region69: #{pam_forward.2} parent=47 // pred_check
          %p424 = pneg %p173
        $region70: #{pam_forward.2} parent=47 // pred_check_branch
          %426 = sbr.rel (%p424) target = $region72
        $region71: #{pam_forward.2} parent=47 // pred_region
          %427 = dma.done [#allocation12], 1024
        $region72: #{pam_forward.2} parent=47 // pred_fallthru
          _
        // Predicated region
        $region73: #{pam_forward.2} parent=47 // pred_check
          %p428 = pneg %p194
        $region74: #{pam_forward.2} parent=47 // pred_check_branch
          %430 = sbr.rel (%p428) target = $region76
        $region75: #{pam_forward.2} parent=47 // pred_region
          %431 = dma.done [#allocation12], 16
        $region76: #{pam_forward.2} parent=47 // pred_fallthru
          _
        %s432 = sand.u32 %s55, 1
        %s433 = scalar_lea.sflag [#allocation3], %s432
        %s434 = sand.u32 %s55, 1
        %s435 = smul.addr %s434, 128
        %s436 = scalar_lea.vmem [#allocation2], %s435
        %p437 = pneg %p68
        %p438 = pneg %p65
        %p439 = pneg %p89
        %p440 = pneg %p86
        %p441 = pneg %p110
        %p442 = pneg %p107
        %p443 = pneg %p131
        %p444 = pneg %p128
        %p445 = pneg %p152
        %p446 = pneg %p149
        %p447 = pneg %p173
        %p448 = pneg %p170
        %p449 = pneg %p194
        %p450 = pneg %p191
        %p451 = pneg %p222
        %p452 = pneg %p219
        %s453 = sand.u32 %s209, 1
        %s454 = scalar_lea.sflag [#allocation4], %s453
        %s455 = sand.u32 %s209, 1
        %s456 = smul.addr %s455, 64
        %s457 = scalar_lea.vmem [#allocation14], %s456
        %p458 = pneg %p250
        %p459 = pneg %p247
        %s460 = sand.u32 %s33, 1
        %s461 = scalar_lea.sflag [#allocation16], %s460
        %s462 = sand.u32 %s237, 1
        %s463 = smul.addr %s462, 64
        %s464 = scalar_lea.vmem [#allocation15], %s463
        %p465 = pneg %p278
        %p466 = pneg %p275
        %s467 = sand.u32 %s33, 1
        %s468 = scalar_lea.sflag [#allocation16], %s467
        %s469 = sand.u32 %s265, 1
        %s470 = smul.addr %s469, 64
        %s471 = scalar_lea.vmem [#allocation17], %s470
        %s472 = smul.u32 16, %s38
        %s473 = smul.u32 16, %s38
        %s474 = smul.u32 16, %s38
        %s475 = smul.u32 16, %s38
        %v477 = vld [vmem:[%s403] sm:$0xff]
        %v478 = vld [vmem:[%s403 + $0x8] sm:$0xff]
        %v479 = vld [vmem:[%s403 + $0x10] sm:$0xff]
        %v480 = vld [vmem:[%s403 + $0x18] sm:$0xff]
        %v481 = vld [vmem:[%s403 + $0x20] sm:$0xff]
        %v482 = vld [vmem:[%s403 + $0x28] sm:$0xff]
        %v483 = vld [vmem:[%s403 + $0x30] sm:$0xff]
        %v484 = vld [vmem:[%s403 + $0x38] sm:$0xff]
        %v485 = vld [vmem:[%s403 + $0x40] sm:$0xff]
        %v486 = vld [vmem:[%s403 + $0x48] sm:$0xff]
        %v487 = vld [vmem:[%s403 + $0x50] sm:$0xff]
        %v488 = vld [vmem:[%s403 + $0x58] sm:$0xff]
        %v489 = vld [vmem:[%s403 + $0x60] sm:$0xff]
        %v490 = vld [vmem:[%s403 + $0x68] sm:$0xff]
        %v491 = vld [vmem:[%s403 + $0x70] sm:$0xff]
        %v492 = vld [vmem:[%s403 + $0x78] sm:$0xff]
        %v493 = vpack.c.bf16 %v478, %v477
        %v494 = vpack.c.bf16 %v480, %v479
        %v495 = vpack.c.bf16 %v482, %v481
        %v496 = vpack.c.bf16 %v484, %v483
        %v497 = vpack.c.bf16 %v486, %v485
        %v498 = vpack.c.bf16 %v488, %v487
        %v499 = vpack.c.bf16 %v490, %v489
        %v500 = vpack.c.bf16 %v492, %v491
        %v501 = vld [vmem:[#allocation5] sm:$0xf]
        %v502 = vld [vmem:[#allocation5 + $0x4] sm:$0xf]
        %v503 = vld [vmem:[#allocation5 + $0x8] sm:$0xf]
        %v504 = vld [vmem:[#allocation5 + $0xc] sm:$0xf]
        %v505 = vld [vmem:[#allocation5 + $0x10] sm:$0xf]
        %v506 = vld [vmem:[#allocation5 + $0x14] sm:$0xf]
        %v507 = vld [vmem:[#allocation5 + $0x18] sm:$0xf]
        %v508 = vld [vmem:[#allocation5 + $0x1c] sm:$0xf]
        %v509 = vld [vmem:[#allocation5 + $0x20] sm:$0xf]
        %v510 = vld [vmem:[#allocation5 + $0x24] sm:$0xf]
        %v511 = vld [vmem:[#allocation5 + $0x28] sm:$0xf]
        %v512 = vld [vmem:[#allocation5 + $0x2c] sm:$0xf]
        %v513 = vld [vmem:[#allocation5 + $0x30] sm:$0xf]
        %v514 = vld [vmem:[#allocation5 + $0x34] sm:$0xf]
        %v515 = vld [vmem:[#allocation5 + $0x38] sm:$0xf]
        %v516 = vld [vmem:[#allocation5 + $0x3c] sm:$0xf]
        %v517 = vld [vmem:[#allocation7] sm:$0x1]
        %v519 = vlaneseq
        %v520 = vshrl.u32 %v519, 7
        %v521 = vsub.s32 0, %v520
        %v522 = vrot.slane %v517, %v521
        %v540 = vunpack.c.l.b16 %v501
        %v541 = vunpack.c.l.b16 %v502
        %v542 = vunpack.c.l.b16 %v503
        %v543 = vunpack.c.l.b16 %v504
        %v544 = vunpack.c.l.b16 %v505
        %v545 = vunpack.c.l.b16 %v506
        %v546 = vunpack.c.l.b16 %v507
        %v547 = vunpack.c.l.b16 %v508
        %v548 = vunpack.c.l.b16 %v509
        %v549 = vunpack.c.l.b16 %v510
        %v550 = vunpack.c.l.b16 %v511
        %v551 = vunpack.c.l.b16 %v512
        %v552 = vunpack.c.l.b16 %v513
        %v553 = vunpack.c.l.b16 %v514
        %v554 = vunpack.c.l.b16 %v515
        %v555 = vunpack.c.l.b16 %v516
        %v556 = vpack.c.b16 %v541, %v540
        %v557 = vpack.c.b16 %v543, %v542
        %v558 = vpack.c.b16 %v545, %v544
        %v559 = vpack.c.b16 %v547, %v546
        %v560 = vpack.c.b16 %v549, %v548
        %v561 = vpack.c.b16 %v551, %v550
        %v562 = vpack.c.b16 %v553, %v552
        %v563 = vpack.c.b16 %v555, %v554
        %572 = vmatprep.subr.bf16.mxu0 0
        %573 = vmatpush1.bf16.msra.mxu0 %v556
        %574 = vmatprep.subr.bf16.mxu0 0
        %575 = vmatpush1.bf16.msra.mxu0 %v557
        %576 = vmatprep.subr.bf16.mxu0 0
        %577 = vmatpush1.bf16.msra.mxu0 %v558
        %578 = vmatprep.subr.bf16.mxu0 0
        %579 = vmatpush1.bf16.msra.mxu0 %v559
        %580 = vmatprep.subr.bf16.mxu0 0
        %581 = vmatpush1.bf16.msra.mxu0 %v560
        %582 = vmatprep.subr.bf16.mxu0 0
        %583 = vmatpush1.bf16.msra.mxu0 %v561
        %584 = vmatprep.subr.bf16.mxu0 0
        %585 = vmatpush1.bf16.msra.mxu0 %v562
        %586 = vmatprep.subr.bf16.mxu0 0
        %587 = vmatpush1.bf16.msra.mxu0 %v563
        %588 = vmatprep.subr.bf16.mxu0 0
        %589 = vmatpush1.bf16.msra.mxu0 0
        %590 = vmatprep.subr.bf16.mxu0 0
        %591 = vmatpush1.bf16.msra.mxu0 0
        %592 = vmatprep.subr.bf16.mxu0 0
        %593 = vmatpush1.bf16.msra.mxu0 0
        %594 = vmatprep.subr.bf16.mxu0 0
        %595 = vmatpush1.bf16.msra.mxu0 0
        %596 = vmatprep.subr.bf16.mxu0 0
        %597 = vmatpush1.bf16.msra.mxu0 0
        %598 = vmatprep.subr.bf16.mxu0 0
        %599 = vmatpush1.bf16.msra.mxu0 0
        %600 = vmatprep.subr.bf16.mxu0 0
        %601 = vmatpush1.bf16.msra.mxu0 0
        %602 = vmatprep.subr.bf16.mxu0 0
        %603 = vmatpush1.bf16.msra.mxu0 0
        %604 = vmatprep.mubr.bf16.mxu0 0
        %605 = vmatmul.mubr.bf16.gmra.mrb[0].mxu0 %v493
        %v606 = vpop.f32.mrb[0].mxu0
        %v607 = vadd.f32 %v522, %v606
        %v608 = vpop.f32.mrb[0].mxu0
        %v609 = vpop.f32.mrb[0].mxu0
        %v610 = vadd.f32 %v522, %v609
        %v611 = vpop.f32.mrb[0].mxu0
        %612 = vmatprep.mubr.bf16.mxu0 0
        %613 = vmatmul.mubr.bf16.gmra.mrb[0].mxu0 %v494
        %v614 = vpop.f32.mrb[0].mxu0
        %v615 = vadd.f32 %v522, %v614
        %v616 = vpop.f32.mrb[0].mxu0
        %v617 = vpop.f32.mrb[0].mxu0
        %v618 = vadd.f32 %v522, %v617
        %v619 = vpop.f32.mrb[0].mxu0
        %620 = vmatprep.mubr.bf16.mxu0 0
        %621 = vmatmul.mubr.bf16.gmra.mrb[0].mxu0 %v495
        %v622 = vpop.f32.mrb[0].mxu0
        %v623 = vadd.f32 %v522, %v622
        %v624 = vpop.f32.mrb[0].mxu0
        %v625 = vpop.f32.mrb[0].mxu0
        %v626 = vadd.f32 %v522, %v625
        %v627 = vpop.f32.mrb[0].mxu0
        %628 = vmatprep.mubr.bf16.mxu0 0
        %629 = vmatmul.mubr.bf16.gmra.mrb[0].mxu0 %v496
        %v630 = vpop.f32.mrb[0].mxu0
        %v631 = vadd.f32 %v522, %v630
        %v632 = vpop.f32.mrb[0].mxu0
        %v633 = vpop.f32.mrb[0].mxu0
        %v634 = vadd.f32 %v522, %v633
        %v635 = vpop.f32.mrb[0].mxu0
        %636 = vmatprep.mubr.bf16.mxu0 0
        %637 = vmatmul.mubr.bf16.gmra.mrb[0].mxu0 %v497
        %v638 = vpop.f32.mrb[0].mxu0
        %v639 = vadd.f32 %v522, %v638
        %v640 = vpop.f32.mrb[0].mxu0
        %v641 = vpop.f32.mrb[0].mxu0
        %v642 = vadd.f32 %v522, %v641
        %v643 = vpop.f32.mrb[0].mxu0
        %644 = vmatprep.mubr.bf16.mxu0 0
        %645 = vmatmul.mubr.bf16.gmra.mrb[0].mxu0 %v498
        %v646 = vpop.f32.mrb[0].mxu0
        %v647 = vadd.f32 %v522, %v646
        %v648 = vpop.f32.mrb[0].mxu0
        %v649 = vpop.f32.mrb[0].mxu0
        %v650 = vadd.f32 %v522, %v649
        %v651 = vpop.f32.mrb[0].mxu0
        %652 = vmatprep.mubr.bf16.mxu0 0
        %653 = vmatmul.mubr.bf16.gmra.mrb[0].mxu0 %v499
        %v654 = vpop.f32.mrb[0].mxu0
        %v655 = vadd.f32 %v522, %v654
        %v656 = vpop.f32.mrb[0].mxu0
        %v657 = vpop.f32.mrb[0].mxu0
        %v658 = vadd.f32 %v522, %v657
        %v659 = vpop.f32.mrb[0].mxu0
        %660 = vmatprep.mubr.bf16.mxu0 0
        %661 = vmatmul.mubr.bf16.gmra.mrb[0].mxu0 %v500
        %v662 = vpop.f32.mrb[0].mxu0
        %v663 = vadd.f32 %v522, %v662
        %v664 = vpop.f32.mrb[0].mxu0
        %v665 = vpop.f32.mrb[0].mxu0
        %v666 = vadd.f32 %v522, %v665
        %v667 = vpop.f32.mrb[0].mxu0
        %668 = vdwg.mxu0
        %v669 = vld [vmem:[#allocation8] sm:$0xf]
        %v670 = vld [vmem:[#allocation8 + $0x4] sm:$0xf]
        %v671 = vld [vmem:[#allocation8 + $0x8] sm:$0xf]
        %v672 = vld [vmem:[#allocation8 + $0xc] sm:$0xf]
        %v673 = vld [vmem:[#allocation8 + $0x10] sm:$0xf]
        %v674 = vld [vmem:[#allocation8 + $0x14] sm:$0xf]
        %v675 = vld [vmem:[#allocation8 + $0x18] sm:$0xf]
        %v676 = vld [vmem:[#allocation8 + $0x1c] sm:$0xf]
        %v677 = vld [vmem:[#allocation8 + $0x20] sm:$0xf]
        %v678 = vld [vmem:[#allocation8 + $0x24] sm:$0xf]
        %v679 = vld [vmem:[#allocation8 + $0x28] sm:$0xf]
        %v680 = vld [vmem:[#allocation8 + $0x2c] sm:$0xf]
        %v681 = vld [vmem:[#allocation8 + $0x30] sm:$0xf]
        %v682 = vld [vmem:[#allocation8 + $0x34] sm:$0xf]
        %v683 = vld [vmem:[#allocation8 + $0x38] sm:$0xf]
        %v684 = vld [vmem:[#allocation8 + $0x3c] sm:$0xf]
        %v685 = vld [vmem:[#allocation10] sm:$0x1]
        %v687 = vlaneseq
        %v688 = vshrl.u32 %v687, 7
        %v689 = vsub.s32 0, %v688
        %v690 = vrot.slane %v685, %v689
        %v708 = vunpack.c.l.b16 %v669
        %v709 = vunpack.c.l.b16 %v670
        %v710 = vunpack.c.l.b16 %v671
        %v711 = vunpack.c.l.b16 %v672
        %v712 = vunpack.c.l.b16 %v673
        %v713 = vunpack.c.l.b16 %v674
        %v714 = vunpack.c.l.b16 %v675
        %v715 = vunpack.c.l.b16 %v676
        %v716 = vunpack.c.l.b16 %v677
        %v717 = vunpack.c.l.b16 %v678
        %v718 = vunpack.c.l.b16 %v679
        %v719 = vunpack.c.l.b16 %v680
        %v720 = vunpack.c.l.b16 %v681
        %v721 = vunpack.c.l.b16 %v682
        %v722 = vunpack.c.l.b16 %v683
        %v723 = vunpack.c.l.b16 %v684
        %v724 = vpack.c.b16 %v709, %v708
        %v725 = vpack.c.b16 %v711, %v710
        %v726 = vpack.c.b16 %v713, %v712
        %v727 = vpack.c.b16 %v715, %v714
        %v728 = vpack.c.b16 %v717, %v716
        %v729 = vpack.c.b16 %v719, %v718
        %v730 = vpack.c.b16 %v721, %v720
        %v731 = vpack.c.b16 %v723, %v722
        %740 = vmatprep.subr.bf16.mxu0 0
        %741 = vmatpush1.bf16.msra.mxu0 %v724
        %742 = vmatprep.subr.bf16.mxu0 0
        %743 = vmatpush1.bf16.msra.mxu0 %v725
        %744 = vmatprep.subr.bf16.mxu0 0
        %745 = vmatpush1.bf16.msra.mxu0 %v726
        %746 = vmatprep.subr.bf16.mxu0 0
        %747 = vmatpush1.bf16.msra.mxu0 %v727
        %748 = vmatprep.subr.bf16.mxu0 0
        %749 = vmatpush1.bf16.msra.mxu0 %v728
        %750 = vmatprep.subr.bf16.mxu0 0
        %751 = vmatpush1.bf16.msra.mxu0 %v729
        %752 = vmatprep.subr.bf16.mxu0 0
        %753 = vmatpush1.bf16.msra.mxu0 %v730
        %754 = vmatprep.subr.bf16.mxu0 0
        %755 = vmatpush1.bf16.msra.mxu0 %v731
        %756 = vmatprep.subr.bf16.mxu0 0
        %757 = vmatpush1.bf16.msra.mxu0 0
        %758 = vmatprep.subr.bf16.mxu0 0
        %759 = vmatpush1.bf16.msra.mxu0 0
        %760 = vmatprep.subr.bf16.mxu0 0
        %761 = vmatpush1.bf16.msra.mxu0 0
        %762 = vmatprep.subr.bf16.mxu0 0
        %763 = vmatpush1.bf16.msra.mxu0 0
        %764 = vmatprep.subr.bf16.mxu0 0
        %765 = vmatpush1.bf16.msra.mxu0 0
        %766 = vmatprep.subr.bf16.mxu0 0
        %767 = vmatpush1.bf16.msra.mxu0 0
        %768 = vmatprep.subr.bf16.mxu0 0
        %769 = vmatpush1.bf16.msra.mxu0 0
        %770 = vmatprep.subr.bf16.mxu0 0
        %771 = vmatpush1.bf16.msra.mxu0 0
        %772 = vmatprep.mubr.bf16.mxu0 0
        %773 = vmatmul.mubr.bf16.gmra.mrb[0].mxu0 %v493
        %v774 = vpop.f32.mrb[0].mxu0
        %v775 = vadd.f32 %v690, %v774
        %v776 = vpop.f32.mrb[0].mxu0
        %v777 = vpop.f32.mrb[0].mxu0
        %v778 = vadd.f32 %v690, %v777
        %v779 = vpop.f32.mrb[0].mxu0
        %780 = vmatprep.mubr.bf16.mxu0 0
        %781 = vmatmul.mubr.bf16.gmra.mrb[0].mxu0 %v494
        %v782 = vpop.f32.mrb[0].mxu0
        %v783 = vadd.f32 %v690, %v782
        %v784 = vpop.f32.mrb[0].mxu0
        %v785 = vpop.f32.mrb[0].mxu0
        %v786 = vadd.f32 %v690, %v785
        %v787 = vpop.f32.mrb[0].mxu0
        %788 = vmatprep.mubr.bf16.mxu0 0
        %789 = vmatmul.mubr.bf16.gmra.mrb[0].mxu0 %v495
        %v790 = vpop.f32.mrb[0].mxu0
        %v791 = vadd.f32 %v690, %v790
        %v792 = vpop.f32.mrb[0].mxu0
        %v793 = vpop.f32.mrb[0].mxu0
        %v794 = vadd.f32 %v690, %v793
        %v795 = vpop.f32.mrb[0].mxu0
        %796 = vmatprep.mubr.bf16.mxu0 0
        %797 = vmatmul.mubr.bf16.gmra.mrb[0].mxu0 %v496
        %v798 = vpop.f32.mrb[0].mxu0
        %v799 = vadd.f32 %v690, %v798
        %v800 = vpop.f32.mrb[0].mxu0
        %v801 = vpop.f32.mrb[0].mxu0
        %v802 = vadd.f32 %v690, %v801
        %v803 = vpop.f32.mrb[0].mxu0
        %804 = vmatprep.mubr.bf16.mxu0 0
        %805 = vmatmul.mubr.bf16.gmra.mrb[0].mxu0 %v497
        %v806 = vpop.f32.mrb[0].mxu0
        %v807 = vadd.f32 %v690, %v806
        %v808 = vpop.f32.mrb[0].mxu0
        %v809 = vpop.f32.mrb[0].mxu0
        %v810 = vadd.f32 %v690, %v809
        %v811 = vpop.f32.mrb[0].mxu0
        %812 = vmatprep.mubr.bf16.mxu0 0
        %813 = vmatmul.mubr.bf16.gmra.mrb[0].mxu0 %v498
        %v814 = vpop.f32.mrb[0].mxu0
        %v815 = vadd.f32 %v690, %v814
        %v816 = vpop.f32.mrb[0].mxu0
        %v817 = vpop.f32.mrb[0].mxu0
        %v818 = vadd.f32 %v690, %v817
        %v819 = vpop.f32.mrb[0].mxu0
        %820 = vmatprep.mubr.bf16.mxu0 0
        %821 = vmatmul.mubr.bf16.gmra.mrb[0].mxu0 %v499
        %v822 = vpop.f32.mrb[0].mxu0
        %v823 = vadd.f32 %v690, %v822
        %v824 = vpop.f32.mrb[0].mxu0
        %v825 = vpop.f32.mrb[0].mxu0
        %v826 = vadd.f32 %v690, %v825
        %v827 = vpop.f32.mrb[0].mxu0
        %828 = vmatprep.mubr.bf16.mxu0 0
        %829 = vmatmul.mubr.bf16.gmra.mrb[0].mxu0 %v500
        %v830 = vpop.f32.mrb[0].mxu0
        %v831 = vadd.f32 %v690, %v830
        %v832 = vpop.f32.mrb[0].mxu0
        %v833 = vpop.f32.mrb[0].mxu0
        %v834 = vadd.f32 %v690, %v833
        %v835 = vpop.f32.mrb[0].mxu0
        %836 = vdwg.mxu0
        %v837 = vld [vmem:[#allocation11] sm:$0xf]
        %v838 = vld [vmem:[#allocation11 + $0x4] sm:$0xf]
        %v839 = vld [vmem:[#allocation11 + $0x8] sm:$0xf]
        %v840 = vld [vmem:[#allocation11 + $0xc] sm:$0xf]
        %v841 = vld [vmem:[#allocation11 + $0x10] sm:$0xf]
        %v842 = vld [vmem:[#allocation11 + $0x14] sm:$0xf]
        %v843 = vld [vmem:[#allocation11 + $0x18] sm:$0xf]
        %v844 = vld [vmem:[#allocation11 + $0x1c] sm:$0xf]
        %v845 = vld [vmem:[#allocation11 + $0x20] sm:$0xf]
        %v846 = vld [vmem:[#allocation11 + $0x24] sm:$0xf]
        %v847 = vld [vmem:[#allocation11 + $0x28] sm:$0xf]
        %v848 = vld [vmem:[#allocation11 + $0x2c] sm:$0xf]
        %v849 = vld [vmem:[#allocation11 + $0x30] sm:$0xf]
        %v850 = vld [vmem:[#allocation11 + $0x34] sm:$0xf]
        %v851 = vld [vmem:[#allocation11 + $0x38] sm:$0xf]
        %v852 = vld [vmem:[#allocation11 + $0x3c] sm:$0xf]
        %v853 = vld [vmem:[#allocation13] sm:$0x1]
        %v855 = vlaneseq
        %v856 = vshrl.u32 %v855, 7
        %v857 = vsub.s32 0, %v856
        %v858 = vrot.slane %v853, %v857
        %v876 = vunpack.c.l.b16 %v837
        %v877 = vunpack.c.l.b16 %v838
        %v878 = vunpack.c.l.b16 %v839
        %v879 = vunpack.c.l.b16 %v840
        %v880 = vunpack.c.l.b16 %v841
        %v881 = vunpack.c.l.b16 %v842
        %v882 = vunpack.c.l.b16 %v843
        %v883 = vunpack.c.l.b16 %v844
        %v884 = vunpack.c.l.b16 %v845
        %v885 = vunpack.c.l.b16 %v846
        %v886 = vunpack.c.l.b16 %v847
        %v887 = vunpack.c.l.b16 %v848
        %v888 = vunpack.c.l.b16 %v849
        %v889 = vunpack.c.l.b16 %v850
        %v890 = vunpack.c.l.b16 %v851
        %v891 = vunpack.c.l.b16 %v852
        %v892 = vpack.c.b16 %v877, %v876
        %v893 = vpack.c.b16 %v879, %v878
        %v894 = vpack.c.b16 %v881, %v880
        %v895 = vpack.c.b16 %v883, %v882
        %v896 = vpack.c.b16 %v885, %v884
        %v897 = vpack.c.b16 %v887, %v886
        %v898 = vpack.c.b16 %v889, %v888
        %v899 = vpack.c.b16 %v891, %v890
        %908 = vmatprep.subr.bf16.mxu0 0
        %909 = vmatpush1.bf16.msra.mxu0 %v892
        %910 = vmatprep.subr.bf16.mxu0 0
        %911 = vmatpush1.bf16.msra.mxu0 %v893
        %912 = vmatprep.subr.bf16.mxu0 0
        %913 = vmatpush1.bf16.msra.mxu0 %v894
        %914 = vmatprep.subr.bf16.mxu0 0
        %915 = vmatpush1.bf16.msra.mxu0 %v895
        %916 = vmatprep.subr.bf16.mxu0 0
        %917 = vmatpush1.bf16.msra.mxu0 %v896
        %918 = vmatprep.subr.bf16.mxu0 0
        %919 = vmatpush1.bf16.msra.mxu0 %v897
        %920 = vmatprep.subr.bf16.mxu0 0
        %921 = vmatpush1.bf16.msra.mxu0 %v898
        %922 = vmatprep.subr.bf16.mxu0 0
        %923 = vmatpush1.bf16.msra.mxu0 %v899
        %924 = vmatprep.subr.bf16.mxu0 0
        %925 = vmatpush1.bf16.msra.mxu0 0
        %926 = vmatprep.subr.bf16.mxu0 0
        %927 = vmatpush1.bf16.msra.mxu0 0
        %928 = vmatprep.subr.bf16.mxu0 0
        %929 = vmatpush1.bf16.msra.mxu0 0
        %930 = vmatprep.subr.bf16.mxu0 0
        %931 = vmatpush1.bf16.msra.mxu0 0
        %932 = vmatprep.subr.bf16.mxu0 0
        %933 = vmatpush1.bf16.msra.mxu0 0
        %934 = vmatprep.subr.bf16.mxu0 0
        %935 = vmatpush1.bf16.msra.mxu0 0
        %936 = vmatprep.subr.bf16.mxu0 0
        %937 = vmatpush1.bf16.msra.mxu0 0
        %938 = vmatprep.subr.bf16.mxu0 0
        %939 = vmatpush1.bf16.msra.mxu0 0
        %940 = vmatprep.mubr.bf16.mxu0 0
        %941 = vmatmul.mubr.bf16.gmra.mrb[0].mxu0 %v493
        %v942 = vpop.f32.mrb[0].mxu0
        %v943 = vadd.f32 %v858, %v942
        %v944 = vpop.f32.mrb[0].mxu0
        %v945 = vpop.f32.mrb[0].mxu0
        %v946 = vadd.f32 %v858, %v945
        %v947 = vpop.f32.mrb[0].mxu0
        %948 = vmatprep.mubr.bf16.mxu0 0
        %949 = vmatmul.mubr.bf16.gmra.mrb[0].mxu0 %v494
        %v950 = vpop.f32.mrb[0].mxu0
        %v951 = vadd.f32 %v858, %v950
        %v952 = vpop.f32.mrb[0].mxu0
        %v953 = vpop.f32.mrb[0].mxu0
        %v954 = vadd.f32 %v858, %v953
        %v955 = vpop.f32.mrb[0].mxu0
        %956 = vmatprep.mubr.bf16.mxu0 0
        %957 = vmatmul.mubr.bf16.gmra.mrb[0].mxu0 %v495
        %v958 = vpop.f32.mrb[0].mxu0
        %v959 = vadd.f32 %v858, %v958
        %v960 = vpop.f32.mrb[0].mxu0
        %v961 = vpop.f32.mrb[0].mxu0
        %v962 = vadd.f32 %v858, %v961
        %v963 = vpop.f32.mrb[0].mxu0
        %964 = vmatprep.mubr.bf16.mxu0 0
        %965 = vmatmul.mubr.bf16.gmra.mrb[0].mxu0 %v496
        %v966 = vpop.f32.mrb[0].mxu0
        %v967 = vadd.f32 %v858, %v966
        %v968 = vpop.f32.mrb[0].mxu0
        %v969 = vpop.f32.mrb[0].mxu0
        %v970 = vadd.f32 %v858, %v969
        %v971 = vpop.f32.mrb[0].mxu0
        %972 = vmatprep.mubr.bf16.mxu0 0
        %973 = vmatmul.mubr.bf16.gmra.mrb[0].mxu0 %v497
        %v974 = vpop.f32.mrb[0].mxu0
        %v975 = vadd.f32 %v858, %v974
        %v976 = vpop.f32.mrb[0].mxu0
        %v977 = vpop.f32.mrb[0].mxu0
        %v978 = vadd.f32 %v858, %v977
        %v979 = vpop.f32.mrb[0].mxu0
        %980 = vmatprep.mubr.bf16.mxu0 0
        %981 = vmatmul.mubr.bf16.gmra.mrb[0].mxu0 %v498
        %v982 = vpop.f32.mrb[0].mxu0
        %v983 = vadd.f32 %v858, %v982
        %v984 = vpop.f32.mrb[0].mxu0
        %v985 = vpop.f32.mrb[0].mxu0
        %v986 = vadd.f32 %v858, %v985
        %v987 = vpop.f32.mrb[0].mxu0
        %988 = vmatprep.mubr.bf16.mxu0 0
        %989 = vmatmul.mubr.bf16.gmra.mrb[0].mxu0 %v499
        %v990 = vpop.f32.mrb[0].mxu0
        %v991 = vadd.f32 %v858, %v990
        %v992 = vpop.f32.mrb[0].mxu0
        %v993 = vpop.f32.mrb[0].mxu0
        %v994 = vadd.f32 %v858, %v993
        %v995 = vpop.f32.mrb[0].mxu0
        %996 = vmatprep.mubr.bf16.mxu0 0
        %997 = vmatmul.mubr.bf16.gmra.mrb[0].mxu0 %v500
        %v998 = vpop.f32.mrb[0].mxu0
        %v999 = vadd.f32 %v858, %v998
        %v1000 = vpop.f32.mrb[0].mxu0
        %v1001 = vpop.f32.mrb[0].mxu0
        %v1002 = vadd.f32 %v858, %v1001
        %v1003 = vpop.f32.mrb[0].mxu0
        %1004 = vdwg.mxu0
        %v1005 = vpack.c.bf16 %v610, %v607
        %v1006 = vpack.c.bf16 %v618, %v615
        %v1007 = vpack.c.bf16 %v626, %v623
        %v1008 = vpack.c.bf16 %v634, %v631
        %v1009 = vpack.c.bf16 %v642, %v639
        %v1010 = vpack.c.bf16 %v650, %v647
        %v1011 = vpack.c.bf16 %v658, %v655
        %v1012 = vpack.c.bf16 %v666, %v663
        %v1021 = vunpack.c.l.b16 %v1005
        %v1022 = vunpack.c.h.b16 %v1005
        %v1023 = vunpack.c.l.b16 %v1006
        %v1024 = vunpack.c.h.b16 %v1006
        %v1025 = vunpack.c.l.b16 %v1007
        %v1026 = vunpack.c.h.b16 %v1007
        %v1027 = vunpack.c.l.b16 %v1008
        %v1028 = vunpack.c.h.b16 %v1008
        %v1029 = vunpack.c.l.b16 %v1009
        %v1030 = vunpack.c.h.b16 %v1009
        %v1031 = vunpack.c.l.b16 %v1010
        %v1032 = vunpack.c.h.b16 %v1010
        %v1033 = vunpack.c.l.b16 %v1011
        %v1034 = vunpack.c.h.b16 %v1011
        %v1035 = vunpack.c.l.b16 %v1012
        %v1036 = vunpack.c.h.b16 %v1012
        %v1037 = vpack.c.b16 %v1021, %v1021
        %v1038 = vpack.c.b16 %v1022, %v1022
        %v1039 = vpack.c.b16 %v1023, %v1023
        %v1040 = vpack.c.b16 %v1024, %v1024
        %v1041 = vpack.c.b16 %v1025, %v1025
        %v1042 = vpack.c.b16 %v1026, %v1026
        %v1043 = vpack.c.b16 %v1027, %v1027
        %v1044 = vpack.c.b16 %v1028, %v1028
        %v1045 = vpack.c.b16 %v1029, %v1029
        %v1046 = vpack.c.b16 %v1030, %v1030
        %v1047 = vpack.c.b16 %v1031, %v1031
        %v1048 = vpack.c.b16 %v1032, %v1032
        %v1049 = vpack.c.b16 %v1033, %v1033
        %v1050 = vpack.c.b16 %v1034, %v1034
        %v1051 = vpack.c.b16 %v1035, %v1035
        %v1052 = vpack.c.b16 %v1036, %v1036
        %1069 = vst [vmem:[%s457] sm:$0xf] %v1037
        %1070 = vst [vmem:[%s457 + $0x4] sm:$0xf] %v1038
        %1071 = vst [vmem:[%s457 + $0x8] sm:$0xf] %v1039
        %1072 = vst [vmem:[%s457 + $0xc] sm:$0xf] %v1040
        %1073 = vst [vmem:[%s457 + $0x10] sm:$0xf] %v1041
        %1074 = vst [vmem:[%s457 + $0x14] sm:$0xf] %v1042
        %1075 = vst [vmem:[%s457 + $0x18] sm:$0xf] %v1043
        %1076 = vst [vmem:[%s457 + $0x1c] sm:$0xf] %v1044
        %1077 = vst [vmem:[%s457 + $0x20] sm:$0xf] %v1045
        %1078 = vst [vmem:[%s457 + $0x24] sm:$0xf] %v1046
        %1079 = vst [vmem:[%s457 + $0x28] sm:$0xf] %v1047
        %1080 = vst [vmem:[%s457 + $0x2c] sm:$0xf] %v1048
        %1081 = vst [vmem:[%s457 + $0x30] sm:$0xf] %v1049
        %1082 = vst [vmem:[%s457 + $0x34] sm:$0xf] %v1050
        %1083 = vst [vmem:[%s457 + $0x38] sm:$0xf] %v1051
        %1084 = vst [vmem:[%s457 + $0x3c] sm:$0xf] %v1052
        %v1085 = vpack.c.bf16 %v778, %v775
        %v1086 = vpack.c.bf16 %v786, %v783
        %v1087 = vpack.c.bf16 %v794, %v791
        %v1088 = vpack.c.bf16 %v802, %v799
        %v1089 = vpack.c.bf16 %v810, %v807
        %v1090 = vpack.c.bf16 %v818, %v815
        %v1091 = vpack.c.bf16 %v826, %v823
        %v1092 = vpack.c.bf16 %v834, %v831
        %v1101 = vunpack.c.l.b16 %v1085
        %v1102 = vunpack.c.h.b16 %v1085
        %v1103 = vunpack.c.l.b16 %v1086
        %v1104 = vunpack.c.h.b16 %v1086
        %v1105 = vunpack.c.l.b16 %v1087
        %v1106 = vunpack.c.h.b16 %v1087
        %v1107 = vunpack.c.l.b16 %v1088
        %v1108 = vunpack.c.h.b16 %v1088
        %v1109 = vunpack.c.l.b16 %v1089
        %v1110 = vunpack.c.h.b16 %v1089
        %v1111 = vunpack.c.l.b16 %v1090
        %v1112 = vunpack.c.h.b16 %v1090
        %v1113 = vunpack.c.l.b16 %v1091
        %v1114 = vunpack.c.h.b16 %v1091
        %v1115 = vunpack.c.l.b16 %v1092
        %v1116 = vunpack.c.h.b16 %v1092
        %v1117 = vpack.c.b16 %v1101, %v1101
        %v1118 = vpack.c.b16 %v1102, %v1102
        %v1119 = vpack.c.b16 %v1103, %v1103
        %v1120 = vpack.c.b16 %v1104, %v1104
        %v1121 = vpack.c.b16 %v1105, %v1105
        %v1122 = vpack.c.b16 %v1106, %v1106
        %v1123 = vpack.c.b16 %v1107, %v1107
        %v1124 = vpack.c.b16 %v1108, %v1108
        %v1125 = vpack.c.b16 %v1109, %v1109
        %v1126 = vpack.c.b16 %v1110, %v1110
        %v1127 = vpack.c.b16 %v1111, %v1111
        %v1128 = vpack.c.b16 %v1112, %v1112
        %v1129 = vpack.c.b16 %v1113, %v1113
        %v1130 = vpack.c.b16 %v1114, %v1114
        %v1131 = vpack.c.b16 %v1115, %v1115
        %v1132 = vpack.c.b16 %v1116, %v1116
        %1149 = vst [vmem:[%s464] sm:$0xf] %v1117
        %1150 = vst [vmem:[%s464 + $0x4] sm:$0xf] %v1118
        %1151 = vst [vmem:[%s464 + $0x8] sm:$0xf] %v1119
        %1152 = vst [vmem:[%s464 + $0xc] sm:$0xf] %v1120
        %1153 = vst [vmem:[%s464 + $0x10] sm:$0xf] %v1121
        %1154 = vst [vmem:[%s464 + $0x14] sm:$0xf] %v1122
        %1155 = vst [vmem:[%s464 + $0x18] sm:$0xf] %v1123
        %1156 = vst [vmem:[%s464 + $0x1c] sm:$0xf] %v1124
        %1157 = vst [vmem:[%s464 + $0x20] sm:$0xf] %v1125
        %1158 = vst [vmem:[%s464 + $0x24] sm:$0xf] %v1126
        %1159 = vst [vmem:[%s464 + $0x28] sm:$0xf] %v1127
        %1160 = vst [vmem:[%s464 + $0x2c] sm:$0xf] %v1128
        %1161 = vst [vmem:[%s464 + $0x30] sm:$0xf] %v1129
        %1162 = vst [vmem:[%s464 + $0x34] sm:$0xf] %v1130
        %1163 = vst [vmem:[%s464 + $0x38] sm:$0xf] %v1131
        %1164 = vst [vmem:[%s464 + $0x3c] sm:$0xf] %v1132
        %v1165 = vpack.c.bf16 %v946, %v943
        %v1166 = vpack.c.bf16 %v954, %v951
        %v1167 = vpack.c.bf16 %v962, %v959
        %v1168 = vpack.c.bf16 %v970, %v967
        %v1169 = vpack.c.bf16 %v978, %v975
        %v1170 = vpack.c.bf16 %v986, %v983
        %v1171 = vpack.c.bf16 %v994, %v991
        %v1172 = vpack.c.bf16 %v1002, %v999
        %v1181 = vunpack.c.l.b16 %v1165
        %v1182 = vunpack.c.h.b16 %v1165
        %v1183 = vunpack.c.l.b16 %v1166
        %v1184 = vunpack.c.h.b16 %v1166
        %v1185 = vunpack.c.l.b16 %v1167
        %v1186 = vunpack.c.h.b16 %v1167
        %v1187 = vunpack.c.l.b16 %v1168
        %v1188 = vunpack.c.h.b16 %v1168
        %v1189 = vunpack.c.l.b16 %v1169
        %v1190 = vunpack.c.h.b16 %v1169
        %v1191 = vunpack.c.l.b16 %v1170
        %v1192 = vunpack.c.h.b16 %v1170
        %v1193 = vunpack.c.l.b16 %v1171
        %v1194 = vunpack.c.h.b16 %v1171
        %v1195 = vunpack.c.l.b16 %v1172
        %v1196 = vunpack.c.h.b16 %v1172
        %v1197 = vpack.c.b16 %v1181, %v1181
        %v1198 = vpack.c.b16 %v1182, %v1182
        %v1199 = vpack.c.b16 %v1183, %v1183
        %v1200 = vpack.c.b16 %v1184, %v1184
        %v1201 = vpack.c.b16 %v1185, %v1185
        %v1202 = vpack.c.b16 %v1186, %v1186
        %v1203 = vpack.c.b16 %v1187, %v1187
        %v1204 = vpack.c.b16 %v1188, %v1188
        %v1205 = vpack.c.b16 %v1189, %v1189
        %v1206 = vpack.c.b16 %v1190, %v1190
        %v1207 = vpack.c.b16 %v1191, %v1191
        %v1208 = vpack.c.b16 %v1192, %v1192
        %v1209 = vpack.c.b16 %v1193, %v1193
        %v1210 = vpack.c.b16 %v1194, %v1194
        %v1211 = vpack.c.b16 %v1195, %v1195
        %v1212 = vpack.c.b16 %v1196, %v1196
        %1229 = vst [vmem:[%s471] sm:$0xf] %v1197
        %1230 = vst [vmem:[%s471 + $0x4] sm:$0xf] %v1198
        %1231 = vst [vmem:[%s471 + $0x8] sm:$0xf] %v1199
        %1232 = vst [vmem:[%s471 + $0xc] sm:$0xf] %v1200
        %1233 = vst [vmem:[%s471 + $0x10] sm:$0xf] %v1201
        %1234 = vst [vmem:[%s471 + $0x14] sm:$0xf] %v1202
        %1235 = vst [vmem:[%s471 + $0x18] sm:$0xf] %v1203
        %1236 = vst [vmem:[%s471 + $0x1c] sm:$0xf] %v1204
        %1237 = vst [vmem:[%s471 + $0x20] sm:$0xf] %v1205
        %1238 = vst [vmem:[%s471 + $0x24] sm:$0xf] %v1206
        %1239 = vst [vmem:[%s471 + $0x28] sm:$0xf] %v1207
        %1240 = vst [vmem:[%s471 + $0x2c] sm:$0xf] %v1208
        %1241 = vst [vmem:[%s471 + $0x30] sm:$0xf] %v1209
        %1242 = vst [vmem:[%s471 + $0x34] sm:$0xf] %v1210
        %1243 = vst [vmem:[%s471 + $0x38] sm:$0xf] %v1211
        %1244 = vst [vmem:[%s471 + $0x3c] sm:$0xf] %v1212
        %s1245 = sand.u32 %s209, 1
        %s1246 = scalar_lea.sflag [#allocation4], %s1245
        %s1247 = sand.u32 %s209, 1
        %s1248 = smul.addr %s1247, 64
        %s1249 = scalar_lea.vmem [#allocation14], %s1248
        %s1250 = sand.u32 %s33, 1
        %s1251 = scalar_lea.sflag [#allocation16], %s1250
        %s1252 = sand.u32 %s237, 1
        %s1253 = smul.addr %s1252, 64
        %s1254 = scalar_lea.vmem [#allocation15], %s1253
        %s1255 = sand.u32 %s33, 1
        %s1256 = scalar_lea.sflag [#allocation16], %s1255
        %s1257 = sand.u32 %s265, 1
        %s1258 = smul.addr %s1257, 64
        %s1259 = scalar_lea.vmem [#allocation17], %s1258
        // Predicated region
        $region77: #{pam_forward.2} parent=47 // pred_check
          %p1260 = pneg %p219
        $region78: #{pam_forward.2} parent=47 // pred_check_branch
          %1262 = sbr.rel (%p1260) target = $region80
        $region79: #{pam_forward.2} parent=47 // pred_region
          %s1263 = smul.u32 16, %s38
          %s1265 = ssub.s32 1024, 1024
          %1266 = vsyncadd %s1246, %s1265
          %s1267 = smul.addr %s37, 32
          %s1268 = sadd.s32 %s1263, %s1267
          %s1269 = smul.addr %s1268, 64
          %s1270 = scalar_lea.hbm %s7, %s1269
          %s1271 = sshll.u32 %s1249, 4
          %s1272 = int_to_ptr.vmem [resolvable:$true] %s1271
          %1277 = dma.vmem_to_hbm [thread:$0]  %s1272, 1024, %s1270, %s1246, 64, 64, 4
        $region80: #{pam_forward.2} parent=47 // pred_fallthru
          _
        // Predicated region
        $region81: #{pam_forward.2} parent=47 // pred_check
          %p1278 = pneg %p247
        $region82: #{pam_forward.2} parent=47 // pred_check_branch
          %1280 = sbr.rel (%p1278) target = $region84
        $region83: #{pam_forward.2} parent=47 // pred_region
          %s1281 = smul.u32 16, %s38
          %s1283 = ssub.s32 1024, 1024
          %1284 = vsyncadd %s1251, %s1283
          %s1285 = smul.addr %s37, 32
          %s1286 = sadd.s32 %s1281, %s1285
          %s1287 = smul.addr %s1286, 64
          %s1288 = scalar_lea.hbm %s8, %s1287
          %s1289 = sshll.u32 %s1254, 4
          %s1290 = int_to_ptr.vmem [resolvable:$true] %s1289
          %1295 = dma.vmem_to_hbm [thread:$0]  %s1290, 1024, %s1288, %s1251, 64, 64, 4
        $region84: #{pam_forward.2} parent=47 // pred_fallthru
          _
        // Predicated region
        $region85: #{pam_forward.2} parent=47 // pred_check
          %p1296 = pneg %p275
        $region86: #{pam_forward.2} parent=47 // pred_check_branch
          %1298 = sbr.rel (%p1296) target = $region88
        $region87: #{pam_forward.2} parent=47 // pred_region
          %s1299 = smul.u32 16, %s38
          %s1301 = ssub.s32 1024, 1024
          %1302 = vsyncadd %s1256, %s1301
          %s1303 = smul.addr %s37, 32
          %s1304 = sadd.s32 %s1299, %s1303
          %s1305 = smul.addr %s1304, 64
          %s1306 = scalar_lea.hbm %s9, %s1305
          %s1307 = sshll.u32 %s1259, 4
          %s1308 = int_to_ptr.vmem [resolvable:$true] %s1307
          %1313 = dma.vmem_to_hbm [thread:$0]  %s1308, 1024, %s1306, %s1256, 64, 64, 4
        $region88: #{pam_forward.2} parent=47 // pred_fallthru
          _
      $region48: #{pam_forward.2} parent=5 // pred_fallthru
        _
      %p1314 = scmp.le.s32.totalorder 2, %s28
      // Predicated region
      $region89: #{pam_forward.2} parent=5 // pred_check
        %p1315 = pneg %p1314
      $region90: #{pam_forward.2} parent=5 // pred_check_branch
        %1317 = sbr.rel (%p1315) target = $region92
      $region91: #{pam_forward.2} parent=5 // pred_region
        %s1318 = ssub.s32 %s28, 2
        // Predicated region
        $region93: #{pam_forward.2} parent=91 // pred_check
          %p1319 = pneg %p225
        $region94: #{pam_forward.2} parent=91 // pred_check_branch
          %1321 = sbr.rel (%p1319) target = $region96
        $region95: #{pam_forward.2} parent=91 // pred_region
          %s1322 = sand.u32 %s210, 1
          %s1323 = scalar_lea.sflag [#allocation4], %s1322
          %s1324 = sand.u32 %s210, 1
          %s1325 = smul.addr %s1324, 64
          %s1326 = scalar_lea.vmem [#allocation14], %s1325
          %1327 = dma.done %s1323, 1024
        $region96: #{pam_forward.2} parent=91 // pred_fallthru
          _
        // Predicated region
        $region97: #{pam_forward.2} parent=91 // pred_check
          %p1328 = pneg %p253
        $region98: #{pam_forward.2} parent=91 // pred_check_branch
          %1330 = sbr.rel (%p1328) target = $region100
        $region99: #{pam_forward.2} parent=91 // pred_region
          %s1331 = sand.u32 %s34, 1
          %s1332 = scalar_lea.sflag [#allocation16], %s1331
          %s1333 = sand.u32 %s238, 1
          %s1334 = smul.addr %s1333, 64
          %s1335 = scalar_lea.vmem [#allocation15], %s1334
          %1336 = dma.done %s1332, 1024
        $region100: #{pam_forward.2} parent=91 // pred_fallthru
          _
        // Predicated region
        $region101: #{pam_forward.2} parent=91 // pred_check
          %p1337 = pneg %p281
        $region102: #{pam_forward.2} parent=91 // pred_check_branch
          %1339 = sbr.rel (%p1337) target = $region104
        $region103: #{pam_forward.2} parent=91 // pred_region
          %s1340 = sand.u32 %s34, 1
          %s1341 = scalar_lea.sflag [#allocation16], %s1340
          %s1342 = sand.u32 %s266, 1
          %s1343 = smul.addr %s1342, 64
          %s1344 = scalar_lea.vmem [#allocation17], %s1343
          %1345 = dma.done %s1341, 1024
        $region104: #{pam_forward.2} parent=91 // pred_fallthru
          _
      $region92: #{pam_forward.2} parent=5 // pred_fallthru
        _
    $region6: #{pam_forward.2} parent=1 // loop_footer
      %s32 = sadd.s32 1, %s28
    $region7: #{pam_forward.2} parent=1 // loop_footer_branch
      %27 = sbr.rel target = $region3
    $region8: #{pam_forward.2} parent=1 // loop_exit
      _
    %1346 = vsyncpa [#allocation3], 1
    %s1347 = scalar_lea.sflag [#allocation3], 1
    %1348 = vsyncpa %s1347, 1
    %1349 = vsyncpa [#allocation6], 1
    %1350 = vsyncpa [#allocation9], 1
    %1351 = vsyncpa [#allocation12], 1
    %1352 = vsyncpa [#allocation4], 1
    %s1353 = scalar_lea.sflag [#allocation4], 1
    %1354 = vsyncpa %s1353, 1
    %1355 = vsyncpa [#allocation16], 1
    %s1356 = scalar_lea.sflag [#allocation16], 1
    %1357 = vsyncpa %s1356, 1

// kernel: pam_forward.3
$region0: #{pam_forward.3}
  #allocation0 [shape = 'u32[]', space=smem, size = 0x4, offset = 0x4, fixed_abs, tag = 'smem constant byte address 0x4 - core index']
  #allocation1 [shape = 'u32[144,128]{1,0:T(1,128)}', space=vmem, size = 0x12000, scoped, tag = 'internal scratch']
  #allocation2 [shape = 'f32[128,1]{1,0:T(8,128)}', space=vmem, size = 0x10000, scoped, tag = 'scratch operand']
  #allocation3 [shape = 'f32[128,1]{1,0:T(8,128)}', space=vmem, size = 0x10000, scoped, tag = 'scratch operand']
  #allocation4 [shape = 'f32[128,128]{1,0:T(8,128)}', space=vmem, size = 0x10000, scoped, tag = 'scratch operand']
  #allocation5 [shape = 'f32[1]{0:T(128)S(6)}', space=smem, size = 0x200, scoped, tag = 'scoped memory for pam_forward.3']
  %s0 = inlined_call_operand.<no memory space> [shape: f32[1], index: 0, kind: input, shape index: {}]
  %s1 = inlined_call_operand.hbm [shape: bf16[2,256,128], index: 1, kind: input, shape index: {}]
  %s2 = inlined_call_operand.hbm [shape: bf16[2,256,128], index: 2, kind: input, shape index: {}]
  %s3 = inlined_call_operand.hbm [shape: bf16[2,256,128], index: 3, kind: input, shape index: {}]
  %s4 = inlined_call_operand.hbm [shape: f32[2,256,128], index: 4, kind: input, shape index: {}]
  %s5 = inlined_call_operand.hbm [shape: f32[2,256,128], index: 5, kind: output, shape index: {}]
  %s6 = sld [smem:[#allocation0]]
  $region77: #{pam_forward.3} parent=0
    _
  %s8 = ssub.s32 1, %s6
  %s9 = scalar_select 0, %s8, %s6
  %10 = sst [smem:[#allocation5]] %s0
  $region1: #{pam_forward.3} parent=0
    #allocation6 [shape = 'u8[65536]{0}', space=vmem, size = 0x10000, scoped, tag = 'input window, operand 1']
    #allocation7 [shape = 's32[2]{0}', space=sflag, size = 0x8, scoped, tag = 'scoped memory for pam_forward.3']
    #allocation8 [shape = 's32[2]{0}', space=sflag, size = 0x8, scoped, tag = 'scoped memory for pam_forward.3']
    #allocation9 [shape = 'u8[65536]{0}', space=vmem, size = 0x10000, scoped, tag = 'input window, operand 2']
    #allocation10 [shape = 's32[2]{0}', space=sflag, size = 0x8, scoped, tag = 'scoped memory for pam_forward.3']
    #allocation11 [shape = 'u8[65536]{0}', space=vmem, size = 0x10000, scoped, tag = 'input window, operand 3']
    #allocation12 [shape = 'u8[131072]{0}', space=vmem, size = 0x20000, scoped, tag = 'input window, operand 4']
    #allocation13 [shape = 's32[2]{0}', space=sflag, size = 0x8, scoped, tag = 'scoped memory for pam_forward.3']
    #allocation14 [shape = 'u8[131072]{0}', space=vmem, size = 0x20000, scoped, tag = 'output window, operand 0']
    %11 = vsyncpa [#allocation7], 0
    %s12 = scalar_lea.sflag [#allocation7], 1
    %13 = vsyncpa %s12, 0
    %14 = vsyncpa [#allocation10], 0
    %s15 = scalar_lea.sflag [#allocation10], 1
    %16 = vsyncpa %s15, 0
    %17 = vsyncpa [#allocation13], 0
    %s18 = scalar_lea.sflag [#allocation13], 1
    %19 = vsyncpa %s18, 0
    %20 = vsyncpa [#allocation8], 0
    %s21 = scalar_lea.sflag [#allocation8], 1
    %22 = vsyncpa %s21, 0
    loop: start=0, step=1, limit=10
    $region2: #{pam_forward.3} parent=1 // loop_pre_header
      _
    $region3: #{pam_forward.3} parent=1 // loop_header
      %s24 = sphi 0, %s28
      %p25 = scmp.ge.s32.totalorder %s24, 10
      %s31 = sphi 0, %s50
      %s32 = sphi 0, %s46
      %s33 = sphi 0, %s42
      %s34 = sphi 0, %s31
      %s35 = sphi 0, %s32
      %s36 = sphi 0, %s33
      %s37 = sphi 0, %s34
      %s38 = sphi 0, %s35
      %s39 = sphi 0, %s36
      %s51 = sphi 0, %s51
      %s53 = sphi 0, %s51
      %s54 = sphi 0, %s53
      %s68 = sphi 0, %s54
      %s76 = sphi 0, %s78
      %s79 = sphi 0, %s76
      %s80 = sphi 0, %s79
      %s96 = sphi 0, %s80
      %s104 = sphi 0, %s106
      %s107 = sphi 0, %s104
      %s108 = sphi 0, %s107
      %s124 = sphi 0, %s108
      %s132 = sphi 0, %s134
      %s135 = sphi 0, %s132
      %s136 = sphi 0, %s135
      %s152 = sphi 0, %s136
      %s160 = sphi 0, %s162
      %s163 = sphi 0, %s160
      %s164 = sphi 0, %s163
      %s180 = sphi 0, %s164
      %s188 = sphi 0, %s190
      %s191 = sphi 0, %s188
      %s192 = sphi 0, %s191
      %s208 = sphi 0, %s192
    $region4: #{pam_forward.3} parent=1 // loop_header_branch
      %27 = sbr.rel (%p25) target = $region8
    $region5: #{pam_forward.3} parent=1 // loop_body
      %s29 = ssub.s32 %s24, 1
      %s30 = ssub.s32 %s24, 2
      %s40 = sadd.s32 1, %s33
      %p41 = scmp.ge.s32.totalorder %s40, 2
      %s42 = scalar_select %p41, 0, %s40
      %s43 = sadd.s32 1, %s32
      %s44 = scalar_select %p41, %s43, %s32
      %p45 = scmp.ge.s32.totalorder %s44, 2
      %s46 = scalar_select %p45, 0, %s44
      %s47 = sadd.s32 1, %s31
      %s48 = scalar_select %p45, %s47, %s31
      %p49 = scmp.ge.s32.totalorder %s48, 2
      %s50 = scalar_select %p49, 0, %s48
      %s52 = sadd.s32 %s51, 1
      %p55 = scmp.eq.s32.totalorder %s24, 7
      %p56 = scmp.ne.s32.totalorder %s51, %s53
      %p57 = scmp.eq.s32.totalorder %s24, 0
      %p58 = por %p56, %p57
      %p59 = scmp.ne.s32.totalorder %s51, %s53
      %p60 = scmp.eq.s32.totalorder %s29, 7
      %p61 = por %p59, %p60
      %p62 = scmp.ne.s32.totalorder %s53, %s54
      %p63 = scmp.eq.s32.totalorder %s29, 0
      %p64 = por %p62, %p63
      %p65 = scmp.ne.s32.totalorder %s53, %s54
      %p66 = scmp.eq.s32.totalorder %s30, 7
      %p67 = por %p65, %p66
      %p69 = scmp.ne.s32.totalorder %s54, %s68
      %p70 = scmp.eq.s32.totalorder %s30, 0
      %p71 = por %p69, %p70
      %s72 = ssub.s32 %s31, %s50
      %s73 = ssub.s32 %s32, %s46
      %s74 = sor.u32 %s72, %s73
      %p75 = scmp.eq.s32.totalorder %s74, 0
      %s77 = sadd.s32 %s76, 1
      %s78 = scalar_select %p75, %s76, %s77
      %p81 = pneg %p75
      %p82 = scmp.eq.s32.totalorder %s24, 7
      %p83 = por %p81, %p82
      %p84 = scmp.ne.s32.totalorder %s76, %s79
      %p85 = scmp.eq.s32.totalorder %s24, 0
      %p86 = por %p84, %p85
      %p87 = scmp.ne.s32.totalorder %s76, %s79
      %p88 = scmp.eq.s32.totalorder %s29, 7
      %p89 = por %p87, %p88
      %p90 = scmp.ne.s32.totalorder %s79, %s80
      %p91 = scmp.eq.s32.totalorder %s29, 0
      %p92 = por %p90, %p91
      %p93 = scmp.ne.s32.totalorder %s79, %s80
      %p94 = scmp.eq.s32.totalorder %s30, 7
      %p95 = por %p93, %p94
      %p97 = scmp.ne.s32.totalorder %s80, %s96
      %p98 = scmp.eq.s32.totalorder %s30, 0
      %p99 = por %p97, %p98
      %s100 = ssub.s32 %s31, %s50
      %s101 = ssub.s32 %s33, %s42
      %s102 = sor.u32 %s100, %s101
      %p103 = scmp.eq.s32.totalorder %s102, 0
      %s105 = sadd.s32 %s104, 1
      %s106 = scalar_select %p103, %s104, %s105
      %p109 = pneg %p103
      %p110 = scmp.eq.s32.totalorder %s24, 7
      %p111 = por %p109, %p110
      %p112 = scmp.ne.s32.totalorder %s104, %s107
      %p113 = scmp.eq.s32.totalorder %s24, 0
      %p114 = por %p112, %p113
      %p115 = scmp.ne.s32.totalorder %s104, %s107
      %p116 = scmp.eq.s32.totalorder %s29, 7
      %p117 = por %p115, %p116
      %p118 = scmp.ne.s32.totalorder %s107, %s108
      %p119 = scmp.eq.s32.totalorder %s29, 0
      %p120 = por %p118, %p119
      %p121 = scmp.ne.s32.totalorder %s107, %s108
      %p122 = scmp.eq.s32.totalorder %s30, 7
      %p123 = por %p121, %p122
      %p125 = scmp.ne.s32.totalorder %s108, %s124
      %p126 = scmp.eq.s32.totalorder %s30, 0
      %p127 = por %p125, %p126
      %s128 = ssub.s32 %s31, %s50
      %s129 = ssub.s32 %s33, %s42
      %s130 = sor.u32 %s128, %s129
      %p131 = scmp.eq.s32.totalorder %s130, 0
      %s133 = sadd.s32 %s132, 1
      %s134 = scalar_select %p131, %s132, %s133
      %p137 = pneg %p131
      %p138 = scmp.eq.s32.totalorder %s24, 7
      %p139 = por %p137, %p138
      %p140 = scmp.ne.s32.totalorder %s132, %s135
      %p141 = scmp.eq.s32.totalorder %s24, 0
      %p142 = por %p140, %p141
      %p143 = scmp.ne.s32.totalorder %s132, %s135
      %p144 = scmp.eq.s32.totalorder %s29, 7
      %p145 = por %p143, %p144
      %p146 = scmp.ne.s32.totalorder %s135, %s136
      %p147 = scmp.eq.s32.totalorder %s29, 0
      %p148 = por %p146, %p147
      %p149 = scmp.ne.s32.totalorder %s135, %s136
      %p150 = scmp.eq.s32.totalorder %s30, 7
      %p151 = por %p149, %p150
      %p153 = scmp.ne.s32.totalorder %s136, %s152
      %p154 = scmp.eq.s32.totalorder %s30, 0
      %p155 = por %p153, %p154
      %s156 = ssub.s32 %s31, %s50
      %s157 = ssub.s32 %s32, %s46
      %s158 = sor.u32 %s156, %s157
      %p159 = scmp.eq.s32.totalorder %s158, 0
      %s161 = sadd.s32 %s160, 1
      %s162 = scalar_select %p159, %s160, %s161
      %p165 = pneg %p159
      %p166 = scmp.eq.s32.totalorder %s24, 7
      %p167 = por %p165, %p166
      %p168 = scmp.ne.s32.totalorder %s160, %s163
      %p169 = scmp.eq.s32.totalorder %s24, 0
      %p170 = por %p168, %p169
      %p171 = scmp.ne.s32.totalorder %s160, %s163
      %p172 = scmp.eq.s32.totalorder %s29, 7
      %p173 = por %p171, %p172
      %p174 = scmp.ne.s32.totalorder %s163, %s164
      %p175 = scmp.eq.s32.totalorder %s29, 0
      %p176 = por %p174, %p175
      %p177 = scmp.ne.s32.totalorder %s163, %s164
      %p178 = scmp.eq.s32.totalorder %s30, 7
      %p179 = por %p177, %p178
      %p181 = scmp.ne.s32.totalorder %s164, %s180
      %p182 = scmp.eq.s32.totalorder %s30, 0
      %p183 = por %p181, %p182
      %s184 = ssub.s32 %s31, %s50
      %s185 = ssub.s32 %s32, %s46
      %s186 = sor.u32 %s184, %s185
      %p187 = scmp.eq.s32.totalorder %s186, 0
      %s189 = sadd.s32 %s188, 1
      %s190 = scalar_select %p187, %s188, %s189
      %p193 = pneg %p187
      %p194 = scmp.eq.s32.totalorder %s24, 7
      %p195 = por %p193, %p194
      %p196 = scmp.ne.s32.totalorder %s188, %s191
      %p197 = scmp.eq.s32.totalorder %s24, 0
      %p198 = por %p196, %p197
      %p199 = scmp.ne.s32.totalorder %s188, %s191
      %p200 = scmp.eq.s32.totalorder %s29, 7
      %p201 = por %p199, %p200
      %p202 = scmp.ne.s32.totalorder %s191, %s192
      %p203 = scmp.eq.s32.totalorder %s29, 0
      %p204 = por %p202, %p203
      %p205 = scmp.ne.s32.totalorder %s191, %s192
      %p206 = scmp.eq.s32.totalorder %s30, 7
      %p207 = por %p205, %p206
      %p209 = scmp.ne.s32.totalorder %s192, %s208
      %p210 = scmp.eq.s32.totalorder %s30, 0
      %p211 = por %p209, %p210
      %p212 = scmp.le.s32.totalorder 1, %s24
      %p213 = scmp.lt.s32.totalorder %s24, 9
      %p214 = pnand %p212, %p213
      %p215 = pneg %p214
      // Predicated region
      $region9: #{pam_forward.3} parent=5 // pred_check
        _
      $region10: #{pam_forward.3} parent=5 // pred_check_branch
        %217 = sbr.rel (%p214) target = $region12
      $region11: #{pam_forward.3} parent=5 // pred_region
        %s218 = ssub.s32 %s24, 1
        // Predicated region
        $region13: #{pam_forward.3} parent=11 // pred_check
          %p219 = pneg %p64
        $region14: #{pam_forward.3} parent=11 // pred_check_branch
          %221 = sbr.rel (%p219) target = $region16
        $region15: #{pam_forward.3} parent=11 // pred_region
          _
        $region16: #{pam_forward.3} parent=11 // pred_fallthru
          _
      $region12: #{pam_forward.3} parent=5 // pred_fallthru
        _
      %p222 = scmp.lt.s32.totalorder %s24, 8
      // Predicated region
      $region17: #{pam_forward.3} parent=5 // pred_check
        %p223 = pneg %p222
      $region18: #{pam_forward.3} parent=5 // pred_check_branch
        %225 = sbr.rel (%p223) target = $region20
      $region19: #{pam_forward.3} parent=5 // pred_region
        // Predicated region
        $region21: #{pam_forward.3} parent=19 // pred_check
          %p226 = pneg %p86
        $region22: #{pam_forward.3} parent=19 // pred_check_branch
          %228 = sbr.rel (%p226) target = $region24
        $region23: #{pam_forward.3} parent=19 // pred_region
          %s229 = sand.u32 %s76, 1
          %s230 = scalar_lea.sflag [#allocation7], %s229
          %s231 = sand.u32 %s76, 1
          %s232 = smul.addr %s231, 64
          %s233 = scalar_lea.vmem [#allocation6], %s232
          %s234 = smul.u32 16, %s32
          %s236 = ssub.s32 1024, 1024
          %237 = vsyncadd %s230, %s236
          %s238 = smul.addr %s31, 32
          %s239 = sadd.s32 %s234, %s238
          %s240 = smul.addr %s239, 64
          %s241 = scalar_lea.hbm %s1, %s240
          %s242 = sshll.u32 %s233, 4
          %s243 = int_to_ptr.vmem [resolvable:$true] %s242
          %248 = dma.hbm_to_vmem [thread:$0]  %s241, 1024, %s243, %s230, 64, 64, 4
        $region24: #{pam_forward.3} parent=19 // pred_fallthru
          _
        // Predicated region
        $region25: #{pam_forward.3} parent=19 // pred_check
          %p249 = pneg %p114
        $region26: #{pam_forward.3} parent=19 // pred_check_branch
          %251 = sbr.rel (%p249) target = $region28
        $region27: #{pam_forward.3} parent=19 // pred_region
          %s252 = sand.u32 %s24, 1
          %s253 = scalar_lea.sflag [#allocation10], %s252
          %s254 = sand.u32 %s104, 1
          %s255 = smul.addr %s254, 64
          %s256 = scalar_lea.vmem [#allocation9], %s255
          %s257 = smul.u32 16, %s33
          %s259 = ssub.s32 1024, 1024
          %260 = vsyncadd %s253, %s259
          %s261 = smul.addr %s31, 32
          %s262 = sadd.s32 %s257, %s261
          %s263 = smul.addr %s262, 64
          %s264 = scalar_lea.hbm %s2, %s263
          %s265 = sshll.u32 %s256, 4
          %s266 = int_to_ptr.vmem [resolvable:$true] %s265
          %271 = dma.hbm_to_vmem [thread:$0]  %s264, 1024, %s266, %s253, 64, 64, 4
        $region28: #{pam_forward.3} parent=19 // pred_fallthru
          _
        // Predicated region
        $region29: #{pam_forward.3} parent=19 // pred_check
          %p272 = pneg %p142
        $region30: #{pam_forward.3} parent=19 // pred_check_branch
          %274 = sbr.rel (%p272) target = $region32
        $region31: #{pam_forward.3} parent=19 // pred_region
          %s275 = sand.u32 %s24, 1
          %s276 = scalar_lea.sflag [#allocation10], %s275
          %s277 = sand.u32 %s132, 1
          %s278 = smul.addr %s277, 64
          %s279 = scalar_lea.vmem [#allocation11], %s278
          %s280 = smul.u32 16, %s33
          %s282 = ssub.s32 1024, 1024
          %283 = vsyncadd %s276, %s282
          %s284 = smul.addr %s31, 32
          %s285 = sadd.s32 %s280, %s284
          %s286 = smul.addr %s285, 64
          %s287 = scalar_lea.hbm %s3, %s286
          %s288 = sshll.u32 %s279, 4
          %s289 = int_to_ptr.vmem [resolvable:$true] %s288
          %294 = dma.hbm_to_vmem [thread:$0]  %s287, 1024, %s289, %s276, 64, 64, 4
        $region32: #{pam_forward.3} parent=19 // pred_fallthru
          _
        // Predicated region
        $region33: #{pam_forward.3} parent=19 // pred_check
          %p295 = pneg %p170
        $region34: #{pam_forward.3} parent=19 // pred_check_branch
          %297 = sbr.rel (%p295) target = $region36
        $region35: #{pam_forward.3} parent=19 // pred_region
          %s298 = sand.u32 %s160, 1
          %s299 = scalar_lea.sflag [#allocation13], %s298
          %s300 = sand.u32 %s160, 1
          %s301 = smul.addr %s300, 128
          %s302 = scalar_lea.vmem [#allocation12], %s301
          %s303 = smul.u32 16, %s32
          %s305 = ssub.s32 2048, 2048
          %306 = vsyncadd %s299, %s305
          %s307 = smul.addr %s31, 32
          %s308 = sadd.s32 %s303, %s307
          %s309 = smul.addr %s308, 128
          %s310 = scalar_lea.hbm %s4, %s309
          %s311 = sshll.u32 %s302, 4
          %s312 = int_to_ptr.vmem [resolvable:$true] %s311
          %317 = dma.hbm_to_vmem [thread:$0]  %s310, 2048, %s312, %s299, 128, 128, 8
        $region36: #{pam_forward.3} parent=19 // pred_fallthru
          _
      $region20: #{pam_forward.3} parent=5 // pred_fallthru
        _
      %p318 = scmp.le.s32.totalorder 1, %s24
      %p319 = scmp.lt.s32.totalorder %s24, 9
      %p320 = pnand %p318, %p319
      %p321 = pneg %p320
      // Predicated region
      $region37: #{pam_forward.3} parent=5 // pred_check
        _
      $region38: #{pam_forward.3} parent=5 // pred_check_branch
        %323 = sbr.rel (%p320) target = $region40
      $region39: #{pam_forward.3} parent=5 // pred_region
        %s324 = ssub.s32 %s24, 1
        %s325 = sand.u32 %s79, 1
        %s326 = scalar_lea.sflag [#allocation7], %s325
        %s327 = sand.u32 %s79, 1
        %s328 = smul.addr %s327, 64
        %s329 = scalar_lea.vmem [#allocation6], %s328
        // Predicated region
        $region41: #{pam_forward.3} parent=39 // pred_check
          %p330 = pneg %p92
        $region42: #{pam_forward.3} parent=39 // pred_check_branch
          %332 = sbr.rel (%p330) target = $region44
        $region43: #{pam_forward.3} parent=39 // pred_region
          %333 = dma.done %s326, 1024
        $region44: #{pam_forward.3} parent=39 // pred_fallthru
          _
        %s334 = sand.u32 %s29, 1
        %s335 = scalar_lea.sflag [#allocation10], %s334
        %s336 = sand.u32 %s107, 1
        %s337 = smul.addr %s336, 64
        %s338 = scalar_lea.vmem [#allocation9], %s337
        // Predicated region
        $region45: #{pam_forward.3} parent=39 // pred_check
          %p339 = pneg %p120
        $region46: #{pam_forward.3} parent=39 // pred_check_branch
          %341 = sbr.rel (%p339) target = $region48
        $region47: #{pam_forward.3} parent=39 // pred_region
          %342 = dma.done %s335, 1024
        $region48: #{pam_forward.3} parent=39 // pred_fallthru
          _
        %s343 = sand.u32 %s29, 1
        %s344 = scalar_lea.sflag [#allocation10], %s343
        %s345 = sand.u32 %s135, 1
        %s346 = smul.addr %s345, 64
        %s347 = scalar_lea.vmem [#allocation11], %s346
        // Predicated region
        $region49: #{pam_forward.3} parent=39 // pred_check
          %p348 = pneg %p148
        $region50: #{pam_forward.3} parent=39 // pred_check_branch
          %350 = sbr.rel (%p348) target = $region52
        $region51: #{pam_forward.3} parent=39 // pred_region
          %351 = dma.done %s344, 1024
        $region52: #{pam_forward.3} parent=39 // pred_fallthru
          _
        %s352 = sand.u32 %s163, 1
        %s353 = scalar_lea.sflag [#allocation13], %s352
        %s354 = sand.u32 %s163, 1
        %s355 = smul.addr %s354, 128
        %s356 = scalar_lea.vmem [#allocation12], %s355
        // Predicated region
        $region53: #{pam_forward.3} parent=39 // pred_check
          %p357 = pneg %p176
        $region54: #{pam_forward.3} parent=39 // pred_check_branch
          %359 = sbr.rel (%p357) target = $region56
        $region55: #{pam_forward.3} parent=39 // pred_region
          %360 = dma.done %s353, 2048
        $region56: #{pam_forward.3} parent=39 // pred_fallthru
          _
        %p361 = pneg %p64
        %p362 = pneg %p61
        %s363 = sand.u32 %s79, 1
        %s364 = scalar_lea.sflag [#allocation7], %s363
        %s365 = sand.u32 %s79, 1
        %s366 = smul.addr %s365, 64
        %s367 = scalar_lea.vmem [#allocation6], %s366
        %p368 = pneg %p92
        %p369 = pneg %p89
        %s370 = sand.u32 %s29, 1
        %s371 = scalar_lea.sflag [#allocation10], %s370
        %s372 = sand.u32 %s107, 1
        %s373 = smul.addr %s372, 64
        %s374 = scalar_lea.vmem [#allocation9], %s373
        %p375 = pneg %p120
        %p376 = pneg %p117
        %s377 = sand.u32 %s29, 1
        %s378 = scalar_lea.sflag [#allocation10], %s377
        %s379 = sand.u32 %s135, 1
        %s380 = smul.addr %s379, 64
        %s381 = scalar_lea.vmem [#allocation11], %s380
        %p382 = pneg %p148
        %p383 = pneg %p145
        %s384 = sand.u32 %s163, 1
        %s385 = scalar_lea.sflag [#allocation13], %s384
        %s386 = sand.u32 %s163, 1
        %s387 = smul.addr %s386, 128
        %s388 = scalar_lea.vmem [#allocation12], %s387
        %p389 = pneg %p176
        %p390 = pneg %p173
        %p391 = pneg %p204
        %p392 = pneg %p201
        %s393 = sand.u32 %s191, 1
        %s394 = scalar_lea.sflag [#allocation8], %s393
        %s395 = sand.u32 %s191, 1
        %s396 = smul.addr %s395, 128
        %s397 = scalar_lea.vmem [#allocation14], %s396
        %s398 = smul.u32 16, %s35
        %s399 = smul.u32 16, %s36
        %s400 = smul.u32 16, %s36
        %s401 = smul.u32 16, %s35
        %s402 = smul.u32 16, %s35
        %p404 = scmp.eq.s32.totalorder %s36, 0
        // Predicated region
        $region57: #{pam_forward.3} parent=39 // pred_check
          %p405 = pneg %p404
        $region58: #{pam_forward.3} parent=39 // pred_check_branch
          %407 = sbr.rel (%p405) target = $region60
        $region59: #{pam_forward.3} parent=39 // pred_region
          %vm408 = vcmask 7168
          %409 = vst.msk [vmem:[#allocation2] sm:$0xff] %vm408, -inf
          %410 = vst.msk [vmem:[#allocation2 + $0x8] sm:$0xff] %vm408, -inf
          %411 = vst.msk [vmem:[#allocation2 + $0x10] sm:$0xff] %vm408, -inf
          %412 = vst.msk [vmem:[#allocation2 + $0x18] sm:$0xff] %vm408, -inf
          %413 = vst.msk [vmem:[#allocation2 + $0x20] sm:$0xff] %vm408, -inf
          %414 = vst.msk [vmem:[#allocation2 + $0x28] sm:$0xff] %vm408, -inf
          %415 = vst.msk [vmem:[#allocation2 + $0x30] sm:$0xff] %vm408, -inf
          %416 = vst.msk [vmem:[#allocation2 + $0x38] sm:$0xff] %vm408, -inf
          %417 = vst.msk [vmem:[#allocation2 + $0x40] sm:$0xff] %vm408, -inf
          %418 = vst.msk [vmem:[#allocation2 + $0x48] sm:$0xff] %vm408, -inf
          %419 = vst.msk [vmem:[#allocation2 + $0x50] sm:$0xff] %vm408, -inf
          %420 = vst.msk [vmem:[#allocation2 + $0x58] sm:$0xff] %vm408, -inf
          %421 = vst.msk [vmem:[#allocation2 + $0x60] sm:$0xff] %vm408, -inf
          %422 = vst.msk [vmem:[#allocation2 + $0x68] sm:$0xff] %vm408, -inf
          %423 = vst.msk [vmem:[#allocation2 + $0x70] sm:$0xff] %vm408, -inf
          %424 = vst.msk [vmem:[#allocation2 + $0x78] sm:$0xff] %vm408, -inf
          %425 = vst.msk [vmem:[#allocation3] sm:$0xff] %vm408, 0.0
          %426 = vst.msk [vmem:[#allocation3 + $0x8] sm:$0xff] %vm408, 0.0
          %427 = vst.msk [vmem:[#allocation3 + $0x10] sm:$0xff] %vm408, 0.0
          %428 = vst.msk [vmem:[#allocation3 + $0x18] sm:$0xff] %vm408, 0.0
          %429 = vst.msk [vmem:[#allocation3 + $0x20] sm:$0xff] %vm408, 0.0
          %430 = vst.msk [vmem:[#allocation3 + $0x28] sm:$0xff] %vm408, 0.0
          %431 = vst.msk [vmem:[#allocation3 + $0x30] sm:$0xff] %vm408, 0.0
          %432 = vst.msk [vmem:[#allocation3 + $0x38] sm:$0xff] %vm408, 0.0
          %433 = vst.msk [vmem:[#allocation3 + $0x40] sm:$0xff] %vm408, 0.0
          %434 = vst.msk [vmem:[#allocation3 + $0x48] sm:$0xff] %vm408, 0.0
          %435 = vst.msk [vmem:[#allocation3 + $0x50] sm:$0xff] %vm408, 0.0
          %436 = vst.msk [vmem:[#allocation3 + $0x58] sm:$0xff] %vm408, 0.0
          %437 = vst.msk [vmem:[#allocation3 + $0x60] sm:$0xff] %vm408, 0.0
          %438 = vst.msk [vmem:[#allocation3 + $0x68] sm:$0xff] %vm408, 0.0
          %439 = vst.msk [vmem:[#allocation3 + $0x70] sm:$0xff] %vm408, 0.0
          %440 = vst.msk [vmem:[#allocation3 + $0x78] sm:$0xff] %vm408, 0.0
          %441 = vst [vmem:[#allocation4] sm:$0xff] 0.0
          %442 = vst [vmem:[#allocation4 + $0x8] sm:$0xff] 0.0
          %443 = vst [vmem:[#allocation4 + $0x10] sm:$0xff] 0.0
          %444 = vst [vmem:[#allocation4 + $0x18] sm:$0xff] 0.0
          %445 = vst [vmem:[#allocation4 + $0x20] sm:$0xff] 0.0
          %446 = vst [vmem:[#allocation4 + $0x28] sm:$0xff] 0.0
          %447 = vst [vmem:[#allocation4 + $0x30] sm:$0xff] 0.0
          %448 = vst [vmem:[#allocation4 + $0x38] sm:$0xff] 0.0
          %449 = vst [vmem:[#allocation4 + $0x40] sm:$0xff] 0.0
          %450 = vst [vmem:[#allocation4 + $0x48] sm:$0xff] 0.0
          %451 = vst [vmem:[#allocation4 + $0x50] sm:$0xff] 0.0
          %452 = vst [vmem:[#allocation4 + $0x58] sm:$0xff] 0.0
          %453 = vst [vmem:[#allocation4 + $0x60] sm:$0xff] 0.0
          %454 = vst [vmem:[#allocation4 + $0x68] sm:$0xff] 0.0
          %455 = vst [vmem:[#allocation4 + $0x70] sm:$0xff] 0.0
          %456 = vst [vmem:[#allocation4 + $0x78] sm:$0xff] 0.0
        $region60: #{pam_forward.3} parent=39 // pred_fallthru
          _
        %v457 = vld [vmem:[%s329] sm:$0xf]
        %v458 = vld [vmem:[%s329 + $0x4] sm:$0xf]
        %v459 = vld [vmem:[%s329 + $0x8] sm:$0xf]
        %v460 = vld [vmem:[%s329 + $0xc] sm:$0xf]
        %v461 = vld [vmem:[%s329 + $0x10] sm:$0xf]
        %v462 = vld [vmem:[%s329 + $0x14] sm:$0xf]
        %v463 = vld [vmem:[%s329 + $0x18] sm:$0xf]
        %v464 = vld [vmem:[%s329 + $0x1c] sm:$0xf]
        %v465 = vld [vmem:[%s329 + $0x20] sm:$0xf]
        %v466 = vld [vmem:[%s329 + $0x24] sm:$0xf]
        %v467 = vld [vmem:[%s329 + $0x28] sm:$0xf]
        %v468 = vld [vmem:[%s329 + $0x2c] sm:$0xf]
        %v469 = vld [vmem:[%s329 + $0x30] sm:$0xf]
        %v470 = vld [vmem:[%s329 + $0x34] sm:$0xf]
        %v471 = vld [vmem:[%s329 + $0x38] sm:$0xf]
        %v472 = vld [vmem:[%s329 + $0x3c] sm:$0xf]
        %v473 = vld [vmem:[%s338] sm:$0xf]
        %v474 = vld [vmem:[%s338 + $0x4] sm:$0xf]
        %v475 = vld [vmem:[%s338 + $0x8] sm:$0xf]
        %v476 = vld [vmem:[%s338 + $0xc] sm:$0xf]
        %v477 = vld [vmem:[%s338 + $0x10] sm:$0xf]
        %v478 = vld [vmem:[%s338 + $0x14] sm:$0xf]
        %v479 = vld [vmem:[%s338 + $0x18] sm:$0xf]
        %v480 = vld [vmem:[%s338 + $0x1c] sm:$0xf]
        %v481 = vld [vmem:[%s338 + $0x20] sm:$0xf]
        %v482 = vld [vmem:[%s338 + $0x24] sm:$0xf]
        %v483 = vld [vmem:[%s338 + $0x28] sm:$0xf]
        %v484 = vld [vmem:[%s338 + $0x2c] sm:$0xf]
        %v485 = vld [vmem:[%s338 + $0x30] sm:$0xf]
        %v486 = vld [vmem:[%s338 + $0x34] sm:$0xf]
        %v487 = vld [vmem:[%s338 + $0x38] sm:$0xf]
        %v488 = vld [vmem:[%s338 + $0x3c] sm:$0xf]
        %v505 = vunpack.c.l.b16 %v457
        %v506 = vunpack.c.l.b16 %v458
        %v507 = vunpack.c.l.b16 %v459
        %v508 = vunpack.c.l.b16 %v460
        %v509 = vunpack.c.l.b16 %v461
        %v510 = vunpack.c.l.b16 %v462
        %v511 = vunpack.c.l.b16 %v463
        %v512 = vunpack.c.l.b16 %v464
        %v513 = vunpack.c.l.b16 %v465
        %v514 = vunpack.c.l.b16 %v466
        %v515 = vunpack.c.l.b16 %v467
        %v516 = vunpack.c.l.b16 %v468
        %v517 = vunpack.c.l.b16 %v469
        %v518 = vunpack.c.l.b16 %v470
        %v519 = vunpack.c.l.b16 %v471
        %v520 = vunpack.c.l.b16 %v472
        %v521 = vpack.c.b16 %v506, %v505
        %v522 = vpack.c.b16 %v508, %v507
        %v523 = vpack.c.b16 %v510, %v509
        %v524 = vpack.c.b16 %v512, %v511
        %v525 = vpack.c.b16 %v514, %v513
        %v526 = vpack.c.b16 %v516, %v515
        %v527 = vpack.c.b16 %v518, %v517
        %v528 = vpack.c.b16 %v520, %v519
        %v553 = vunpack.c.l.b16 %v473
        %v554 = vunpack.c.l.b16 %v474
        %v555 = vunpack.c.l.b16 %v475
        %v556 = vunpack.c.l.b16 %v476
        %v557 = vunpack.c.l.b16 %v477
        %v558 = vunpack.c.l.b16 %v478
        %v559 = vunpack.c.l.b16 %v479
        %v560 = vunpack.c.l.b16 %v480
        %v561 = vunpack.c.l.b16 %v481
        %v562 = vunpack.c.l.b16 %v482
        %v563 = vunpack.c.l.b16 %v483
        %v564 = vunpack.c.l.b16 %v484
        %v565 = vunpack.c.l.b16 %v485
        %v566 = vunpack.c.l.b16 %v486
        %v567 = vunpack.c.l.b16 %v487
        %v568 = vunpack.c.l.b16 %v488
        %v569 = vpack.c.b16 %v554, %v553
        %v570 = vpack.c.b16 %v556, %v555
        %v571 = vpack.c.b16 %v558, %v557
        %v572 = vpack.c.b16 %v560, %v559
        %v573 = vpack.c.b16 %v562, %v561
        %v574 = vpack.c.b16 %v564, %v563
        %v575 = vpack.c.b16 %v566, %v565
        %v576 = vpack.c.b16 %v568, %v567
        %585 = vmatprep.subr.bf16.mxu0 0
        %586 = vmatpush1.bf16.xpose.msra.mxu0 %v569
        %587 = vmatprep.subr.bf16.mxu0 0
        %588 = vmatpush1.bf16.xpose.msra.mxu0 %v570
        %589 = vmatprep.subr.bf16.mxu0 0
        %590 = vmatpush1.bf16.xpose.msra.mxu0 %v571
        %591 = vmatprep.subr.bf16.mxu0 0
        %592 = vmatpush1.bf16.xpose.msra.mxu0 %v572
        %593 = vmatprep.subr.bf16.mxu0 0
        %594 = vmatpush1.bf16.xpose.msra.mxu0 %v573
        %595 = vmatprep.subr.bf16.mxu0 0
        %596 = vmatpush1.bf16.xpose.msra.mxu0 %v574
        %597 = vmatprep.subr.bf16.mxu0 0
        %598 = vmatpush1.bf16.xpose.msra.mxu0 %v575
        %599 = vmatprep.subr.bf16.mxu0 0
        %600 = vmatpush1.bf16.xpose.msra.mxu0 %v576
        %601 = vmatprep.subr.bf16.mxu0 0
        %602 = vmatpush1.bf16.xpose.msra.mxu0 0
        %603 = vmatprep.subr.bf16.mxu0 0
        %604 = vmatpush1.bf16.xpose.msra.mxu0 0
        %605 = vmatprep.subr.bf16.mxu0 0
        %606 = vmatpush1.bf16.xpose.msra.mxu0 0
        %607 = vmatprep.subr.bf16.mxu0 0
        %608 = vmatpush1.bf16.xpose.msra.mxu0 0
        %609 = vmatprep.subr.bf16.mxu0 0
        %610 = vmatpush1.bf16.xpose.msra.mxu0 0
        %611 = vmatprep.subr.bf16.mxu0 0
        %612 = vmatpush1.bf16.xpose.msra.mxu0 0
        %613 = vmatprep.subr.bf16.mxu0 0
        %614 = vmatpush1.bf16.xpose.msra.mxu0 0
        %615 = vmatprep.subr.bf16.mxu0 0
        %616 = vmatpush1.bf16.xpose.msra.mxu0 0
        %617 = vmatprep.mubr.bf16.mxu0 0
        %618 = vmatmul.mubr.bf16.gmra.mrb[0].mxu0 %v521
        %v619 = vpop.f32.mrb[0].mxu0
        %v620 = vadd.f32 0.0, %v619
        %v621 = vpop.f32.mrb[0].mxu0
        %v622 = vpop.f32.mrb[0].mxu0
        %v623 = vadd.f32 0.0, %v622
        %v624 = vpop.f32.mrb[0].mxu0
        %625 = vmatprep.mubr.bf16.mxu0 0
        %626 = vmatmul.mubr.bf16.gmra.mrb[0].mxu0 %v522
        %v627 = vpop.f32.mrb[0].mxu0
        %v628 = vadd.f32 0.0, %v627
        %v629 = vpop.f32.mrb[0].mxu0
        %v630 = vpop.f32.mrb[0].mxu0
        %v631 = vadd.f32 0.0, %v630
        %v632 = vpop.f32.mrb[0].mxu0
        %633 = vmatprep.mubr.bf16.mxu0 0
        %634 = vmatmul.mubr.bf16.gmra.mrb[0].mxu0 %v523
        %v635 = vpop.f32.mrb[0].mxu0
        %v636 = vadd.f32 0.0, %v635
        %v637 = vpop.f32.mrb[0].mxu0
        %v638 = vpop.f32.mrb[0].mxu0
        %v639 = vadd.f32 0.0, %v638
        %v640 = vpop.f32.mrb[0].mxu0
        %641 = vmatprep.mubr.bf16.mxu0 0
        %642 = vmatmul.mubr.bf16.gmra.mrb[0].mxu0 %v524
        %v643 = vpop.f32.mrb[0].mxu0
        %v644 = vadd.f32 0.0, %v643
        %v645 = vpop.f32.mrb[0].mxu0
        %v646 = vpop.f32.mrb[0].mxu0
        %v647 = vadd.f32 0.0, %v646
        %v648 = vpop.f32.mrb[0].mxu0
        %649 = vmatprep.mubr.bf16.mxu0 0
        %650 = vmatmul.mubr.bf16.gmra.mrb[0].mxu0 %v525
        %v651 = vpop.f32.mrb[0].mxu0
        %v652 = vadd.f32 0.0, %v651
        %v653 = vpop.f32.mrb[0].mxu0
        %v654 = vpop.f32.mrb[0].mxu0
        %v655 = vadd.f32 0.0, %v654
        %v656 = vpop.f32.mrb[0].mxu0
        %657 = vmatprep.mubr.bf16.mxu0 0
        %658 = vmatmul.mubr.bf16.gmra.mrb[0].mxu0 %v526
        %v659 = vpop.f32.mrb[0].mxu0
        %v660 = vadd.f32 0.0, %v659
        %v661 = vpop.f32.mrb[0].mxu0
        %v662 = vpop.f32.mrb[0].mxu0
        %v663 = vadd.f32 0.0, %v662
        %v664 = vpop.f32.mrb[0].mxu0
        %665 = vmatprep.mubr.bf16.mxu0 0
        %666 = vmatmul.mubr.bf16.gmra.mrb[0].mxu0 %v527
        %v667 = vpop.f32.mrb[0].mxu0
        %v668 = vadd.f32 0.0, %v667
        %v669 = vpop.f32.mrb[0].mxu0
        %v670 = vpop.f32.mrb[0].mxu0
        %v671 = vadd.f32 0.0, %v670
        %v672 = vpop.f32.mrb[0].mxu0
        %673 = vmatprep.mubr.bf16.mxu0 0
        %674 = vmatmul.mubr.bf16.gmra.mrb[0].mxu0 %v528
        %v675 = vpop.f32.mrb[0].mxu0
        %v676 = vadd.f32 0.0, %v675
        %v677 = vpop.f32.mrb[0].mxu0
        %v678 = vpop.f32.mrb[0].mxu0
        %v679 = vadd.f32 0.0, %v678
        %v680 = vpop.f32.mrb[0].mxu0
        %681 = vdwg.mxu0
        %v682 = vld [vmem:[#allocation2] sm:$0xff]
        %v683 = vld [vmem:[#allocation2 + $0x8] sm:$0xff]
        %v684 = vld [vmem:[#allocation2 + $0x10] sm:$0xff]
        %v685 = vld [vmem:[#allocation2 + $0x18] sm:$0xff]
        %v686 = vld [vmem:[#allocation2 + $0x20] sm:$0xff]
        %v687 = vld [vmem:[#allocation2 + $0x28] sm:$0xff]
        %v688 = vld [vmem:[#allocation2 + $0x30] sm:$0xff]
        %v689 = vld [vmem:[#allocation2 + $0x38] sm:$0xff]
        %v690 = vld [vmem:[#allocation2 + $0x40] sm:$0xff]
        %v691 = vld [vmem:[#allocation2 + $0x48] sm:$0xff]
        %v692 = vld [vmem:[#allocation2 + $0x50] sm:$0xff]
        %v693 = vld [vmem:[#allocation2 + $0x58] sm:$0xff]
        %v694 = vld [vmem:[#allocation2 + $0x60] sm:$0xff]
        %v695 = vld [vmem:[#allocation2 + $0x68] sm:$0xff]
        %v696 = vld [vmem:[#allocation2 + $0x70] sm:$0xff]
        %v697 = vld [vmem:[#allocation2 + $0x78] sm:$0xff]
        %698 = vmax.xlane.f32.xlu0 %v620
        %v699 = vpop.xlane.xlu0 %698
        %700 = vmax.xlane.f32.xlu0 %v623
        %v701 = vpop.xlane.xlu0 %700
        %702 = vmax.xlane.f32.xlu0 %v628
        %v703 = vpop.xlane.xlu0 %702
        %704 = vmax.xlane.f32.xlu0 %v631
        %v705 = vpop.xlane.xlu0 %704
        %706 = vmax.xlane.f32.xlu0 %v636
        %v707 = vpop.xlane.xlu0 %706
        %708 = vmax.xlane.f32.xlu0 %v639
        %v709 = vpop.xlane.xlu0 %708
        %710 = vmax.xlane.f32.xlu0 %v644
        %v711 = vpop.xlane.xlu0 %710
        %712 = vmax.xlane.f32.xlu0 %v647
        %v713 = vpop.xlane.xlu0 %712
        %714 = vmax.xlane.f32.xlu0 %v652
        %v715 = vpop.xlane.xlu0 %714
        %716 = vmax.xlane.f32.xlu0 %v655
        %v717 = vpop.xlane.xlu0 %716
        %718 = vmax.xlane.f32.xlu0 %v660
        %v719 = vpop.xlane.xlu0 %718
        %720 = vmax.xlane.f32.xlu0 %v663
        %v721 = vpop.xlane.xlu0 %720
        %722 = vmax.xlane.f32.xlu0 %v668
        %v723 = vpop.xlane.xlu0 %722
        %724 = vmax.xlane.f32.xlu0 %v671
        %v725 = vpop.xlane.xlu0 %724
        %726 = vmax.xlane.f32.xlu0 %v676
        %v727 = vpop.xlane.xlu0 %726
        %728 = vmax.xlane.f32.xlu0 %v679
        %v729 = vpop.xlane.xlu0 %728
        %v730 = vmax.f32 %v682, %v699
        %v731 = vmax.f32 %v683, %v701
        %v732 = vmax.f32 %v684, %v703
        %v733 = vmax.f32 %v685, %v705
        %v734 = vmax.f32 %v686, %v707
        %v735 = vmax.f32 %v687, %v709
        %v736 = vmax.f32 %v688, %v711
        %v737 = vmax.f32 %v689, %v713
        %v738 = vmax.f32 %v690, %v715
        %v739 = vmax.f32 %v691, %v717
        %v740 = vmax.f32 %v692, %v719
        %v741 = vmax.f32 %v693, %v721
        %v742 = vmax.f32 %v694, %v723
        %v743 = vmax.f32 %v695, %v725
        %v744 = vmax.f32 %v696, %v727
        %v745 = vmax.f32 %v697, %v729
        %v746 = vsub.f32 %v682, %v730
        %v747 = vsub.f32 %v683, %v731
        %v748 = vsub.f32 %v684, %v732
        %v749 = vsub.f32 %v685, %v733
        %v750 = vsub.f32 %v686, %v734
        %v751 = vsub.f32 %v687, %v735
        %v752 = vsub.f32 %v688, %v736
        %v753 = vsub.f32 %v689, %v737
        %v754 = vsub.f32 %v690, %v738
        %v755 = vsub.f32 %v691, %v739
        %v756 = vsub.f32 %v692, %v740
        %v757 = vsub.f32 %v693, %v741
        %v758 = vsub.f32 %v694, %v742
        %v759 = vsub.f32 %v695, %v743
        %v760 = vsub.f32 %v696, %v744
        %v761 = vsub.f32 %v697, %v745
        %v762 = vmul.f32 %v746, 1.442695
        %v763 = vpow.pop %v762
        %v764 = vmul.f32 %v747, 1.442695
        %v765 = vpow.pop %v764
        %v766 = vmul.f32 %v748, 1.442695
        %v767 = vpow.pop %v766
        %v768 = vmul.f32 %v749, 1.442695
        %v769 = vpow.pop %v768
        %v770 = vmul.f32 %v750, 1.442695
        %v771 = vpow.pop %v770
        %v772 = vmul.f32 %v751, 1.442695
        %v773 = vpow.pop %v772
        %v774 = vmul.f32 %v752, 1.442695
        %v775 = vpow.pop %v774
        %v776 = vmul.f32 %v753, 1.442695
        %v777 = vpow.pop %v776
        %v778 = vmul.f32 %v754, 1.442695
        %v779 = vpow.pop %v778
        %v780 = vmul.f32 %v755, 1.442695
        %v781 = vpow.pop %v780
        %v782 = vmul.f32 %v756, 1.442695
        %v783 = vpow.pop %v782
        %v784 = vmul.f32 %v757, 1.442695
        %v785 = vpow.pop %v784
        %v786 = vmul.f32 %v758, 1.442695
        %v787 = vpow.pop %v786
        %v788 = vmul.f32 %v759, 1.442695
        %v789 = vpow.pop %v788
        %v790 = vmul.f32 %v760, 1.442695
        %v791 = vpow.pop %v790
        %v792 = vmul.f32 %v761, 1.442695
        %v793 = vpow.pop %v792
        %795 = vset.pattern.permute.xlu0 0
        %796 = vperm.xlu0 %795, %v730
        %v797 = vpop.permute.xlu0 %796
        %800 = vset.pattern.permute.xlu0 0
        %801 = vperm.xlu0 %800, %v731
        %v802 = vpop.permute.xlu0 %801
        %805 = vset.pattern.permute.xlu0 0
        %806 = vperm.xlu0 %805, %v732
        %v807 = vpop.permute.xlu0 %806
        %810 = vset.pattern.permute.xlu0 0
        %811 = vperm.xlu0 %810, %v733
        %v812 = vpop.permute.xlu0 %811
        %815 = vset.pattern.permute.xlu0 0
        %816 = vperm.xlu0 %815, %v734
        %v817 = vpop.permute.xlu0 %816
        %820 = vset.pattern.permute.xlu0 0
        %821 = vperm.xlu0 %820, %v735
        %v822 = vpop.permute.xlu0 %821
        %825 = vset.pattern.permute.xlu0 0
        %826 = vperm.xlu0 %825, %v736
        %v827 = vpop.permute.xlu0 %826
        %830 = vset.pattern.permute.xlu0 0
        %831 = vperm.xlu0 %830, %v737
        %v832 = vpop.permute.xlu0 %831
        %835 = vset.pattern.permute.xlu0 0
        %836 = vperm.xlu0 %835, %v738
        %v837 = vpop.permute.xlu0 %836
        %840 = vset.pattern.permute.xlu0 0
        %841 = vperm.xlu0 %840, %v739
        %v842 = vpop.permute.xlu0 %841
        %845 = vset.pattern.permute.xlu0 0
        %846 = vperm.xlu0 %845, %v740
        %v847 = vpop.permute.xlu0 %846
        %850 = vset.pattern.permute.xlu0 0
        %851 = vperm.xlu0 %850, %v741
        %v852 = vpop.permute.xlu0 %851
        %855 = vset.pattern.permute.xlu0 0
        %856 = vperm.xlu0 %855, %v742
        %v857 = vpop.permute.xlu0 %856
        %860 = vset.pattern.permute.xlu0 0
        %861 = vperm.xlu0 %860, %v743
        %v862 = vpop.permute.xlu0 %861
        %865 = vset.pattern.permute.xlu0 0
        %866 = vperm.xlu0 %865, %v744
        %v867 = vpop.permute.xlu0 %866
        %870 = vset.pattern.permute.xlu0 0
        %871 = vperm.xlu0 %870, %v745
        %v872 = vpop.permute.xlu0 %871
        %v874 = vsub.f32 %v620, %v797
        %v875 = vsub.f32 %v623, %v802
        %v876 = vsub.f32 %v628, %v807
        %v877 = vsub.f32 %v631, %v812
        %v878 = vsub.f32 %v636, %v817
        %v879 = vsub.f32 %v639, %v822
        %v880 = vsub.f32 %v644, %v827
        %v881 = vsub.f32 %v647, %v832
        %v882 = vsub.f32 %v652, %v837
        %v883 = vsub.f32 %v655, %v842
        %v884 = vsub.f32 %v660, %v847
        %v885 = vsub.f32 %v663, %v852
        %v886 = vsub.f32 %v668, %v857
        %v887 = vsub.f32 %v671, %v862
        %v888 = vsub.f32 %v676, %v867
        %v889 = vsub.f32 %v679, %v872
        %v890 = vmul.f32 %v874, 1.442695
        %v891 = vpow.pop %v890
        %v892 = vmul.f32 %v875, 1.442695
        %v893 = vpow.pop %v892
        %v894 = vmul.f32 %v876, 1.442695
        %v895 = vpow.pop %v894
        %v896 = vmul.f32 %v877, 1.442695
        %v897 = vpow.pop %v896
        %v898 = vmul.f32 %v878, 1.442695
        %v899 = vpow.pop %v898
        %v900 = vmul.f32 %v879, 1.442695
        %v901 = vpow.pop %v900
        %v902 = vmul.f32 %v880, 1.442695
        %v903 = vpow.pop %v902
        %v904 = vmul.f32 %v881, 1.442695
        %v905 = vpow.pop %v904
        %v906 = vmul.f32 %v882, 1.442695
        %v907 = vpow.pop %v906
        %v908 = vmul.f32 %v883, 1.442695
        %v909 = vpow.pop %v908
        %v910 = vmul.f32 %v884, 1.442695
        %v911 = vpow.pop %v910
        %v912 = vmul.f32 %v885, 1.442695
        %v913 = vpow.pop %v912
        %v914 = vmul.f32 %v886, 1.442695
        %v915 = vpow.pop %v914
        %v916 = vmul.f32 %v887, 1.442695
        %v917 = vpow.pop %v916
        %v918 = vmul.f32 %v888, 1.442695
        %v919 = vpow.pop %v918
        %v920 = vmul.f32 %v889, 1.442695
        %v921 = vpow.pop %v920
        %v922 = vld [vmem:[#allocation3] sm:$0xff]
        %v923 = vld [vmem:[#allocation3 + $0x8] sm:$0xff]
        %v924 = vld [vmem:[#allocation3 + $0x10] sm:$0xff]
        %v925 = vld [vmem:[#allocation3 + $0x18] sm:$0xff]
        %v926 = vld [vmem:[#allocation3 + $0x20] sm:$0xff]
        %v927 = vld [vmem:[#allocation3 + $0x28] sm:$0xff]
        %v928 = vld [vmem:[#allocation3 + $0x30] sm:$0xff]
        %v929 = vld [vmem:[#allocation3 + $0x38] sm:$0xff]
        %v930 = vld [vmem:[#allocation3 + $0x40] sm:$0xff]
        %v931 = vld [vmem:[#allocation3 + $0x48] sm:$0xff]
        %v932 = vld [vmem:[#allocation3 + $0x50] sm:$0xff]
        %v933 = vld [vmem:[#allocation3 + $0x58] sm:$0xff]
        %v934 = vld [vmem:[#allocation3 + $0x60] sm:$0xff]
        %v935 = vld [vmem:[#allocation3 + $0x68] sm:$0xff]
        %v936 = vld [vmem:[#allocation3 + $0x70] sm:$0xff]
        %v937 = vld [vmem:[#allocation3 + $0x78] sm:$0xff]
        %v938 = vmul.f32 %v763, %v922
        %v939 = vmul.f32 %v765, %v923
        %v940 = vmul.f32 %v767, %v924
        %v941 = vmul.f32 %v769, %v925
        %v942 = vmul.f32 %v771, %v926
        %v943 = vmul.f32 %v773, %v927
        %v944 = vmul.f32 %v775, %v928
        %v945 = vmul.f32 %v777, %v929
        %v946 = vmul.f32 %v779, %v930
        %v947 = vmul.f32 %v781, %v931
        %v948 = vmul.f32 %v783, %v932
        %v949 = vmul.f32 %v785, %v933
        %v950 = vmul.f32 %v787, %v934
        %v951 = vmul.f32 %v789, %v935
        %v952 = vmul.f32 %v791, %v936
        %v953 = vmul.f32 %v793, %v937
        %954 = vadd.xlane.f32.xlu0 %v891
        %v955 = vpop.xlane.xlu0 %954
        %956 = vadd.xlane.f32.xlu0 %v893
        %v957 = vpop.xlane.xlu0 %956
        %958 = vadd.xlane.f32.xlu0 %v895
        %v959 = vpop.xlane.xlu0 %958
        %960 = vadd.xlane.f32.xlu0 %v897
        %v961 = vpop.xlane.xlu0 %960
        %962 = vadd.xlane.f32.xlu0 %v899
        %v963 = vpop.xlane.xlu0 %962
        %964 = vadd.xlane.f32.xlu0 %v901
        %v965 = vpop.xlane.xlu0 %964
        %966 = vadd.xlane.f32.xlu0 %v903
        %v967 = vpop.xlane.xlu0 %966
        %968 = vadd.xlane.f32.xlu0 %v905
        %v969 = vpop.xlane.xlu0 %968
        %970 = vadd.xlane.f32.xlu0 %v907
        %v971 = vpop.xlane.xlu0 %970
        %972 = vadd.xlane.f32.xlu0 %v909
        %v973 = vpop.xlane.xlu0 %972
        %974 = vadd.xlane.f32.xlu0 %v911
        %v975 = vpop.xlane.xlu0 %974
        %976 = vadd.xlane.f32.xlu0 %v913
        %v977 = vpop.xlane.xlu0 %976
        %978 = vadd.xlane.f32.xlu0 %v915
        %v979 = vpop.xlane.xlu0 %978
        %980 = vadd.xlane.f32.xlu0 %v917
        %v981 = vpop.xlane.xlu0 %980
        %982 = vadd.xlane.f32.xlu0 %v919
        %v983 = vpop.xlane.xlu0 %982
        %984 = vadd.xlane.f32.xlu0 %v921
        %v985 = vpop.xlane.xlu0 %984
        %v986 = vadd.f32 %v938, %v955
        %v987 = vadd.f32 %v939, %v957
        %v988 = vadd.f32 %v940, %v959
        %v989 = vadd.f32 %v941, %v961
        %v990 = vadd.f32 %v942, %v963
        %v991 = vadd.f32 %v943, %v965
        %v992 = vadd.f32 %v944, %v967
        %v993 = vadd.f32 %v945, %v969
        %v994 = vadd.f32 %v946, %v971
        %v995 = vadd.f32 %v947, %v973
        %v996 = vadd.f32 %v948, %v975
        %v997 = vadd.f32 %v949, %v977
        %v998 = vadd.f32 %v950, %v979
        %v999 = vadd.f32 %v951, %v981
        %v1000 = vadd.f32 %v952, %v983
        %v1001 = vadd.f32 %v953, %v985
        %vm1002 = vcmask 7168
        %1003 = vst.msk [vmem:[#allocation3] sm:$0xff] %vm1002, %v986
        %1004 = vst.msk [vmem:[#allocation3 + $0x8] sm:$0xff] %vm1002, %v987
        %1005 = vst.msk [vmem:[#allocation3 + $0x10] sm:$0xff] %vm1002, %v988
        %1006 = vst.msk [vmem:[#allocation3 + $0x18] sm:$0xff] %vm1002, %v989
        %1007 = vst.msk [vmem:[#allocation3 + $0x20] sm:$0xff] %vm1002, %v990
        %1008 = vst.msk [vmem:[#allocation3 + $0x28] sm:$0xff] %vm1002, %v991
        %1009 = vst.msk [vmem:[#allocation3 + $0x30] sm:$0xff] %vm1002, %v992
        %1010 = vst.msk [vmem:[#allocation3 + $0x38] sm:$0xff] %vm1002, %v993
        %1011 = vst.msk [vmem:[#allocation3 + $0x40] sm:$0xff] %vm1002, %v994
        %1012 = vst.msk [vmem:[#allocation3 + $0x48] sm:$0xff] %vm1002, %v995
        %1013 = vst.msk [vmem:[#allocation3 + $0x50] sm:$0xff] %vm1002, %v996
        %1014 = vst.msk [vmem:[#allocation3 + $0x58] sm:$0xff] %vm1002, %v997
        %1015 = vst.msk [vmem:[#allocation3 + $0x60] sm:$0xff] %vm1002, %v998
        %1016 = vst.msk [vmem:[#allocation3 + $0x68] sm:$0xff] %vm1002, %v999
        %1017 = vst.msk [vmem:[#allocation3 + $0x70] sm:$0xff] %vm1002, %v1000
        %1018 = vst.msk [vmem:[#allocation3 + $0x78] sm:$0xff] %vm1002, %v1001
        %v1019 = vld [vmem:[#allocation4] sm:$0xff]
        %v1020 = vld [vmem:[#allocation4 + $0x8] sm:$0xff]
        %v1021 = vld [vmem:[#allocation4 + $0x10] sm:$0xff]
        %v1022 = vld [vmem:[#allocation4 + $0x18] sm:$0xff]
        %v1023 = vld [vmem:[#allocation4 + $0x20] sm:$0xff]
        %v1024 = vld [vmem:[#allocation4 + $0x28] sm:$0xff]
        %v1025 = vld [vmem:[#allocation4 + $0x30] sm:$0xff]
        %v1026 = vld [vmem:[#allocation4 + $0x38] sm:$0xff]
        %v1027 = vld [vmem:[#allocation4 + $0x40] sm:$0xff]
        %v1028 = vld [vmem:[#allocation4 + $0x48] sm:$0xff]
        %v1029 = vld [vmem:[#allocation4 + $0x50] sm:$0xff]
        %v1030 = vld [vmem:[#allocation4 + $0x58] sm:$0xff]
        %v1031 = vld [vmem:[#allocation4 + $0x60] sm:$0xff]
        %v1032 = vld [vmem:[#allocation4 + $0x68] sm:$0xff]
        %v1033 = vld [vmem:[#allocation4 + $0x70] sm:$0xff]
        %v1034 = vld [vmem:[#allocation4 + $0x78] sm:$0xff]
        %1036 = vset.pattern.permute.xlu0 0
        %1037 = vperm.xlu0 %1036, %v763
        %v1038 = vpop.permute.xlu0 %1037
        %1041 = vset.pattern.permute.xlu0 0
        %1042 = vperm.xlu0 %1041, %v765
        %v1043 = vpop.permute.xlu0 %1042
        %1046 = vset.pattern.permute.xlu0 0
        %1047 = vperm.xlu0 %1046, %v767
        %v1048 = vpop.permute.xlu0 %1047
        %1051 = vset.pattern.permute.xlu0 0
        %1052 = vperm.xlu0 %1051, %v769
        %v1053 = vpop.permute.xlu0 %1052
        %1056 = vset.pattern.permute.xlu0 0
        %1057 = vperm.xlu0 %1056, %v771
        %v1058 = vpop.permute.xlu0 %1057
        %1061 = vset.pattern.permute.xlu0 0
        %1062 = vperm.xlu0 %1061, %v773
        %v1063 = vpop.permute.xlu0 %1062
        %1066 = vset.pattern.permute.xlu0 0
        %1067 = vperm.xlu0 %1066, %v775
        %v1068 = vpop.permute.xlu0 %1067
        %1071 = vset.pattern.permute.xlu0 0
        %1072 = vperm.xlu0 %1071, %v777
        %v1073 = vpop.permute.xlu0 %1072
        %1076 = vset.pattern.permute.xlu0 0
        %1077 = vperm.xlu0 %1076, %v779
        %v1078 = vpop.permute.xlu0 %1077
        %1081 = vset.pattern.permute.xlu0 0
        %1082 = vperm.xlu0 %1081, %v781
        %v1083 = vpop.permute.xlu0 %1082
        %1086 = vset.pattern.permute.xlu0 0
        %1087 = vperm.xlu0 %1086, %v783
        %v1088 = vpop.permute.xlu0 %1087
        %1091 = vset.pattern.permute.xlu0 0
        %1092 = vperm.xlu0 %1091, %v785
        %v1093 = vpop.permute.xlu0 %1092
        %1096 = vset.pattern.permute.xlu0 0
        %1097 = vperm.xlu0 %1096, %v787
        %v1098 = vpop.permute.xlu0 %1097
        %1101 = vset.pattern.permute.xlu0 0
        %1102 = vperm.xlu0 %1101, %v789
        %v1103 = vpop.permute.xlu0 %1102
        %1106 = vset.pattern.permute.xlu0 0
        %1107 = vperm.xlu0 %1106, %v791
        %v1108 = vpop.permute.xlu0 %1107
        %1111 = vset.pattern.permute.xlu0 0
        %1112 = vperm.xlu0 %1111, %v793
        %v1113 = vpop.permute.xlu0 %1112
        %v1115 = vmul.f32 %v1038, %v1019
        %v1116 = vmul.f32 %v1043, %v1020
        %v1117 = vmul.f32 %v1048, %v1021
        %v1118 = vmul.f32 %v1053, %v1022
        %v1119 = vmul.f32 %v1058, %v1023
        %v1120 = vmul.f32 %v1063, %v1024
        %v1121 = vmul.f32 %v1068, %v1025
        %v1122 = vmul.f32 %v1073, %v1026
        %v1123 = vmul.f32 %v1078, %v1027
        %v1124 = vmul.f32 %v1083, %v1028
        %v1125 = vmul.f32 %v1088, %v1029
        %v1126 = vmul.f32 %v1093, %v1030
        %v1127 = vmul.f32 %v1098, %v1031
        %v1128 = vmul.f32 %v1103, %v1032
        %v1129 = vmul.f32 %v1108, %v1033
        %v1130 = vmul.f32 %v1113, %v1034
        %v1131 = vpack.c.bf16 %v893, %v891
        %v1132 = vpack.c.bf16 %v897, %v895
        %v1133 = vpack.c.bf16 %v901, %v899
        %v1134 = vpack.c.bf16 %v905, %v903
        %v1135 = vpack.c.bf16 %v909, %v907
        %v1136 = vpack.c.bf16 %v913, %v911
        %v1137 = vpack.c.bf16 %v917, %v915
        %v1138 = vpack.c.bf16 %v921, %v919
        %v1139 = vld [vmem:[%s347] sm:$0xf]
        %v1140 = vld [vmem:[%s347 + $0x4] sm:$0xf]
        %v1141 = vld [vmem:[%s347 + $0x8] sm:$0xf]
        %v1142 = vld [vmem:[%s347 + $0xc] sm:$0xf]
        %v1143 = vld [vmem:[%s347 + $0x10] sm:$0xf]
        %v1144 = vld [vmem:[%s347 + $0x14] sm:$0xf]
        %v1145 = vld [vmem:[%s347 + $0x18] sm:$0xf]
        %v1146 = vld [vmem:[%s347 + $0x1c] sm:$0xf]
        %v1147 = vld [vmem:[%s347 + $0x20] sm:$0xf]
        %v1148 = vld [vmem:[%s347 + $0x24] sm:$0xf]
        %v1149 = vld [vmem:[%s347 + $0x28] sm:$0xf]
        %v1150 = vld [vmem:[%s347 + $0x2c] sm:$0xf]
        %v1151 = vld [vmem:[%s347 + $0x30] sm:$0xf]
        %v1152 = vld [vmem:[%s347 + $0x34] sm:$0xf]
        %v1153 = vld [vmem:[%s347 + $0x38] sm:$0xf]
        %v1154 = vld [vmem:[%s347 + $0x3c] sm:$0xf]
        %v1171 = vunpack.c.l.b16 %v1139
        %v1172 = vunpack.c.l.b16 %v1140
        %v1173 = vunpack.c.l.b16 %v1141
        %v1174 = vunpack.c.l.b16 %v1142
        %v1175 = vunpack.c.l.b16 %v1143
        %v1176 = vunpack.c.l.b16 %v1144
        %v1177 = vunpack.c.l.b16 %v1145
        %v1178 = vunpack.c.l.b16 %v1146
        %v1179 = vunpack.c.l.b16 %v1147
        %v1180 = vunpack.c.l.b16 %v1148
        %v1181 = vunpack.c.l.b16 %v1149
        %v1182 = vunpack.c.l.b16 %v1150
        %v1183 = vunpack.c.l.b16 %v1151
        %v1184 = vunpack.c.l.b16 %v1152
        %v1185 = vunpack.c.l.b16 %v1153
        %v1186 = vunpack.c.l.b16 %v1154
        %v1187 = vpack.c.b16 %v1172, %v1171
        %v1188 = vpack.c.b16 %v1174, %v1173
        %v1189 = vpack.c.b16 %v1176, %v1175
        %v1190 = vpack.c.b16 %v1178, %v1177
        %v1191 = vpack.c.b16 %v1180, %v1179
        %v1192 = vpack.c.b16 %v1182, %v1181
        %v1193 = vpack.c.b16 %v1184, %v1183
        %v1194 = vpack.c.b16 %v1186, %v1185
        %1203 = vmatprep.subr.bf16.mxu0 0
        %1204 = vmatpush1.bf16.msra.mxu0 %v1187
        %1205 = vmatprep.subr.bf16.mxu0 0
        %1206 = vmatpush1.bf16.msra.mxu0 %v1188
        %1207 = vmatprep.subr.bf16.mxu0 0
        %1208 = vmatpush1.bf16.msra.mxu0 %v1189
        %1209 = vmatprep.subr.bf16.mxu0 0
        %1210 = vmatpush1.bf16.msra.mxu0 %v1190
        %1211 = vmatprep.subr.bf16.mxu0 0
        %1212 = vmatpush1.bf16.msra.mxu0 %v1191
        %1213 = vmatprep.subr.bf16.mxu0 0
        %1214 = vmatpush1.bf16.msra.mxu0 %v1192
        %1215 = vmatprep.subr.bf16.mxu0 0
        %1216 = vmatpush1.bf16.msra.mxu0 %v1193
        %1217 = vmatprep.subr.bf16.mxu0 0
        %1218 = vmatpush1.bf16.msra.mxu0 %v1194
        %1219 = vmatprep.subr.bf16.mxu0 0
        %1220 = vmatpush1.bf16.msra.mxu0 0
        %1221 = vmatprep.subr.bf16.mxu0 0
        %1222 = vmatpush1.bf16.msra.mxu0 0
        %1223 = vmatprep.subr.bf16.mxu0 0
        %1224 = vmatpush1.bf16.msra.mxu0 0
        %1225 = vmatprep.subr.bf16.mxu0 0
        %1226 = vmatpush1.bf16.msra.mxu0 0
        %1227 = vmatprep.subr.bf16.mxu0 0
        %1228 = vmatpush1.bf16.msra.mxu0 0
        %1229 = vmatprep.subr.bf16.mxu0 0
        %1230 = vmatpush1.bf16.msra.mxu0 0
        %1231 = vmatprep.subr.bf16.mxu0 0
        %1232 = vmatpush1.bf16.msra.mxu0 0
        %1233 = vmatprep.subr.bf16.mxu0 0
        %1234 = vmatpush1.bf16.msra.mxu0 0
        %1235 = vmatprep.mubr.bf16.mxu0 0
        %1236 = vmatmul.mubr.bf16.gmra.mrb[0].mxu0 %v1131
        %v1237 = vpop.f32.mrb[0].mxu0
        %v1238 = vadd.f32 0.0, %v1237
        %v1239 = vpop.f32.mrb[0].mxu0
        %v1240 = vpop.f32.mrb[0].mxu0
        %v1241 = vadd.f32 0.0, %v1240
        %v1242 = vpop.f32.mrb[0].mxu0
        %1243 = vmatprep.mubr.bf16.mxu0 0
        %1244 = vmatmul.mubr.bf16.gmra.mrb[0].mxu0 %v1132
        %v1245 = vpop.f32.mrb[0].mxu0
        %v1246 = vadd.f32 0.0, %v1245
        %v1247 = vpop.f32.mrb[0].mxu0
        %v1248 = vpop.f32.mrb[0].mxu0
        %v1249 = vadd.f32 0.0, %v1248
        %v1250 = vpop.f32.mrb[0].mxu0
        %1251 = vmatprep.mubr.bf16.mxu0 0
        %1252 = vmatmul.mubr.bf16.gmra.mrb[0].mxu0 %v1133
        %v1253 = vpop.f32.mrb[0].mxu0
        %v1254 = vadd.f32 0.0, %v1253
        %v1255 = vpop.f32.mrb[0].mxu0
        %v1256 = vpop.f32.mrb[0].mxu0
        %v1257 = vadd.f32 0.0, %v1256
        %v1258 = vpop.f32.mrb[0].mxu0
        %1259 = vmatprep.mubr.bf16.mxu0 0
        %1260 = vmatmul.mubr.bf16.gmra.mrb[0].mxu0 %v1134
        %v1261 = vpop.f32.mrb[0].mxu0
        %v1262 = vadd.f32 0.0, %v1261
        %v1263 = vpop.f32.mrb[0].mxu0
        %v1264 = vpop.f32.mrb[0].mxu0
        %v1265 = vadd.f32 0.0, %v1264
        %v1266 = vpop.f32.mrb[0].mxu0
        %1267 = vmatprep.mubr.bf16.mxu0 0
        %1268 = vmatmul.mubr.bf16.gmra.mrb[0].mxu0 %v1135
        %v1269 = vpop.f32.mrb[0].mxu0
        %v1270 = vadd.f32 0.0, %v1269
        %v1271 = vpop.f32.mrb[0].mxu0
        %v1272 = vpop.f32.mrb[0].mxu0
        %v1273 = vadd.f32 0.0, %v1272
        %v1274 = vpop.f32.mrb[0].mxu0
        %1275 = vmatprep.mubr.bf16.mxu0 0
        %1276 = vmatmul.mubr.bf16.gmra.mrb[0].mxu0 %v1136
        %v1277 = vpop.f32.mrb[0].mxu0
        %v1278 = vadd.f32 0.0, %v1277
        %v1279 = vpop.f32.mrb[0].mxu0
        %v1280 = vpop.f32.mrb[0].mxu0
        %v1281 = vadd.f32 0.0, %v1280
        %v1282 = vpop.f32.mrb[0].mxu0
        %1283 = vmatprep.mubr.bf16.mxu0 0
        %1284 = vmatmul.mubr.bf16.gmra.mrb[0].mxu0 %v1137
        %v1285 = vpop.f32.mrb[0].mxu0
        %v1286 = vadd.f32 0.0, %v1285
        %v1287 = vpop.f32.mrb[0].mxu0
        %v1288 = vpop.f32.mrb[0].mxu0
        %v1289 = vadd.f32 0.0, %v1288
        %v1290 = vpop.f32.mrb[0].mxu0
        %1291 = vmatprep.mubr.bf16.mxu0 0
        %1292 = vmatmul.mubr.bf16.gmra.mrb[0].mxu0 %v1138
        %v1293 = vpop.f32.mrb[0].mxu0
        %v1294 = vadd.f32 0.0, %v1293
        %v1295 = vpop.f32.mrb[0].mxu0
        %v1296 = vpop.f32.mrb[0].mxu0
        %v1297 = vadd.f32 0.0, %v1296
        %v1298 = vpop.f32.mrb[0].mxu0
        %1299 = vdwg.mxu0
        %v1300 = vadd.f32 %v1115, %v1238
        %v1301 = vadd.f32 %v1116, %v1241
        %v1302 = vadd.f32 %v1117, %v1246
        %v1303 = vadd.f32 %v1118, %v1249
        %v1304 = vadd.f32 %v1119, %v1254
        %v1305 = vadd.f32 %v1120, %v1257
        %v1306 = vadd.f32 %v1121, %v1262
        %v1307 = vadd.f32 %v1122, %v1265
        %v1308 = vadd.f32 %v1123, %v1270
        %v1309 = vadd.f32 %v1124, %v1273
        %v1310 = vadd.f32 %v1125, %v1278
        %v1311 = vadd.f32 %v1126, %v1281
        %v1312 = vadd.f32 %v1127, %v1286
        %v1313 = vadd.f32 %v1128, %v1289
        %v1314 = vadd.f32 %v1129, %v1294
        %v1315 = vadd.f32 %v1130, %v1297
        %1316 = vst [vmem:[#allocation4] sm:$0xff] %v1300
        %1317 = vst [vmem:[#allocation4 + $0x8] sm:$0xff] %v1301
        %1318 = vst [vmem:[#allocation4 + $0x10] sm:$0xff] %v1302
        %1319 = vst [vmem:[#allocation4 + $0x18] sm:$0xff] %v1303
        %1320 = vst [vmem:[#allocation4 + $0x20] sm:$0xff] %v1304
        %1321 = vst [vmem:[#allocation4 + $0x28] sm:$0xff] %v1305
        %1322 = vst [vmem:[#allocation4 + $0x30] sm:$0xff] %v1306
        %1323 = vst [vmem:[#allocation4 + $0x38] sm:$0xff] %v1307
        %1324 = vst [vmem:[#allocation4 + $0x40] sm:$0xff] %v1308
        %1325 = vst [vmem:[#allocation4 + $0x48] sm:$0xff] %v1309
        %1326 = vst [vmem:[#allocation4 + $0x50] sm:$0xff] %v1310
        %1327 = vst [vmem:[#allocation4 + $0x58] sm:$0xff] %v1311
        %1328 = vst [vmem:[#allocation4 + $0x60] sm:$0xff] %v1312
        %1329 = vst [vmem:[#allocation4 + $0x68] sm:$0xff] %v1313
        %1330 = vst [vmem:[#allocation4 + $0x70] sm:$0xff] %v1314
        %1331 = vst [vmem:[#allocation4 + $0x78] sm:$0xff] %v1315
        %1332 = vst.msk [vmem:[#allocation2] sm:$0xff] %vm1002, %v730
        %1333 = vst.msk [vmem:[#allocation2 + $0x8] sm:$0xff] %vm1002, %v731
        %1334 = vst.msk [vmem:[#allocation2 + $0x10] sm:$0xff] %vm1002, %v732
        %1335 = vst.msk [vmem:[#allocation2 + $0x18] sm:$0xff] %vm1002, %v733
        %1336 = vst.msk [vmem:[#allocation2 + $0x20] sm:$0xff] %vm1002, %v734
        %1337 = vst.msk [vmem:[#allocation2 + $0x28] sm:$0xff] %vm1002, %v735
        %1338 = vst.msk [vmem:[#allocation2 + $0x30] sm:$0xff] %vm1002, %v736
        %1339 = vst.msk [vmem:[#allocation2 + $0x38] sm:$0xff] %vm1002, %v737
        %1340 = vst.msk [vmem:[#allocation2 + $0x40] sm:$0xff] %vm1002, %v738
        %1341 = vst.msk [vmem:[#allocation2 + $0x48] sm:$0xff] %vm1002, %v739
        %1342 = vst.msk [vmem:[#allocation2 + $0x50] sm:$0xff] %vm1002, %v740
        %1343 = vst.msk [vmem:[#allocation2 + $0x58] sm:$0xff] %vm1002, %v741
        %1344 = vst.msk [vmem:[#allocation2 + $0x60] sm:$0xff] %vm1002, %v742
        %1345 = vst.msk [vmem:[#allocation2 + $0x68] sm:$0xff] %vm1002, %v743
        %1346 = vst.msk [vmem:[#allocation2 + $0x70] sm:$0xff] %vm1002, %v744
        %1347 = vst.msk [vmem:[#allocation2 + $0x78] sm:$0xff] %vm1002, %v745
        %p1348 = scmp.eq.s32.totalorder %s36, 1
        // Predicated region
        $region61: #{pam_forward.3} parent=39 // pred_check
          %p1349 = pneg %p1348
        $region62: #{pam_forward.3} parent=39 // pred_check_branch
          %1351 = sbr.rel (%p1349) target = $region64
        $region63: #{pam_forward.3} parent=39 // pred_region
          %v1352 = vld [vmem:[#allocation4] sm:$0xff]
          %v1353 = vld [vmem:[#allocation4 + $0x8] sm:$0xff]
          %v1354 = vld [vmem:[#allocation4 + $0x10] sm:$0xff]
          %v1355 = vld [vmem:[#allocation4 + $0x18] sm:$0xff]
          %v1356 = vld [vmem:[#allocation4 + $0x20] sm:$0xff]
          %v1357 = vld [vmem:[#allocation4 + $0x28] sm:$0xff]
          %v1358 = vld [vmem:[#allocation4 + $0x30] sm:$0xff]
          %v1359 = vld [vmem:[#allocation4 + $0x38] sm:$0xff]
          %v1360 = vld [vmem:[#allocation4 + $0x40] sm:$0xff]
          %v1361 = vld [vmem:[#allocation4 + $0x48] sm:$0xff]
          %v1362 = vld [vmem:[#allocation4 + $0x50] sm:$0xff]
          %v1363 = vld [vmem:[#allocation4 + $0x58] sm:$0xff]
          %v1364 = vld [vmem:[#allocation4 + $0x60] sm:$0xff]
          %v1365 = vld [vmem:[#allocation4 + $0x68] sm:$0xff]
          %v1366 = vld [vmem:[#allocation4 + $0x70] sm:$0xff]
          %v1367 = vld [vmem:[#allocation4 + $0x78] sm:$0xff]
          %v1368 = vld [vmem:[#allocation3] sm:$0xff]
          %v1369 = vld [vmem:[#allocation3 + $0x8] sm:$0xff]
          %v1370 = vld [vmem:[#allocation3 + $0x10] sm:$0xff]
          %v1371 = vld [vmem:[#allocation3 + $0x18] sm:$0xff]
          %v1372 = vld [vmem:[#allocation3 + $0x20] sm:$0xff]
          %v1373 = vld [vmem:[#allocation3 + $0x28] sm:$0xff]
          %v1374 = vld [vmem:[#allocation3 + $0x30] sm:$0xff]
          %v1375 = vld [vmem:[#allocation3 + $0x38] sm:$0xff]
          %v1376 = vld [vmem:[#allocation3 + $0x40] sm:$0xff]
          %v1377 = vld [vmem:[#allocation3 + $0x48] sm:$0xff]
          %v1378 = vld [vmem:[#allocation3 + $0x50] sm:$0xff]
          %v1379 = vld [vmem:[#allocation3 + $0x58] sm:$0xff]
          %v1380 = vld [vmem:[#allocation3 + $0x60] sm:$0xff]
          %v1381 = vld [vmem:[#allocation3 + $0x68] sm:$0xff]
          %v1382 = vld [vmem:[#allocation3 + $0x70] sm:$0xff]
          %v1383 = vld [vmem:[#allocation3 + $0x78] sm:$0xff]
          %v1384 = vrcp.pop %v1368
          %v1385 = vrcp.pop %v1369
          %v1386 = vrcp.pop %v1370
          %v1387 = vrcp.pop %v1371
          %v1388 = vrcp.pop %v1372
          %v1389 = vrcp.pop %v1373
          %v1390 = vrcp.pop %v1374
          %v1391 = vrcp.pop %v1375
          %v1392 = vrcp.pop %v1376
          %v1393 = vrcp.pop %v1377
          %v1394 = vrcp.pop %v1378
          %v1395 = vrcp.pop %v1379
          %v1396 = vrcp.pop %v1380
          %v1397 = vrcp.pop %v1381
          %v1398 = vrcp.pop %v1382
          %v1399 = vrcp.pop %v1383
          %1401 = vset.pattern.permute.xlu0 0
          %1402 = vperm.xlu0 %1401, %v1384
          %v1403 = vpop.permute.xlu0 %1402
          %1406 = vset.pattern.permute.xlu0 0
          %1407 = vperm.xlu0 %1406, %v1385
          %v1408 = vpop.permute.xlu0 %1407
          %1411 = vset.pattern.permute.xlu0 0
          %1412 = vperm.xlu0 %1411, %v1386
          %v1413 = vpop.permute.xlu0 %1412
          %1416 = vset.pattern.permute.xlu0 0
          %1417 = vperm.xlu0 %1416, %v1387
          %v1418 = vpop.permute.xlu0 %1417
          %1421 = vset.pattern.permute.xlu0 0
          %1422 = vperm.xlu0 %1421, %v1388
          %v1423 = vpop.permute.xlu0 %1422
          %1426 = vset.pattern.permute.xlu0 0
          %1427 = vperm.xlu0 %1426, %v1389
          %v1428 = vpop.permute.xlu0 %1427
          %1431 = vset.pattern.permute.xlu0 0
          %1432 = vperm.xlu0 %1431, %v1390
          %v1433 = vpop.permute.xlu0 %1432
          %1436 = vset.pattern.permute.xlu0 0
          %1437 = vperm.xlu0 %1436, %v1391
          %v1438 = vpop.permute.xlu0 %1437
          %1441 = vset.pattern.permute.xlu0 0
          %1442 = vperm.xlu0 %1441, %v1392
          %v1443 = vpop.permute.xlu0 %1442
          %1446 = vset.pattern.permute.xlu0 0
          %1447 = vperm.xlu0 %1446, %v1393
          %v1448 = vpop.permute.xlu0 %1447
          %1451 = vset.pattern.permute.xlu0 0
          %1452 = vperm.xlu0 %1451, %v1394
          %v1453 = vpop.permute.xlu0 %1452
          %1456 = vset.pattern.permute.xlu0 0
          %1457 = vperm.xlu0 %1456, %v1395
          %v1458 = vpop.permute.xlu0 %1457
          %1461 = vset.pattern.permute.xlu0 0
          %1462 = vperm.xlu0 %1461, %v1396
          %v1463 = vpop.permute.xlu0 %1462
          %1466 = vset.pattern.permute.xlu0 0
          %1467 = vperm.xlu0 %1466, %v1397
          %v1468 = vpop.permute.xlu0 %1467
          %1471 = vset.pattern.permute.xlu0 0
          %1472 = vperm.xlu0 %1471, %v1398
          %v1473 = vpop.permute.xlu0 %1472
          %1476 = vset.pattern.permute.xlu0 0
          %1477 = vperm.xlu0 %1476, %v1399
          %v1478 = vpop.permute.xlu0 %1477
          %v1480 = vmul.f32 %v1352, %v1403
          %v1481 = vmul.f32 %v1353, %v1408
          %v1482 = vmul.f32 %v1354, %v1413
          %v1483 = vmul.f32 %v1355, %v1418
          %v1484 = vmul.f32 %v1356, %v1423
          %v1485 = vmul.f32 %v1357, %v1428
          %v1486 = vmul.f32 %v1358, %v1433
          %v1487 = vmul.f32 %v1359, %v1438
          %v1488 = vmul.f32 %v1360, %v1443
          %v1489 = vmul.f32 %v1361, %v1448
          %v1490 = vmul.f32 %v1362, %v1453
          %v1491 = vmul.f32 %v1363, %v1458
          %v1492 = vmul.f32 %v1364, %v1463
          %v1493 = vmul.f32 %v1365, %v1468
          %v1494 = vmul.f32 %v1366, %v1473
          %v1495 = vmul.f32 %v1367, %v1478
          %s1496 = sld [smem:[#allocation5]]
          %v1497 = vstv %s1496
          %v1498 = vmul.f32 %v1497, %v1480
          %v1499 = vmul.f32 %v1497, %v1481
          %v1500 = vmul.f32 %v1497, %v1482
          %v1501 = vmul.f32 %v1497, %v1483
          %v1502 = vmul.f32 %v1497, %v1484
          %v1503 = vmul.f32 %v1497, %v1485
          %v1504 = vmul.f32 %v1497, %v1486
          %v1505 = vmul.f32 %v1497, %v1487
          %v1506 = vmul.f32 %v1497, %v1488
          %v1507 = vmul.f32 %v1497, %v1489
          %v1508 = vmul.f32 %v1497, %v1490
          %v1509 = vmul.f32 %v1497, %v1491
          %v1510 = vmul.f32 %v1497, %v1492
          %v1511 = vmul.f32 %v1497, %v1493
          %v1512 = vmul.f32 %v1497, %v1494
          %v1513 = vmul.f32 %v1497, %v1495
          %v1514 = vld [vmem:[%s356] sm:$0xff]
          %v1515 = vld [vmem:[%s356 + $0x8] sm:$0xff]
          %v1516 = vld [vmem:[%s356 + $0x10] sm:$0xff]
          %v1517 = vld [vmem:[%s356 + $0x18] sm:$0xff]
          %v1518 = vld [vmem:[%s356 + $0x20] sm:$0xff]
          %v1519 = vld [vmem:[%s356 + $0x28] sm:$0xff]
          %v1520 = vld [vmem:[%s356 + $0x30] sm:$0xff]
          %v1521 = vld [vmem:[%s356 + $0x38] sm:$0xff]
          %v1522 = vld [vmem:[%s356 + $0x40] sm:$0xff]
          %v1523 = vld [vmem:[%s356 + $0x48] sm:$0xff]
          %v1524 = vld [vmem:[%s356 + $0x50] sm:$0xff]
          %v1525 = vld [vmem:[%s356 + $0x58] sm:$0xff]
          %v1526 = vld [vmem:[%s356 + $0x60] sm:$0xff]
          %v1527 = vld [vmem:[%s356 + $0x68] sm:$0xff]
          %v1528 = vld [vmem:[%s356 + $0x70] sm:$0xff]
          %v1529 = vld [vmem:[%s356 + $0x78] sm:$0xff]
          %v1530 = vadd.f32 %v1498, %v1514
          %v1531 = vadd.f32 %v1499, %v1515
          %v1532 = vadd.f32 %v1500, %v1516
          %v1533 = vadd.f32 %v1501, %v1517
          %v1534 = vadd.f32 %v1502, %v1518
          %v1535 = vadd.f32 %v1503, %v1519
          %v1536 = vadd.f32 %v1504, %v1520
          %v1537 = vadd.f32 %v1505, %v1521
          %v1538 = vadd.f32 %v1506, %v1522
          %v1539 = vadd.f32 %v1507, %v1523
          %v1540 = vadd.f32 %v1508, %v1524
          %v1541 = vadd.f32 %v1509, %v1525
          %v1542 = vadd.f32 %v1510, %v1526
          %v1543 = vadd.f32 %v1511, %v1527
          %v1544 = vadd.f32 %v1512, %v1528
          %v1545 = vadd.f32 %v1513, %v1529
          %1546 = vst [vmem:[%s397] sm:$0xff] %v1530
          %1547 = vst [vmem:[%s397 + $0x8] sm:$0xff] %v1531
          %1548 = vst [vmem:[%s397 + $0x10] sm:$0xff] %v1532
          %1549 = vst [vmem:[%s397 + $0x18] sm:$0xff] %v1533
          %1550 = vst [vmem:[%s397 + $0x20] sm:$0xff] %v1534
          %1551 = vst [vmem:[%s397 + $0x28] sm:$0xff] %v1535
          %1552 = vst [vmem:[%s397 + $0x30] sm:$0xff] %v1536
          %1553 = vst [vmem:[%s397 + $0x38] sm:$0xff] %v1537
          %1554 = vst [vmem:[%s397 + $0x40] sm:$0xff] %v1538
          %1555 = vst [vmem:[%s397 + $0x48] sm:$0xff] %v1539
          %1556 = vst [vmem:[%s397 + $0x50] sm:$0xff] %v1540
          %1557 = vst [vmem:[%s397 + $0x58] sm:$0xff] %v1541
          %1558 = vst [vmem:[%s397 + $0x60] sm:$0xff] %v1542
          %1559 = vst [vmem:[%s397 + $0x68] sm:$0xff] %v1543
          %1560 = vst [vmem:[%s397 + $0x70] sm:$0xff] %v1544
          %1561 = vst [vmem:[%s397 + $0x78] sm:$0xff] %v1545
        $region64: #{pam_forward.3} parent=39 // pred_fallthru
          _
        %s1562 = sand.u32 %s191, 1
        %s1563 = scalar_lea.sflag [#allocation8], %s1562
        %s1564 = sand.u32 %s191, 1
        %s1565 = smul.addr %s1564, 128
        %s1566 = scalar_lea.vmem [#allocation14], %s1565
        // Predicated region
        $region65: #{pam_forward.3} parent=39 // pred_check
          %p1567 = pneg %p201
        $region66: #{pam_forward.3} parent=39 // pred_check_branch
          %1569 = sbr.rel (%p1567) target = $region68
        $region67: #{pam_forward.3} parent=39 // pred_region
          %s1570 = smul.u32 16, %s35
          %s1572 = ssub.s32 2048, 2048
          %1573 = vsyncadd %s1563, %s1572
          %s1574 = smul.addr %s34, 32
          %s1575 = sadd.s32 %s1570, %s1574
          %s1576 = smul.addr %s1575, 128
          %s1577 = scalar_lea.hbm %s5, %s1576
          %s1578 = sshll.u32 %s1566, 4
          %s1579 = int_to_ptr.vmem [resolvable:$true] %s1578
          %1584 = dma.vmem_to_hbm [thread:$0]  %s1579, 2048, %s1577, %s1563, 128, 128, 8
        $region68: #{pam_forward.3} parent=39 // pred_fallthru
          _
      $region40: #{pam_forward.3} parent=5 // pred_fallthru
        _
      %p1585 = scmp.le.s32.totalorder 2, %s24
      // Predicated region
      $region69: #{pam_forward.3} parent=5 // pred_check
        %p1586 = pneg %p1585
      $region70: #{pam_forward.3} parent=5 // pred_check_branch
        %1588 = sbr.rel (%p1586) target = $region72
      $region71: #{pam_forward.3} parent=5 // pred_region
        %s1589 = ssub.s32 %s24, 2
        // Predicated region
        $region73: #{pam_forward.3} parent=71 // pred_check
          %p1590 = pneg %p207
        $region74: #{pam_forward.3} parent=71 // pred_check_branch
          %1592 = sbr.rel (%p1590) target = $region76
        $region75: #{pam_forward.3} parent=71 // pred_region
          %s1593 = sand.u32 %s192, 1
          %s1594 = scalar_lea.sflag [#allocation8], %s1593
          %s1595 = sand.u32 %s192, 1
          %s1596 = smul.addr %s1595, 128
          %s1597 = scalar_lea.vmem [#allocation14], %s1596
          %1598 = dma.done %s1594, 2048
        $region76: #{pam_forward.3} parent=71 // pred_fallthru
          _
      $region72: #{pam_forward.3} parent=5 // pred_fallthru
        _
    $region6: #{pam_forward.3} parent=1 // loop_footer
      %s28 = sadd.s32 1, %s24
    $region7: #{pam_forward.3} parent=1 // loop_footer_branch
      %23 = sbr.rel target = $region3
    $region8: #{pam_forward.3} parent=1 // loop_exit
      _
    %1599 = vsyncpa [#allocation7], 1
    %s1600 = scalar_lea.sflag [#allocation7], 1
    %1601 = vsyncpa %s1600, 1
    %1602 = vsyncpa [#allocation10], 1
    %s1603 = scalar_lea.sflag [#allocation10], 1
    %1604 = vsyncpa %s1603, 1
    %1605 = vsyncpa [#allocation13], 1
    %s1606 = scalar_lea.sflag [#allocation13], 1
    %1607 = vsyncpa %s1606, 1
    %1608 = vsyncpa [#allocation8], 1
    %s1609 = scalar_lea.sflag [#allocation8], 1
    %1610 = vsyncpa %s1609, 1

</llo_original>
